<compile_context>
chip_gen: v5e
topology: v5e:2x2
jax: 0.10.0
libtpu: 0.0.40
codegen_flags: <defaults>
</compile_context>

<pallas_src>
import functools

import jax
import jax.numpy as jnp
from jax import lax
from jax.experimental import pallas as pl
from jax.experimental.pallas import tpu as pltpu

LANE = 128
EPS = 1e-5


def _round_up(x, m):
    return ((x + m - 1) // m) * m


def _pick_tile_h(H, W, cin_p, cout_p, budget_bytes=12 * 1024 * 1024):
    """Largest divisor of H whose conv working set fits a modest VMEM budget
    (safe for v7x's 64 MiB VMEM and the default scoped limit)."""
    best = 1
    for th in range(1, H + 1):
        if H % th:
            continue
        words = ((th + 2) * (W + 2) * cin_p          # halo input tile
                 + th * W * 9 * cin_p                # im2col patch matrix
                 + 2 * th * W * cout_p               # double-buffered output
                 + 9 * cin_p * cout_p)               # resident weights
        if words * 4 <= budget_bytes:
            best = th
    return best


def _pick_tile_h_elementwise(H, W, c, budget_bytes=16 * 1024 * 1024):
    best = 1
    for th in range(1, H + 1):
        if H % th:
            continue
        if 4 * th * W * c * 4 <= budget_bytes:       # 2 buffers for in + out
            best = th
    return best


# ----------------------------------------------------------------------------
# Fused conv stage kernel:
#   [optional BN+ReLU prologue] -> 3x3 conv (im2col, one MXU matmul) -> +bias
#   -> write raw output tile + accumulate per-channel sum / sum-of-squares.
# ----------------------------------------------------------------------------
def _conv_bn_stage_kernel(scale_ref, shift_ref, w_ref, b_ref, xp_hbm,
                          o_ref, sum_ref, ssq_ref,
                          xbuf, sem, *, TH, H, W, fold_input_bn):
    n = pl.program_id(0)
    i = pl.program_id(1)
    row0 = pl.multiple_of(i * TH, TH)

    # Manual halo DMA: rows [i*TH, i*TH + TH + 2) of the spatially padded input.
    cp = pltpu.make_async_copy(xp_hbm.at[n, pl.ds(row0, TH + 2)], xbuf, sem)
    cp.start()
    cp.wait()

    x = xbuf[...]                                    # (TH+2, W+2, Cin_p) f32
    if fold_input_bn:
        # Previous stage's BatchNorm+ReLU folded into this conv's prologue.
        x = jnp.maximum(x * scale_ref[0] + shift_ref[0], 0.0)
        # The 'same'-conv zero padding must stay exactly zero after BN+ReLU.
        r = lax.broadcasted_iota(jnp.int32, (TH + 2, W + 2, 1), 0) + row0
        c = lax.broadcasted_iota(jnp.int32, (TH + 2, W + 2, 1), 1)
        interior = (r >= 1) & (r <= H) & (c >= 1) & (c <= W)
        x = jnp.where(interior, x, 0.0)

    # im2col: one (TH*W, 9*Cin_p) x (9*Cin_p, Cout_p) MXU matmul.
    cols = []
    for kh in range(3):
        for kw in range(3):
            cols.append(x[kh:kh + TH, kw:kw + W, :])
    patches = jnp.concatenate(cols, axis=-1).reshape(TH * W, -1)
    acc = jnp.dot(patches, w_ref[...], preferred_element_type=jnp.float32)
    acc = acc + b_ref[0][None, :]

    o_ref[0] = acc.reshape(TH, W, -1).astype(o_ref.dtype)

    # Per-image channel statistics for the following BatchNorm.
    tile_sum = jnp.sum(acc, axis=0).reshape(1, 1, -1)
    tile_ssq = jnp.sum(acc * acc, axis=0).reshape(1, 1, -1)

    @pl.when(i == 0)
    def _():
        sum_ref[...] = jnp.zeros_like(sum_ref)
        ssq_ref[...] = jnp.zeros_like(ssq_ref)

    sum_ref[...] += tile_sum
    ssq_ref[...] += tile_ssq


def conv3x3_bias_stats(xp, w_hwio, bias_row, in_scale, in_shift, *,
                       fold_input_bn):
    """One conv stage.  xp: (N, H+2, W+2, Cin_p) spatially padded input.
    Returns (raw conv output (N,H,W,Cout_p), channel sums, channel sumsq)."""
    N, Hp2, Wp2, Cin_p = xp.shape
    H, W = Hp2 - 2, Wp2 - 2
    Cout_p = w_hwio.shape[-1]
    w2d = w_hwio.reshape(9 * Cin_p, Cout_p)
    TH = _pick_tile_h(H, W, Cin_p, Cout_p)
    n_row_tiles = H // TH

    kernel = functools.partial(_conv_bn_stage_kernel, TH=TH, H=H, W=W,
                               fold_input_bn=fold_input_bn)
    flops = 2 * N * H * W * 9 * Cin_p * Cout_p
    bytes_accessed = 4 * (xp.size + w2d.size + bias_row.size + in_scale.size
                          + in_shift.size + N * H * W * Cout_p + 2 * N * Cout_p)

    out, sums, ssqs = pl.pallas_call(
        kernel,
        out_shape=(
            jax.ShapeDtypeStruct((N, H, W, Cout_p), jnp.float32),
            jax.ShapeDtypeStruct((N, 1, Cout_p), jnp.float32),
            jax.ShapeDtypeStruct((N, 1, Cout_p), jnp.float32),
        ),
        grid=(N, n_row_tiles),
        in_specs=[
            pl.BlockSpec((1, Cin_p), lambda n, i: (0, 0)),          # BN scale
            pl.BlockSpec((1, Cin_p), lambda n, i: (0, 0)),          # BN shift
            pl.BlockSpec((9 * Cin_p, Cout_p), lambda n, i: (0, 0)),  # weights (resident)
            pl.BlockSpec((1, Cout_p), lambda n, i: (0, 0)),          # bias
            pl.BlockSpec(memory_space=pl.ANY),                       # padded input (HBM)
        ],
        out_specs=(
            pl.BlockSpec((1, TH, W, Cout_p), lambda n, i: (n, i, 0, 0)),
            pl.BlockSpec((1, 1, Cout_p), lambda n, i: (n, 0, 0)),
            pl.BlockSpec((1, 1, Cout_p), lambda n, i: (n, 0, 0)),
        ),
        scratch_shapes=[
            pltpu.VMEM((TH + 2, W + 2, Cin_p), jnp.float32),
            pltpu.SemaphoreType.DMA,
        ],
        compiler_params=pltpu.CompilerParams(
            dimension_semantics=("parallel", "arbitrary")),
        cost_estimate=pl.CostEstimate(flops=flops, transcendentals=0,
                                      bytes_accessed=bytes_accessed),
    )(in_scale, in_shift, w2d, bias_row, xp)
    return out, jnp.sum(sums, axis=0)[0], jnp.sum(ssqs, axis=0)[0]


# ----------------------------------------------------------------------------
# Final BN + ReLU apply kernel (only needed for the second stage's output).
# ----------------------------------------------------------------------------
def _bn_relu_apply_kernel(scale_ref, shift_ref, x_ref, o_ref):
    y = x_ref[...] * scale_ref[0] + shift_ref[0]
    o_ref[...] = jnp.maximum(y, 0.0).astype(o_ref.dtype)


def bn_relu_apply(x, scale_row, shift_row):
    N, H, W, C = x.shape
    TH = _pick_tile_h_elementwise(H, W, C)
    return pl.pallas_call(
        _bn_relu_apply_kernel,
        out_shape=jax.ShapeDtypeStruct((N, H, W, C), jnp.float32),
        grid=(N, H // TH),
        in_specs=[
            pl.BlockSpec((1, C), lambda n, i: (0, 0)),
            pl.BlockSpec((1, C), lambda n, i: (0, 0)),
            pl.BlockSpec((1, TH, W, C), lambda n, i: (n, i, 0, 0)),
        ],
        out_specs=pl.BlockSpec((1, TH, W, C), lambda n, i: (n, i, 0, 0)),
        compiler_params=pltpu.CompilerParams(
            dimension_semantics=("parallel", "parallel")),
    )(scale_row, shift_row, x)


# ----------------------------------------------------------------------------
# DoubleConv forward (wrapper: NCHW in, NCHW out)
# ----------------------------------------------------------------------------
def _bn_scale_shift(ssum, ssq, count, gamma_row, beta_row):
    mean = ssum / count
    var = jnp.maximum(ssq / count - mean * mean, 0.0)    # biased variance
    inv = lax.rsqrt(var + EPS)
    scale = gamma_row[0] * inv
    shift = beta_row[0] - mean * scale
    return scale[None, :], shift[None, :]


@jax.jit
def double_conv_forward(x_nchw, params):
    x = jnp.transpose(x_nchw, (0, 2, 3, 1)).astype(jnp.float32)   # NCHW -> NHWC
    N, H, W, Cin = x.shape
    Cmid = params["w1"].shape[-1]
    Cout = params["w2"].shape[-1]
    Cin_p, Cmid_p, Cout_p = (_round_up(c, LANE) for c in (Cin, Cmid, Cout))

    # One-time channel padding to the 128-lane width (+ spatial 'same' halo).
    xp = jnp.pad(x, ((0, 0), (1, 1), (1, 1), (0, Cin_p - Cin)))
    w1 = jnp.pad(params["w1"], ((0, 0), (0, 0), (0, Cin_p - Cin), (0, Cmid_p - Cmid)))
    b1 = jnp.pad(params["b1"], (0, Cmid_p - Cmid))[None, :]
    g1 = jnp.pad(params["gamma1"], (0, Cmid_p - Cmid))[None, :]
    be1 = jnp.pad(params["beta1"], (0, Cmid_p - Cmid))[None, :]
    w2 = jnp.pad(params["w2"], ((0, 0), (0, 0), (0, Cmid_p - Cmid), (0, Cout_p - Cout)))
    b2 = jnp.pad(params["b2"], (0, Cout_p - Cout))[None, :]
    g2 = jnp.pad(params["gamma2"], (0, Cout_p - Cout))[None, :]
    be2 = jnp.pad(params["beta2"], (0, Cout_p - Cout))[None, :]

    count = N * H * W

    # ---- stage 1: conv1 + bias, emit BN1 statistics (BN1/ReLU deferred) ----
    one_row = jnp.ones((1, Cin_p), jnp.float32)
    zero_row = jnp.zeros((1, Cin_p), jnp.float32)
    h1_raw, s1, q1 = conv3x3_bias_stats(xp, w1, b1, one_row, zero_row,
                                        fold_input_bn=False)
    scale1, shift1 = _bn_scale_shift(s1, q1, count, g1, be1)

    # ---- stage 2: BN1+ReLU folded into conv2 prologue, conv2 + BN2 stats ----
    # TODO(synk): the spatial jnp.pad of the intermediate could be removed with
    # in-kernel edge handling to save one more HBM round trip.
    h1p = jnp.pad(h1_raw, ((0, 0), (1, 1), (1, 1), (0, 0)))
    h2_raw, s2, q2 = conv3x3_bias_stats(h1p, w2, b2, scale1, shift1,
                                        fold_input_bn=True)
    scale2, shift2 = _bn_scale_shift(s2, q2, count, g2, be2)

    # ---- final BN2 + ReLU apply pass ----
    y = bn_relu_apply(h2_raw, scale2, shift2)
    return jnp.transpose(y[..., :Cout], (0, 3, 1, 2))             # NHWC -> NCHW


def init_params(key, in_channels, mid_channels, out_channels):
    k1, k2 = jax.random.split(key)
    return {
        "w1": 0.1 * jax.random.normal(k1, (3, 3, in_channels, mid_channels),
                                      jnp.float32),
        "b1": jnp.zeros((mid_channels,), jnp.float32),
        "gamma1": jnp.ones((mid_channels,), jnp.float32),
        "beta1": jnp.zeros((mid_channels,), jnp.float32),
        "w2": 0.1 * jax.random.normal(k2, (3, 3, mid_channels, out_channels),
                                      jnp.float32),
        "b2": jnp.zeros((out_channels,), jnp.float32),
        "gamma2": jnp.ones((out_channels,), jnp.float32),
        "beta2": jnp.zeros((out_channels,), jnp.float32),
    }


# ----------------------------------------------------------------------------
# Pure-JAX reference (numerical sanity check)
# ----------------------------------------------------------------------------
def _ref_forward(x_nchw, params):
    def conv(x, w, b):  # NHWC, HWIO
        y = lax.conv_general_dilated(x, w, (1, 1), "SAME",
                                     dimension_numbers=("NHWC", "HWIO", "NHWC"))
        return y + b[None, None, None, :]

    def bn_relu_ref(x, g, b):
        mean = jnp.mean(x, axis=(0, 1, 2), keepdims=True)
        var = jnp.mean((x - mean) ** 2, axis=(0, 1, 2), keepdims=True)
        y = (x - mean) * lax.rsqrt(var + EPS) * g + b
        return jnp.maximum(y, 0.0)

    x = jnp.transpose(x_nchw, (0, 2, 3, 1))
    h = bn_relu_ref(conv(x, params["w1"], params["b1"]),
                    params["gamma1"], params["beta1"])
    h = bn_relu_ref(conv(h, params["w2"], params["b2"]),
                    params["gamma2"], params["beta2"])
    return jnp.transpose(h, (0, 3, 1, 2))


if __name__ == "__main__":
    N, C_IN, C_MID, C_OUT, H, W = 2, 4, 8, 8, 16, 16

    key = jax.random.PRNGKey(0)
    kx, kp = jax.random.split(key)
    x = jax.random.normal(kx, (N, C_IN, H, W), jnp.float32)   # NCHW input
    params = init_params(kp, C_IN, C_MID, C_OUT)

    out = double_conv_forward(x, params)
    out = jax.block_until_ready(out)

    ref = _ref_forward(x, params)
    assert out.shape == (N, C_OUT, H, W), out.shape
    assert jnp.allclose(out, ref, atol=1e-3, rtol=1e-3), "mismatch vs reference"

    print("KERNEL_OK")
</pallas_src>

<mosaic_0001>
module attributes {stable_mosaic.version = 11 : i64} {
  func.func @_conv_bn_stage_kernel(%arg0: i32, %arg1: i32, %arg2: memref<1x128xf32, #tpu.memory_space<vmem>>, %arg3: memref<1x128xf32, #tpu.memory_space<vmem>>, %arg4: memref<1152x128xf32, #tpu.memory_space<vmem>>, %arg5: memref<1x128xf32, #tpu.memory_space<vmem>>, %arg6: memref<2x18x18x128xf32, #tpu.memory_space<any>>, %arg7: memref<1x16x16x128xf32, #tpu.memory_space<vmem>>, %arg8: memref<1x1x128xf32, #tpu.memory_space<vmem>>, %arg9: memref<1x1x128xf32, #tpu.memory_space<vmem>>, %arg10: memref<18x18x128xf32, #tpu.memory_space<vmem>>, %arg11: memref<!tpu.dma_semaphore, #tpu.memory_space<semaphore_mem>>) attributes {dimension_semantics = [#tpu.dimension_semantics<parallel>, #tpu.dimension_semantics<arbitrary>], iteration_bounds = array<i64: 2, 1>, scalar_prefetch = 0 : i64, scratch_operands = 2 : i64, tpu.core_type = #tpu.core_type<tc>, window_params = [{pipeline_mode = #tpu.pipeline_mode<synchronous>, transform_indices = @transform_0, window_bounds = array<i64: 1, 128>}, {pipeline_mode = #tpu.pipeline_mode<synchronous>, transform_indices = @transform_1, window_bounds = array<i64: 1, 128>}, {pipeline_mode = #tpu.pipeline_mode<synchronous>, transform_indices = @transform_2, window_bounds = array<i64: 1152, 128>}, {pipeline_mode = #tpu.pipeline_mode<synchronous>, transform_indices = @transform_3, window_bounds = array<i64: 1, 128>}, {}, {transform_indices = @transform_5, window_bounds = array<i64: 1, 16, 16, 128>}, {transform_indices = @transform_6, window_bounds = array<i64: 1, 1, 128>}, {transform_indices = @transform_7, window_bounds = array<i64: 1, 1, 128>}]} {
    %c16_i32 = arith.constant 16 : i32
    %0 = arith.muli %arg1, %c16_i32 : i32
    %1 = tpu.assume_multiple %0, 16 : i32
    %c0_i32 = arith.constant 0 : i32
    %c0_i32_0 = arith.constant 0 : i32
    %2 = tpu.memref_slice %arg6[%arg0, %1, %c0_i32, %c0_i32_0] : memref<2x18x18x128xf32, #tpu.memory_space<any>> -> memref<1x18x18x128xf32, #tpu.memory_space<any>>
    %3 = tpu.memref_squeeze %2 : memref<1x18x18x128xf32, #tpu.memory_space<any>> -> memref<18x18x128xf32, #tpu.memory_space<any>>
    tpu.enqueue_dma source(%3 : memref<18x18x128xf32, #tpu.memory_space<any>>) target(%arg10 : memref<18x18x128xf32, #tpu.memory_space<vmem>>) target_semaphore(%arg11 : memref<!tpu.dma_semaphore, #tpu.memory_space<semaphore_mem>>)
    %c0_i32_1 = arith.constant 0 : i32
    %c0_i32_2 = arith.constant 0 : i32
    %4 = tpu.memref_slice %arg6[%arg0, %1, %c0_i32_1, %c0_i32_2] : memref<2x18x18x128xf32, #tpu.memory_space<any>> -> memref<1x18x18x128xf32, #tpu.memory_space<any>>
    %5 = tpu.memref_squeeze %4 : memref<1x18x18x128xf32, #tpu.memory_space<any>> -> memref<18x18x128xf32, #tpu.memory_space<any>>
    tpu.wait_dma2 semaphore(%arg11 : memref<!tpu.dma_semaphore, #tpu.memory_space<semaphore_mem>>) src(%5 : memref<18x18x128xf32, #tpu.memory_space<any>>) dst(%arg10 : memref<18x18x128xf32, #tpu.memory_space<vmem>>)
    %c0 = arith.constant 0 : index
    %c0_3 = arith.constant 0 : index
    %c0_4 = arith.constant 0 : index
    %6 = vector.load %arg10[%c0, %c0_3, %c0_4] : memref<18x18x128xf32, #tpu.memory_space<vmem>>, vector<18x18x128xf32>
    %7 = vector.extract_strided_slice %6 {offsets = [0, 0, 0], sizes = [16, 16, 128], strides = [1, 1, 1]} : vector<18x18x128xf32> to vector<16x16x128xf32>
    %8 = vector.extract_strided_slice %6 {offsets = [0, 1, 0], sizes = [16, 16, 128], strides = [1, 1, 1]} : vector<18x18x128xf32> to vector<16x16x128xf32>
    %9 = vector.extract_strided_slice %6 {offsets = [0, 2, 0], sizes = [16, 16, 128], strides = [1, 1, 1]} : vector<18x18x128xf32> to vector<16x16x128xf32>
    %10 = vector.extract_strided_slice %6 {offsets = [1, 0, 0], sizes = [16, 16, 128], strides = [1, 1, 1]} : vector<18x18x128xf32> to vector<16x16x128xf32>
    %11 = vector.extract_strided_slice %6 {offsets = [1, 1, 0], sizes = [16, 16, 128], strides = [1, 1, 1]} : vector<18x18x128xf32> to vector<16x16x128xf32>
    %12 = vector.extract_strided_slice %6 {offsets = [1, 2, 0], sizes = [16, 16, 128], strides = [1, 1, 1]} : vector<18x18x128xf32> to vector<16x16x128xf32>
    %13 = vector.extract_strided_slice %6 {offsets = [2, 0, 0], sizes = [16, 16, 128], strides = [1, 1, 1]} : vector<18x18x128xf32> to vector<16x16x128xf32>
    %14 = vector.extract_strided_slice %6 {offsets = [2, 1, 0], sizes = [16, 16, 128], strides = [1, 1, 1]} : vector<18x18x128xf32> to vector<16x16x128xf32>
    %15 = vector.extract_strided_slice %6 {offsets = [2, 2, 0], sizes = [16, 16, 128], strides = [1, 1, 1]} : vector<18x18x128xf32> to vector<16x16x128xf32>
    %16 = tpu.concatenate %7, %8, %9, %10, %11, %12, %13, %14, %15 in 2 : vector<16x16x128xf32>, vector<16x16x128xf32>, vector<16x16x128xf32>, vector<16x16x128xf32>, vector<16x16x128xf32>, vector<16x16x128xf32>, vector<16x16x128xf32>, vector<16x16x128xf32>, vector<16x16x128xf32> -> vector<16x16x1152xf32>
    %17 = vector.shape_cast %16 : vector<16x16x1152xf32> to vector<256x1152xf32>
    %c0_5 = arith.constant 0 : index
    %c0_6 = arith.constant 0 : index
    %18 = vector.load %arg4[%c0_5, %c0_6] : memref<1152x128xf32, #tpu.memory_space<vmem>>, vector<1152x128xf32>
    %cst = arith.constant dense<0.000000e+00> : vector<256x128xf32>
    %19 = tpu.matmul %17, %18, %cst {dimension_numbers = #tpu.dot_dimension_numbers<[1], [0], [0], [1], [0, 0, 1, 1], [], []>} : vector<256x1152xf32>, vector<1152x128xf32>, vector<256x128xf32> -> vector<256x128xf32>
    %c0_7 = arith.constant 0 : index
    %c0_8 = arith.constant 0 : index
    %20 = vector.load %arg5[%c0_7, %c0_8] : memref<1x128xf32, #tpu.memory_space<vmem>>, vector<1x128xf32>
    %21 = vector.shape_cast %20 : vector<1x128xf32> to vector<128xf32>
    %22 = vector.shape_cast %21 : vector<128xf32> to vector<1x128xf32>
    %23 = vector.broadcast %22 : vector<1x128xf32> to vector<256x128xf32>
    %24 = arith.addf %19, %23 : vector<256x128xf32>
    %25 = vector.shape_cast %24 : vector<256x128xf32> to vector<16x16x128xf32>
    %c0_9 = arith.constant 0 : index
    %c0_10 = arith.constant 0 : index
    %c0_11 = arith.constant 0 : index
    %c0_12 = arith.constant 0 : index
    %26 = vector.load %arg7[%c0_9, %c0_10, %c0_11, %c0_12] : memref<1x16x16x128xf32, #tpu.memory_space<vmem>>, vector<1x16x16x128xf32>
    %27 = vector.shape_cast %26 : vector<1x16x16x128xf32> to vector<16x16x128xf32>
    %28 = vector.shape_cast %25 : vector<16x16x128xf32> to vector<1x16x16x128xf32>
    tpu.vector_store %arg7[%c0_9, %c0_10, %c0_11, %c0_12], %28 {strides = array<i32>} : memref<1x16x16x128xf32, #tpu.memory_space<vmem>>, vector<1x16x16x128xf32>,
    %cst_13 = arith.constant dense<0.000000e+00> : vector<128xf32>
    %29 = vector.multi_reduction <add>, %24, %cst_13 [0] : vector<256x128xf32> to vector<128xf32>
    %30 = vector.shape_cast %29 : vector<128xf32> to vector<1x1x128xf32>
    %31 = arith.mulf %24, %24 : vector<256x128xf32>
    %cst_14 = arith.constant dense<0.000000e+00> : vector<128xf32>
    %32 = vector.multi_reduction <add>, %31, %cst_14 [0] : vector<256x128xf32> to vector<128xf32>
    %33 = vector.shape_cast %32 : vector<128xf32> to vector<1x1x128xf32>
    %c0_i32_15 = arith.constant 0 : i32
    %34 = arith.cmpi eq, %arg1, %c0_i32_15 : i32
    %35 = arith.extui %34 : i1 to i32
    %c0_i32_16 = arith.constant 0 : i32
    %36 = arith.cmpi ne, %35, %c0_i32_16 : i32
    scf.if %36 {
      %cst_29 = arith.constant 0.000000e+00 : f32
      %43 = vector.broadcast %cst_29 : f32 to vector<1x1x128xf32>
      %c0_30 = arith.constant 0 : index
      %c0_31 = arith.constant 0 : index
      %c0_32 = arith.constant 0 : index
      %44 = vector.load %arg8[%c0_30, %c0_31, %c0_32] : memref<1x1x128xf32, #tpu.memory_space<vmem>>, vector<1x1x128xf32>
      tpu.vector_store %arg8[%c0_30, %c0_31, %c0_32], %43 {strides = array<i32>} : memref<1x1x128xf32, #tpu.memory_space<vmem>>, vector<1x1x128xf32>,
      %cst_33 = arith.constant 0.000000e+00 : f32
      %45 = vector.broadcast %cst_33 : f32 to vector<1x1x128xf32>
      %c0_34 = arith.constant 0 : index
      %c0_35 = arith.constant 0 : index
      %c0_36 = arith.constant 0 : index
      %46 = vector.load %arg9[%c0_34, %c0_35, %c0_36] : memref<1x1x128xf32, #tpu.memory_space<vmem>>, vector<1x1x128xf32>
      tpu.vector_store %arg9[%c0_34, %c0_35, %c0_36], %45 {strides = array<i32>} : memref<1x1x128xf32, #tpu.memory_space<vmem>>, vector<1x1x128xf32>,
    } else {
    }
    %c0_17 = arith.constant 0 : index
    %c0_18 = arith.constant 0 : index
    %c0_19 = arith.constant 0 : index
    %37 = vector.load %arg8[%c0_17, %c0_18, %c0_19] : memref<1x1x128xf32, #tpu.memory_space<vmem>>, vector<1x1x128xf32>
    %38 = arith.addf %37, %30 : vector<1x1x128xf32>
    %c0_20 = arith.constant 0 : index
    %c0_21 = arith.constant 0 : index
    %c0_22 = arith.constant 0 : index
    %39 = vector.load %arg8[%c0_20, %c0_21, %c0_22] : memref<1x1x128xf32, #tpu.memory_space<vmem>>, vector<1x1x128xf32>
    tpu.vector_store %arg8[%c0_20, %c0_21, %c0_22], %38 {strides = array<i32>} : memref<1x1x128xf32, #tpu.memory_space<vmem>>, vector<1x1x128xf32>,
    %c0_23 = arith.constant 0 : index
    %c0_24 = arith.constant 0 : index
    %c0_25 = arith.constant 0 : index
    %40 = vector.load %arg9[%c0_23, %c0_24, %c0_25] : memref<1x1x128xf32, #tpu.memory_space<vmem>>, vector<1x1x128xf32>
    %41 = arith.addf %40, %33 : vector<1x1x128xf32>
    %c0_26 = arith.constant 0 : index
    %c0_27 = arith.constant 0 : index
    %c0_28 = arith.constant 0 : index
    %42 = vector.load %arg9[%c0_26, %c0_27, %c0_28] : memref<1x1x128xf32, #tpu.memory_space<vmem>>, vector<1x1x128xf32>
    tpu.vector_store %arg9[%c0_26, %c0_27, %c0_28], %41 {strides = array<i32>} : memref<1x1x128xf32, #tpu.memory_space<vmem>>, vector<1x1x128xf32>,
    return
  }
  func.func @transform_0(%arg0: i32, %arg1: i32) -> (i32, i32) {
    %c0_i32 = arith.constant 0 : i32
    %c0_i32_0 = arith.constant 0 : i32
    %c0_i32_1 = arith.constant 0 : i32
    return %c0_i32, %c0_i32_0 : i32, i32
  }
  func.func @transform_1(%arg0: i32, %arg1: i32) -> (i32, i32) {
    %c0_i32 = arith.constant 0 : i32
    %c0_i32_0 = arith.constant 0 : i32
    %c0_i32_1 = arith.constant 0 : i32
    return %c0_i32, %c0_i32_0 : i32, i32
  }
  func.func @transform_2(%arg0: i32, %arg1: i32) -> (i32, i32) {
    %c0_i32 = arith.constant 0 : i32
    %c0_i32_0 = arith.constant 0 : i32
    %c0_i32_1 = arith.constant 0 : i32
    return %c0_i32, %c0_i32_0 : i32, i32
  }
  func.func @transform_3(%arg0: i32, %arg1: i32) -> (i32, i32) {
    %c0_i32 = arith.constant 0 : i32
    %c0_i32_0 = arith.constant 0 : i32
    %c0_i32_1 = arith.constant 0 : i32
    return %c0_i32, %c0_i32_0 : i32, i32
  }
  func.func @transform_5(%arg0: i32, %arg1: i32) -> (i32, i32, i32, i32) {
    %c0_i32 = arith.constant 0 : i32
    %c0_i32_0 = arith.constant 0 : i32
    %c0_i32_1 = arith.constant 0 : i32
    return %arg0, %arg1, %c0_i32, %c0_i32_0 : i32, i32, i32, i32
  }
  func.func @transform_6(%arg0: i32, %arg1: i32) -> (i32, i32, i32) {
    %c0_i32 = arith.constant 0 : i32
    %c0_i32_0 = arith.constant 0 : i32
    %c0_i32_1 = arith.constant 0 : i32
    return %arg0, %c0_i32, %c0_i32_0 : i32, i32, i32
  }
  func.func @transform_7(%arg0: i32, %arg1: i32) -> (i32, i32, i32) {
    %c0_i32 = arith.constant 0 : i32
    %c0_i32_0 = arith.constant 0 : i32
    %c0_i32_1 = arith.constant 0 : i32
    return %arg0, %c0_i32, %c0_i32_0 : i32, i32, i32
  }
}

module attributes {stable_mosaic.version = 11 : i64} {
  func.func @_conv_bn_stage_kernel(%arg0: i32, %arg1: i32, %arg2: memref<1x128xf32, #tpu.memory_space<vmem>>, %arg3: memref<1x128xf32, #tpu.memory_space<vmem>>, %arg4: memref<1152x128xf32, #tpu.memory_space<vmem>>, %arg5: memref<1x128xf32, #tpu.memory_space<vmem>>, %arg6: memref<2x18x18x128xf32, #tpu.memory_space<any>>, %arg7: memref<1x16x16x128xf32, #tpu.memory_space<vmem>>, %arg8: memref<1x1x128xf32, #tpu.memory_space<vmem>>, %arg9: memref<1x1x128xf32, #tpu.memory_space<vmem>>, %arg10: memref<18x18x128xf32, #tpu.memory_space<vmem>>, %arg11: memref<!tpu.dma_semaphore, #tpu.memory_space<semaphore_mem>>) attributes {dimension_semantics = [#tpu.dimension_semantics<parallel>, #tpu.dimension_semantics<arbitrary>], iteration_bounds = array<i64: 2, 1>, scalar_prefetch = 0 : i64, scratch_operands = 2 : i64, tpu.core_type = #tpu.core_type<tc>, window_params = [{pipeline_mode = #tpu.pipeline_mode<synchronous>, transform_indices = @transform_0, window_bounds = array<i64: 1, 128>}, {pipeline_mode = #tpu.pipeline_mode<synchronous>, transform_indices = @transform_1, window_bounds = array<i64: 1, 128>}, {pipeline_mode = #tpu.pipeline_mode<synchronous>, transform_indices = @transform_2, window_bounds = array<i64: 1152, 128>}, {pipeline_mode = #tpu.pipeline_mode<synchronous>, transform_indices = @transform_3, window_bounds = array<i64: 1, 128>}, {}, {transform_indices = @transform_5, window_bounds = array<i64: 1, 16, 16, 128>}, {transform_indices = @transform_6, window_bounds = array<i64: 1, 1, 128>}, {transform_indices = @transform_7, window_bounds = array<i64: 1, 1, 128>}]} {
    %c16_i32 = arith.constant 16 : i32
    %0 = arith.muli %arg1, %c16_i32 : i32
    %1 = tpu.assume_multiple %0, 16 : i32
    %c0_i32 = arith.constant 0 : i32
    %c0_i32_0 = arith.constant 0 : i32
    %2 = tpu.memref_slice %arg6[%arg0, %1, %c0_i32, %c0_i32_0] : memref<2x18x18x128xf32, #tpu.memory_space<any>> -> memref<1x18x18x128xf32, #tpu.memory_space<any>>
    %3 = tpu.memref_squeeze %2 : memref<1x18x18x128xf32, #tpu.memory_space<any>> -> memref<18x18x128xf32, #tpu.memory_space<any>>
    tpu.enqueue_dma source(%3 : memref<18x18x128xf32, #tpu.memory_space<any>>) target(%arg10 : memref<18x18x128xf32, #tpu.memory_space<vmem>>) target_semaphore(%arg11 : memref<!tpu.dma_semaphore, #tpu.memory_space<semaphore_mem>>)
    %c0_i32_1 = arith.constant 0 : i32
    %c0_i32_2 = arith.constant 0 : i32
    %4 = tpu.memref_slice %arg6[%arg0, %1, %c0_i32_1, %c0_i32_2] : memref<2x18x18x128xf32, #tpu.memory_space<any>> -> memref<1x18x18x128xf32, #tpu.memory_space<any>>
    %5 = tpu.memref_squeeze %4 : memref<1x18x18x128xf32, #tpu.memory_space<any>> -> memref<18x18x128xf32, #tpu.memory_space<any>>
    tpu.wait_dma2 semaphore(%arg11 : memref<!tpu.dma_semaphore, #tpu.memory_space<semaphore_mem>>) src(%5 : memref<18x18x128xf32, #tpu.memory_space<any>>) dst(%arg10 : memref<18x18x128xf32, #tpu.memory_space<vmem>>)
    %c0 = arith.constant 0 : index
    %c0_3 = arith.constant 0 : index
    %c0_4 = arith.constant 0 : index
    %6 = vector.load %arg10[%c0, %c0_3, %c0_4] : memref<18x18x128xf32, #tpu.memory_space<vmem>>, vector<18x18x128xf32>
    %c0_5 = arith.constant 0 : index
    %c0_6 = arith.constant 0 : index
    %7 = vector.load %arg2[%c0_5, %c0_6] : memref<1x128xf32, #tpu.memory_space<vmem>>, vector<1x128xf32>
    %8 = vector.shape_cast %7 : vector<1x128xf32> to vector<128xf32>
    %9 = vector.shape_cast %8 : vector<128xf32> to vector<1x1x128xf32>
    %10 = vector.broadcast %9 : vector<1x1x128xf32> to vector<18x18x128xf32>
    %11 = arith.mulf %6, %10 : vector<18x18x128xf32>
    %c0_7 = arith.constant 0 : index
    %c0_8 = arith.constant 0 : index
    %12 = vector.load %arg3[%c0_7, %c0_8] : memref<1x128xf32, #tpu.memory_space<vmem>>, vector<1x128xf32>
    %13 = vector.shape_cast %12 : vector<1x128xf32> to vector<128xf32>
    %14 = vector.shape_cast %13 : vector<128xf32> to vector<1x1x128xf32>
    %15 = vector.broadcast %14 : vector<1x1x128xf32> to vector<18x18x128xf32>
    %16 = arith.addf %11, %15 : vector<18x18x128xf32>
    %cst = arith.constant 0.000000e+00 : f32
    %17 = vector.broadcast %cst : f32 to vector<18x18x128xf32>
    %18 = arith.maximumf %16, %17 : vector<18x18x128xf32>
    %19 = tpu.iota {dimensions = array<i32: 0>} : vector<18x18x1xi32>
    %20 = vector.broadcast %1 : i32 to vector<18x18x1xi32>
    %21 = arith.addi %19, %20 : vector<18x18x1xi32>
    %22 = tpu.iota {dimensions = array<i32: 1>} : vector<18x18x1xi32>
    %c1_i32 = arith.constant 1 : i32
    %23 = vector.broadcast %c1_i32 : i32 to vector<18x18x1xi32>
    %24 = arith.cmpi sge, %21, %23 : vector<18x18x1xi32>
    %c16_i32_9 = arith.constant 16 : i32
    %25 = vector.broadcast %c16_i32_9 : i32 to vector<18x18x1xi32>
    %26 = arith.cmpi sle, %21, %25 : vector<18x18x1xi32>
    %27 = arith.andi %24, %26 : vector<18x18x1xi1>
    %c1_i32_10 = arith.constant 1 : i32
    %28 = vector.broadcast %c1_i32_10 : i32 to vector<18x18x1xi32>
    %29 = arith.cmpi sge, %22, %28 : vector<18x18x1xi32>
    %30 = arith.andi %27, %29 : vector<18x18x1xi1>
    %c16_i32_11 = arith.constant 16 : i32
    %31 = vector.broadcast %c16_i32_11 : i32 to vector<18x18x1xi32>
    %32 = arith.cmpi sle, %22, %31 : vector<18x18x1xi32>
    %33 = arith.andi %30, %32 : vector<18x18x1xi1>
    %cst_12 = arith.constant 0.000000e+00 : f32
    %34 = vector.shape_cast %33 : vector<18x18x1xi1> to vector<18x18x1xi1>
    %35 = vector.broadcast %34 : vector<18x18x1xi1> to vector<18x18x128xi1>
    %36 = vector.broadcast %cst_12 : f32 to vector<18x18x128xf32>
    %37 = arith.select %35, %18, %36 : vector<18x18x128xi1>, vector<18x18x128xf32>
    %38 = vector.extract_strided_slice %37 {offsets = [0, 0, 0], sizes = [16, 16, 128], strides = [1, 1, 1]} : vector<18x18x128xf32> to vector<16x16x128xf32>
    %39 = vector.extract_strided_slice %37 {offsets = [0, 1, 0], sizes = [16, 16, 128], strides = [1, 1, 1]} : vector<18x18x128xf32> to vector<16x16x128xf32>
    %40 = vector.extract_strided_slice %37 {offsets = [0, 2, 0], sizes = [16, 16, 128], strides = [1, 1, 1]} : vector<18x18x128xf32> to vector<16x16x128xf32>
    %41 = vector.extract_strided_slice %37 {offsets = [1, 0, 0], sizes = [16, 16, 128], strides = [1, 1, 1]} : vector<18x18x128xf32> to vector<16x16x128xf32>
    %42 = vector.extract_strided_slice %37 {offsets = [1, 1, 0], sizes = [16, 16, 128], strides = [1, 1, 1]} : vector<18x18x128xf32> to vector<16x16x128xf32>
    %43 = vector.extract_strided_slice %37 {offsets = [1, 2, 0], sizes = [16, 16, 128], strides = [1, 1, 1]} : vector<18x18x128xf32> to vector<16x16x128xf32>
    %44 = vector.extract_strided_slice %37 {offsets = [2, 0, 0], sizes = [16, 16, 128], strides = [1, 1, 1]} : vector<18x18x128xf32> to vector<16x16x128xf32>
    %45 = vector.extract_strided_slice %37 {offsets = [2, 1, 0], sizes = [16, 16, 128], strides = [1, 1, 1]} : vector<18x18x128xf32> to vector<16x16x128xf32>
    %46 = vector.extract_strided_slice %37 {offsets = [2, 2, 0], sizes = [16, 16, 128], strides = [1, 1, 1]} : vector<18x18x128xf32> to vector<16x16x128xf32>
    %47 = tpu.concatenate %38, %39, %40, %41, %42, %43, %44, %45, %46 in 2 : vector<16x16x128xf32>, vector<16x16x128xf32>, vector<16x16x128xf32>, vector<16x16x128xf32>, vector<16x16x128xf32>, vector<16x16x128xf32>, vector<16x16x128xf32>, vector<16x16x128xf32>, vector<16x16x128xf32> -> vector<16x16x1152xf32>
    %48 = vector.shape_cast %47 : vector<16x16x1152xf32> to vector<256x1152xf32>
    %c0_13 = arith.constant 0 : index
    %c0_14 = arith.constant 0 : index
    %49 = vector.load %arg4[%c0_13, %c0_14] : memref<1152x128xf32, #tpu.memory_space<vmem>>, vector<1152x128xf32>
    %cst_15 = arith.constant dense<0.000000e+00> : vector<256x128xf32>
    %50 = tpu.matmul %48, %49, %cst_15 {dimension_numbers = #tpu.dot_dimension_numbers<[1], [0], [0], [1], [0, 0, 1, 1], [], []>} : vector<256x1152xf32>, vector<1152x128xf32>, vector<256x128xf32> -> vector<256x128xf32>
    %c0_16 = arith.constant 0 : index
    %c0_17 = arith.constant 0 : index
    %51 = vector.load %arg5[%c0_16, %c0_17] : memref<1x128xf32, #tpu.memory_space<vmem>>, vector<1x128xf32>
    %52 = vector.shape_cast %51 : vector<1x128xf32> to vector<128xf32>
    %53 = vector.shape_cast %52 : vector<128xf32> to vector<1x128xf32>
    %54 = vector.broadcast %53 : vector<1x128xf32> to vector<256x128xf32>
    %55 = arith.addf %50, %54 : vector<256x128xf32>
    %56 = vector.shape_cast %55 : vector<256x128xf32> to vector<16x16x128xf32>
    %c0_18 = arith.constant 0 : index
    %c0_19 = arith.constant 0 : index
    %c0_20 = arith.constant 0 : index
    %c0_21 = arith.constant 0 : index
    %57 = vector.load %arg7[%c0_18, %c0_19, %c0_20, %c0_21] : memref<1x16x16x128xf32, #tpu.memory_space<vmem>>, vector<1x16x16x128xf32>
    %58 = vector.shape_cast %57 : vector<1x16x16x128xf32> to vector<16x16x128xf32>
    %59 = vector.shape_cast %56 : vector<16x16x128xf32> to vector<1x16x16x128xf32>
    tpu.vector_store %arg7[%c0_18, %c0_19, %c0_20, %c0_21], %59 {strides = array<i32>} : memref<1x16x16x128xf32, #tpu.memory_space<vmem>>, vector<1x16x16x128xf32>,
    %cst_22 = arith.constant dense<0.000000e+00> : vector<128xf32>
    %60 = vector.multi_reduction <add>, %55, %cst_22 [0] : vector<256x128xf32> to vector<128xf32>
    %61 = vector.shape_cast %60 : vector<128xf32> to vector<1x1x128xf32>
    %62 = arith.mulf %55, %55 : vector<256x128xf32>
    %cst_23 = arith.constant dense<0.000000e+00> : vector<128xf32>
    %63 = vector.multi_reduction <add>, %62, %cst_23 [0] : vector<256x128xf32> to vector<128xf32>
    %64 = vector.shape_cast %63 : vector<128xf32> to vector<1x1x128xf32>
    %c0_i32_24 = arith.constant 0 : i32
    %65 = arith.cmpi eq, %arg1, %c0_i32_24 : i32
    %66 = arith.extui %65 : i1 to i32
    %c0_i32_25 = arith.constant 0 : i32
    %67 = arith.cmpi ne, %66, %c0_i32_25 : i32
    scf.if %67 {
      %cst_38 = arith.constant 0.000000e+00 : f32
      %74 = vector.broadcast %cst_38 : f32 to vector<1x1x128xf32>
      %c0_39 = arith.constant 0 : index
      %c0_40 = arith.constant 0 : index
      %c0_41 = arith.constant 0 : index
      %75 = vector.load %arg8[%c0_39, %c0_40, %c0_41] : memref<1x1x128xf32, #tpu.memory_space<vmem>>, vector<1x1x128xf32>
      tpu.vector_store %arg8[%c0_39, %c0_40, %c0_41], %74 {strides = array<i32>} : memref<1x1x128xf32, #tpu.memory_space<vmem>>, vector<1x1x128xf32>,
      %cst_42 = arith.constant 0.000000e+00 : f32
      %76 = vector.broadcast %cst_42 : f32 to vector<1x1x128xf32>
      %c0_43 = arith.constant 0 : index
      %c0_44 = arith.constant 0 : index
      %c0_45 = arith.constant 0 : index
      %77 = vector.load %arg9[%c0_43, %c0_44, %c0_45] : memref<1x1x128xf32, #tpu.memory_space<vmem>>, vector<1x1x128xf32>
      tpu.vector_store %arg9[%c0_43, %c0_44, %c0_45], %76 {strides = array<i32>} : memref<1x1x128xf32, #tpu.memory_space<vmem>>, vector<1x1x128xf32>,
    } else {
    }
    %c0_26 = arith.constant 0 : index
    %c0_27 = arith.constant 0 : index
    %c0_28 = arith.constant 0 : index
    %68 = vector.load %arg8[%c0_26, %c0_27, %c0_28] : memref<1x1x128xf32, #tpu.memory_space<vmem>>, vector<1x1x128xf32>
    %69 = arith.addf %68, %61 : vector<1x1x128xf32>
    %c0_29 = arith.constant 0 : index
    %c0_30 = arith.constant 0 : index
    %c0_31 = arith.constant 0 : index
    %70 = vector.load %arg8[%c0_29, %c0_30, %c0_31] : memref<1x1x128xf32, #tpu.memory_space<vmem>>, vector<1x1x128xf32>
    tpu.vector_store %arg8[%c0_29, %c0_30, %c0_31], %69 {strides = array<i32>} : memref<1x1x128xf32, #tpu.memory_space<vmem>>, vector<1x1x128xf32>,
    %c0_32 = arith.constant 0 : index
    %c0_33 = arith.constant 0 : index
    %c0_34 = arith.constant 0 : index
    %71 = vector.load %arg9[%c0_32, %c0_33, %c0_34] : memref<1x1x128xf32, #tpu.memory_space<vmem>>, vector<1x1x128xf32>
    %72 = arith.addf %71, %64 : vector<1x1x128xf32>
    %c0_35 = arith.constant 0 : index
    %c0_36 = arith.constant 0 : index
    %c0_37 = arith.constant 0 : index
    %73 = vector.load %arg9[%c0_35, %c0_36, %c0_37] : memref<1x1x128xf32, #tpu.memory_space<vmem>>, vector<1x1x128xf32>
    tpu.vector_store %arg9[%c0_35, %c0_36, %c0_37], %72 {strides = array<i32>} : memref<1x1x128xf32, #tpu.memory_space<vmem>>, vector<1x1x128xf32>,
    return
  }
  func.func @transform_0(%arg0: i32, %arg1: i32) -> (i32, i32) {
    %c0_i32 = arith.constant 0 : i32
    %c0_i32_0 = arith.constant 0 : i32
    %c0_i32_1 = arith.constant 0 : i32
    return %c0_i32, %c0_i32_0 : i32, i32
  }
  func.func @transform_1(%arg0: i32, %arg1: i32) -> (i32, i32) {
    %c0_i32 = arith.constant 0 : i32
    %c0_i32_0 = arith.constant 0 : i32
    %c0_i32_1 = arith.constant 0 : i32
    return %c0_i32, %c0_i32_0 : i32, i32
  }
  func.func @transform_2(%arg0: i32, %arg1: i32) -> (i32, i32) {
    %c0_i32 = arith.constant 0 : i32
    %c0_i32_0 = arith.constant 0 : i32
    %c0_i32_1 = arith.constant 0 : i32
    return %c0_i32, %c0_i32_0 : i32, i32
  }
  func.func @transform_3(%arg0: i32, %arg1: i32) -> (i32, i32) {
    %c0_i32 = arith.constant 0 : i32
    %c0_i32_0 = arith.constant 0 : i32
    %c0_i32_1 = arith.constant 0 : i32
    return %c0_i32, %c0_i32_0 : i32, i32
  }
  func.func @transform_5(%arg0: i32, %arg1: i32) -> (i32, i32, i32, i32) {
    %c0_i32 = arith.constant 0 : i32
    %c0_i32_0 = arith.constant 0 : i32
    %c0_i32_1 = arith.constant 0 : i32
    return %arg0, %arg1, %c0_i32, %c0_i32_0 : i32, i32, i32, i32
  }
  func.func @transform_6(%arg0: i32, %arg1: i32) -> (i32, i32, i32) {
    %c0_i32 = arith.constant 0 : i32
    %c0_i32_0 = arith.constant 0 : i32
    %c0_i32_1 = arith.constant 0 : i32
    return %arg0, %c0_i32, %c0_i32_0 : i32, i32, i32
  }
  func.func @transform_7(%arg0: i32, %arg1: i32) -> (i32, i32, i32) {
    %c0_i32 = arith.constant 0 : i32
    %c0_i32_0 = arith.constant 0 : i32
    %c0_i32_1 = arith.constant 0 : i32
    return %arg0, %c0_i32, %c0_i32_0 : i32, i32, i32
  }
}

module attributes {stable_mosaic.version = 11 : i64} {
  func.func @_bn_relu_apply_kernel(%arg0: i32, %arg1: i32, %arg2: memref<1x128xf32, #tpu.memory_space<vmem>>, %arg3: memref<1x128xf32, #tpu.memory_space<vmem>>, %arg4: memref<1x16x16x128xf32, #tpu.memory_space<vmem>>, %arg5: memref<1x16x16x128xf32, #tpu.memory_space<vmem>>) attributes {dimension_semantics = [#tpu.dimension_semantics<parallel>, #tpu.dimension_semantics<parallel>], iteration_bounds = array<i64: 2, 1>, scalar_prefetch = 0 : i64, scratch_operands = 0 : i64, tpu.core_type = #tpu.core_type<tc>, window_params = [{pipeline_mode = #tpu.pipeline_mode<synchronous>, transform_indices = @transform_0, window_bounds = array<i64: 1, 128>}, {pipeline_mode = #tpu.pipeline_mode<synchronous>, transform_indices = @transform_1, window_bounds = array<i64: 1, 128>}, {transform_indices = @transform_2, window_bounds = array<i64: 1, 16, 16, 128>}, {transform_indices = @transform_3, window_bounds = array<i64: 1, 16, 16, 128>}]} {
    %c0 = arith.constant 0 : index
    %c0_0 = arith.constant 0 : index
    %c0_1 = arith.constant 0 : index
    %c0_2 = arith.constant 0 : index
    %0 = vector.load %arg4[%c0, %c0_0, %c0_1, %c0_2] : memref<1x16x16x128xf32, #tpu.memory_space<vmem>>, vector<1x16x16x128xf32>
    %c0_3 = arith.constant 0 : index
    %c0_4 = arith.constant 0 : index
    %1 = vector.load %arg2[%c0_3, %c0_4] : memref<1x128xf32, #tpu.memory_space<vmem>>, vector<1x128xf32>
    %2 = vector.shape_cast %1 : vector<1x128xf32> to vector<128xf32>
    %3 = vector.shape_cast %2 : vector<128xf32> to vector<1x1x1x128xf32>
    %4 = vector.broadcast %3 : vector<1x1x1x128xf32> to vector<1x16x16x128xf32>
    %5 = arith.mulf %0, %4 : vector<1x16x16x128xf32>
    %c0_5 = arith.constant 0 : index
    %c0_6 = arith.constant 0 : index
    %6 = vector.load %arg3[%c0_5, %c0_6] : memref<1x128xf32, #tpu.memory_space<vmem>>, vector<1x128xf32>
    %7 = vector.shape_cast %6 : vector<1x128xf32> to vector<128xf32>
    %8 = vector.shape_cast %7 : vector<128xf32> to vector<1x1x1x128xf32>
    %9 = vector.broadcast %8 : vector<1x1x1x128xf32> to vector<1x16x16x128xf32>
    %10 = arith.addf %5, %9 : vector<1x16x16x128xf32>
    %cst = arith.constant 0.000000e+00 : f32
    %11 = vector.broadcast %cst : f32 to vector<1x16x16x128xf32>
    %12 = arith.maximumf %10, %11 : vector<1x16x16x128xf32>
    %c0_7 = arith.constant 0 : index
    %c0_8 = arith.constant 0 : index
    %c0_9 = arith.constant 0 : index
    %c0_10 = arith.constant 0 : index
    %13 = vector.load %arg5[%c0_7, %c0_8, %c0_9, %c0_10] : memref<1x16x16x128xf32, #tpu.memory_space<vmem>>, vector<1x16x16x128xf32>
    tpu.vector_store %arg5[%c0_7, %c0_8, %c0_9, %c0_10], %12 {strides = array<i32>} : memref<1x16x16x128xf32, #tpu.memory_space<vmem>>, vector<1x16x16x128xf32>,
    return
  }
  func.func @transform_0(%arg0: i32, %arg1: i32) -> (i32, i32) {
    %c0_i32 = arith.constant 0 : i32
    %c0_i32_0 = arith.constant 0 : i32
    %c0_i32_1 = arith.constant 0 : i32
    return %c0_i32, %c0_i32_0 : i32, i32
  }
  func.func @transform_1(%arg0: i32, %arg1: i32) -> (i32, i32) {
    %c0_i32 = arith.constant 0 : i32
    %c0_i32_0 = arith.constant 0 : i32
    %c0_i32_1 = arith.constant 0 : i32
    return %c0_i32, %c0_i32_0 : i32, i32
  }
  func.func @transform_2(%arg0: i32, %arg1: i32) -> (i32, i32, i32, i32) {
    %c0_i32 = arith.constant 0 : i32
    %c0_i32_0 = arith.constant 0 : i32
    %c0_i32_1 = arith.constant 0 : i32
    return %arg0, %arg1, %c0_i32, %c0_i32_0 : i32, i32, i32, i32
  }
  func.func @transform_3(%arg0: i32, %arg1: i32) -> (i32, i32, i32, i32) {
    %c0_i32 = arith.constant 0 : i32
    %c0_i32_0 = arith.constant 0 : i32
    %c0_i32_1 = arith.constant 0 : i32
    return %arg0, %arg1, %c0_i32, %c0_i32_0 : i32, i32, i32, i32
  }
}

</mosaic_0001>

<llo_original>
// kernel: double_conv_forward.5
$region0: #{double_conv_forward.5}
  #allocation0 [shape = 'u32[]', space=smem, size = 0x4, offset = 0x4, fixed_abs, tag = 'smem constant byte address 0x4 - core index']
  #allocation1 [shape = 'u32[72,128]{1,0:T(1,128)}', space=vmem, size = 0x9000, scoped, tag = 'internal scratch']
  %s0 = inlined_call_operand.vmem [shape: f32[1,128], index: 0, kind: input, shape index: {}]
  %s1 = inlined_call_operand.vmem [shape: f32[1,128], index: 1, kind: input, shape index: {}]
  %s2 = inlined_call_operand.vmem [shape: f32[2,16,16,128], index: 2, kind: input, shape index: {}]
  %s3 = inlined_call_operand.vmem [shape: f32[2,16,16,128], index: 3, kind: output, shape index: {}]
  %s4 = sld [smem:[#allocation0]]
  $region45: #{double_conv_forward.5} parent=0
    _
  %s6 = ssub.s32 1, %s4
  %s7 = scalar_select 0, %s6, %s4
  loop: start=0, step=1, limit=4
  $region2: #{double_conv_forward.5} parent=0 // loop_pre_header
    _
  $region3: #{double_conv_forward.5} parent=0 // loop_header
    %s9 = sphi 0, %s13
    %p10 = scmp.ge.s32.totalorder %s9, 4
    %s16 = sphi 0, %s28
    %s17 = sphi 0, %s24
    %s18 = sphi 0, %s16
    %s19 = sphi 0, %s17
    %s20 = sphi 0, %s18
    %s21 = sphi 0, %s19
    %s29 = sphi 0, %s29
    %s31 = sphi 0, %s29
    %s32 = sphi 0, %s31
    %s46 = sphi 0, %s32
    %s50 = sphi 0, %s50
    %s52 = sphi 0, %s50
    %s53 = sphi 0, %s52
    %s67 = sphi 0, %s53
    %s75 = sphi 0, %s77
    %s78 = sphi 0, %s75
    %s79 = sphi 0, %s78
    %s95 = sphi 0, %s79
    %s103 = sphi 0, %s105
    %s106 = sphi 0, %s103
    %s107 = sphi 0, %s106
    %s123 = sphi 0, %s107
  $region4: #{double_conv_forward.5} parent=0 // loop_header_branch
    %12 = sbr.rel (%p10) target = $region8
  $region5: #{double_conv_forward.5} parent=0 // loop_body
    %s14 = ssub.s32 %s9, 1
    %s15 = ssub.s32 %s9, 2
    %s22 = sadd.s32 1, %s17
    %p23 = scmp.ge.s32.totalorder %s22, 1
    %s24 = scalar_select %p23, 0, %s22
    %s25 = sadd.s32 1, %s16
    %s26 = scalar_select %p23, %s25, %s16
    %p27 = scmp.ge.s32.totalorder %s26, 2
    %s28 = scalar_select %p27, 0, %s26
    %s30 = sadd.s32 %s29, 1
    %p33 = scmp.eq.s32.totalorder %s9, 1
    %p34 = scmp.ne.s32.totalorder %s29, %s31
    %p35 = scmp.eq.s32.totalorder %s9, 0
    %p36 = por %p34, %p35
    %p37 = scmp.ne.s32.totalorder %s29, %s31
    %p38 = scmp.eq.s32.totalorder %s14, 1
    %p39 = por %p37, %p38
    %p40 = scmp.ne.s32.totalorder %s31, %s32
    %p41 = scmp.eq.s32.totalorder %s14, 0
    %p42 = por %p40, %p41
    %p43 = scmp.ne.s32.totalorder %s31, %s32
    %p44 = scmp.eq.s32.totalorder %s15, 1
    %p45 = por %p43, %p44
    %p47 = scmp.ne.s32.totalorder %s32, %s46
    %p48 = scmp.eq.s32.totalorder %s15, 0
    %p49 = por %p47, %p48
    %s51 = sadd.s32 %s50, 1
    %p54 = scmp.eq.s32.totalorder %s9, 1
    %p55 = scmp.ne.s32.totalorder %s50, %s52
    %p56 = scmp.eq.s32.totalorder %s9, 0
    %p57 = por %p55, %p56
    %p58 = scmp.ne.s32.totalorder %s50, %s52
    %p59 = scmp.eq.s32.totalorder %s14, 1
    %p60 = por %p58, %p59
    %p61 = scmp.ne.s32.totalorder %s52, %s53
    %p62 = scmp.eq.s32.totalorder %s14, 0
    %p63 = por %p61, %p62
    %p64 = scmp.ne.s32.totalorder %s52, %s53
    %p65 = scmp.eq.s32.totalorder %s15, 1
    %p66 = por %p64, %p65
    %p68 = scmp.ne.s32.totalorder %s53, %s67
    %p69 = scmp.eq.s32.totalorder %s15, 0
    %p70 = por %p68, %p69
    %s71 = ssub.s32 %s16, %s28
    %s72 = ssub.s32 %s17, %s24
    %s73 = sor.u32 %s71, %s72
    %p74 = scmp.eq.s32.totalorder %s73, 0
    %s76 = sadd.s32 %s75, 1
    %s77 = scalar_select %p74, %s75, %s76
    %p80 = pneg %p74
    %p81 = scmp.eq.s32.totalorder %s9, 1
    %p82 = por %p80, %p81
    %p83 = scmp.ne.s32.totalorder %s75, %s78
    %p84 = scmp.eq.s32.totalorder %s9, 0
    %p85 = por %p83, %p84
    %p86 = scmp.ne.s32.totalorder %s75, %s78
    %p87 = scmp.eq.s32.totalorder %s14, 1
    %p88 = por %p86, %p87
    %p89 = scmp.ne.s32.totalorder %s78, %s79
    %p90 = scmp.eq.s32.totalorder %s14, 0
    %p91 = por %p89, %p90
    %p92 = scmp.ne.s32.totalorder %s78, %s79
    %p93 = scmp.eq.s32.totalorder %s15, 1
    %p94 = por %p92, %p93
    %p96 = scmp.ne.s32.totalorder %s79, %s95
    %p97 = scmp.eq.s32.totalorder %s15, 0
    %p98 = por %p96, %p97
    %s99 = ssub.s32 %s16, %s28
    %s100 = ssub.s32 %s17, %s24
    %s101 = sor.u32 %s99, %s100
    %p102 = scmp.eq.s32.totalorder %s101, 0
    %s104 = sadd.s32 %s103, 1
    %s105 = scalar_select %p102, %s103, %s104
    %p108 = pneg %p102
    %p109 = scmp.eq.s32.totalorder %s9, 1
    %p110 = por %p108, %p109
    %p111 = scmp.ne.s32.totalorder %s103, %s106
    %p112 = scmp.eq.s32.totalorder %s9, 0
    %p113 = por %p111, %p112
    %p114 = scmp.ne.s32.totalorder %s103, %s106
    %p115 = scmp.eq.s32.totalorder %s14, 1
    %p116 = por %p114, %p115
    %p117 = scmp.ne.s32.totalorder %s106, %s107
    %p118 = scmp.eq.s32.totalorder %s14, 0
    %p119 = por %p117, %p118
    %p120 = scmp.ne.s32.totalorder %s106, %s107
    %p121 = scmp.eq.s32.totalorder %s15, 1
    %p122 = por %p120, %p121
    %p124 = scmp.ne.s32.totalorder %s107, %s123
    %p125 = scmp.eq.s32.totalorder %s15, 0
    %p126 = por %p124, %p125
    %p127 = scmp.le.s32.totalorder 1, %s9
    %p128 = scmp.lt.s32.totalorder %s9, 3
    %p129 = pnand %p127, %p128
    %p130 = pneg %p129
    // Predicated region
    $region9: #{double_conv_forward.5} parent=5 // pred_check
      _
    $region10: #{double_conv_forward.5} parent=5 // pred_check_branch
      %132 = sbr.rel (%p129) target = $region12
    $region11: #{double_conv_forward.5} parent=5 // pred_region
      %s133 = ssub.s32 %s9, 1
      // Predicated region
      $region13: #{double_conv_forward.5} parent=11 // pred_check
        %p134 = pneg %p42
      $region14: #{double_conv_forward.5} parent=11 // pred_check_branch
        %136 = sbr.rel (%p134) target = $region16
      $region15: #{double_conv_forward.5} parent=11 // pred_region
        _
      $region16: #{double_conv_forward.5} parent=11 // pred_fallthru
        _
      // Predicated region
      $region17: #{double_conv_forward.5} parent=11 // pred_check
        %p137 = pneg %p63
      $region18: #{double_conv_forward.5} parent=11 // pred_check_branch
        %139 = sbr.rel (%p137) target = $region20
      $region19: #{double_conv_forward.5} parent=11 // pred_region
        _
      $region20: #{double_conv_forward.5} parent=11 // pred_fallthru
        _
    $region12: #{double_conv_forward.5} parent=5 // pred_fallthru
      _
    %p140 = scmp.lt.s32.totalorder %s9, 2
    // Predicated region
    $region21: #{double_conv_forward.5} parent=5 // pred_check
      %p141 = pneg %p140
    $region22: #{double_conv_forward.5} parent=5 // pred_check_branch
      %143 = sbr.rel (%p141) target = $region24
    $region23: #{double_conv_forward.5} parent=5 // pred_region
      // Predicated region
      $region25: #{double_conv_forward.5} parent=23 // pred_check
        %p144 = pneg %p85
      $region26: #{double_conv_forward.5} parent=23 // pred_check_branch
        %146 = sbr.rel (%p144) target = $region28
      $region27: #{double_conv_forward.5} parent=23 // pred_region
        %s147 = smul.u32 16, %s17
        %p148 = scmp.lt.s32.totalorder %s16, 1
        %s149 = scalar_select %p148, %s16, 1
        %p150 = scmp.lt.s32.totalorder %s147, 15
        %s151 = scalar_select %p150, %s147, 15
        %s152 = smul.addr %s151, 2
        %s153 = smul.addr %s149, 32
        %s154 = sadd.s32 %s152, %s153
        %s155 = smul.addr %s154, 8
        %s156 = scalar_lea.vmem %s2, %s155
        %s157 = smul.u32 16, %s17
      $region28: #{double_conv_forward.5} parent=23 // pred_fallthru
        _
    $region24: #{double_conv_forward.5} parent=5 // pred_fallthru
      _
    %p158 = scmp.le.s32.totalorder 1, %s9
    %p159 = scmp.lt.s32.totalorder %s9, 3
    %p160 = pnand %p158, %p159
    %p161 = pneg %p160
    // Predicated region
    $region29: #{double_conv_forward.5} parent=5 // pred_check
      _
    $region30: #{double_conv_forward.5} parent=5 // pred_check_branch
      %163 = sbr.rel (%p160) target = $region32
    $region31: #{double_conv_forward.5} parent=5 // pred_region
      %s164 = ssub.s32 %s9, 1
      %p165 = pneg %p42
      %p166 = pneg %p39
      %p167 = pneg %p63
      %p168 = pneg %p60
      %s169 = smul.u32 16, %s19
      %p170 = scmp.lt.s32.totalorder %s18, 1
      %s171 = scalar_select %p170, %s18, 1
      %p172 = scmp.lt.s32.totalorder %s169, 15
      %s173 = scalar_select %p172, %s169, 15
      %s174 = smul.addr %s173, 2
      %s175 = smul.addr %s171, 32
      %s176 = sadd.s32 %s174, %s175
      %s177 = smul.addr %s176, 8
      %s178 = scalar_lea.vmem %s2, %s177
      %p179 = pneg %p91
      %p180 = pneg %p88
      %p181 = pneg %p119
      %p182 = pneg %p116
      %s183 = smul.u32 16, %s19
      %p184 = scmp.lt.s32.totalorder %s18, 1
      %s185 = scalar_select %p184, %s18, 1
      %p186 = scmp.lt.s32.totalorder %s183, 15
      %s187 = scalar_select %p186, %s183, 15
      %s188 = smul.addr %s187, 2
      %s189 = smul.addr %s185, 32
      %s190 = sadd.s32 %s188, %s189
      %s191 = smul.addr %s190, 8
      %s192 = scalar_lea.vmem %s3, %s191
      %s193 = smul.u32 16, %s19
      %p194 = scmp.lt.s32.totalorder %s18, 1
      %s195 = scalar_select %p194, %s18, 1
      %p196 = scmp.lt.s32.totalorder %s193, 15
      %s197 = scalar_select %p196, %s193, 15
      %s198 = smul.addr %s197, 2
      %s199 = smul.addr %s195, 32
      %s200 = sadd.s32 %s198, %s199
      %s201 = smul.addr %s200, 8
      %s202 = scalar_lea.vmem %s2, %s201
      %s203 = smul.u32 16, %s19
      %s204 = smul.u32 16, %s19
      %p205 = scmp.lt.s32.totalorder %s18, 1
      %s206 = scalar_select %p205, %s18, 1
      %p207 = scmp.lt.s32.totalorder %s204, 15
      %s208 = scalar_select %p207, %s204, 15
      %s209 = smul.addr %s208, 2
      %s210 = smul.addr %s206, 32
      %s211 = sadd.s32 %s209, %s210
      %s212 = smul.addr %s211, 8
      %s213 = scalar_lea.vmem %s3, %s212
      %s214 = smul.u32 16, %s19
      %v215 = vld [vmem:[%s202] sm:$0xff]
      %v216 = vld [vmem:[%s202 + $0x8] sm:$0xff]
      %v217 = vld [vmem:[%s202 + $0x10] sm:$0xff]
      %v218 = vld [vmem:[%s202 + $0x18] sm:$0xff]
      %v219 = vld [vmem:[%s202 + $0x20] sm:$0xff]
      %v220 = vld [vmem:[%s202 + $0x28] sm:$0xff]
      %v221 = vld [vmem:[%s202 + $0x30] sm:$0xff]
      %v222 = vld [vmem:[%s202 + $0x38] sm:$0xff]
      %v223 = vld [vmem:[%s202 + $0x40] sm:$0xff]
      %v224 = vld [vmem:[%s202 + $0x48] sm:$0xff]
      %v225 = vld [vmem:[%s202 + $0x50] sm:$0xff]
      %v226 = vld [vmem:[%s202 + $0x58] sm:$0xff]
      %v227 = vld [vmem:[%s202 + $0x60] sm:$0xff]
      %v228 = vld [vmem:[%s202 + $0x68] sm:$0xff]
      %v229 = vld [vmem:[%s202 + $0x70] sm:$0xff]
      %v230 = vld [vmem:[%s202 + $0x78] sm:$0xff]
      %v231 = vld [vmem:[%s202 + $0x80] sm:$0xff]
      %v232 = vld [vmem:[%s202 + $0x88] sm:$0xff]
      %v233 = vld [vmem:[%s202 + $0x90] sm:$0xff]
      %v234 = vld [vmem:[%s202 + $0x98] sm:$0xff]
      %v235 = vld [vmem:[%s202 + $0xa0] sm:$0xff]
      %v236 = vld [vmem:[%s202 + $0xa8] sm:$0xff]
      %v237 = vld [vmem:[%s202 + $0xb0] sm:$0xff]
      %v238 = vld [vmem:[%s202 + $0xb8] sm:$0xff]
      %v239 = vld [vmem:[%s202 + $0xc0] sm:$0xff]
      %v240 = vld [vmem:[%s202 + $0xc8] sm:$0xff]
      %v241 = vld [vmem:[%s202 + $0xd0] sm:$0xff]
      %v242 = vld [vmem:[%s202 + $0xd8] sm:$0xff]
      %v243 = vld [vmem:[%s202 + $0xe0] sm:$0xff]
      %v244 = vld [vmem:[%s202 + $0xe8] sm:$0xff]
      %v245 = vld [vmem:[%s202 + $0xf0] sm:$0xff]
      %v246 = vld [vmem:[%s202 + $0xf8] sm:$0xff]
      %v247 = vld [vmem:[%s0] sm:$0x1]
      %v249 = vperm.slane %v247, 0
      %v251 = vmul.f32 %v215, %v249
      %v252 = vmul.f32 %v216, %v249
      %v253 = vmul.f32 %v217, %v249
      %v254 = vmul.f32 %v218, %v249
      %v255 = vmul.f32 %v219, %v249
      %v256 = vmul.f32 %v220, %v249
      %v257 = vmul.f32 %v221, %v249
      %v258 = vmul.f32 %v222, %v249
      %v259 = vmul.f32 %v223, %v249
      %v260 = vmul.f32 %v224, %v249
      %v261 = vmul.f32 %v225, %v249
      %v262 = vmul.f32 %v226, %v249
      %v263 = vmul.f32 %v227, %v249
      %v264 = vmul.f32 %v228, %v249
      %v265 = vmul.f32 %v229, %v249
      %v266 = vmul.f32 %v230, %v249
      %v267 = vmul.f32 %v231, %v249
      %v268 = vmul.f32 %v232, %v249
      %v269 = vmul.f32 %v233, %v249
      %v270 = vmul.f32 %v234, %v249
      %v271 = vmul.f32 %v235, %v249
      %v272 = vmul.f32 %v236, %v249
      %v273 = vmul.f32 %v237, %v249
      %v274 = vmul.f32 %v238, %v249
      %v275 = vmul.f32 %v239, %v249
      %v276 = vmul.f32 %v240, %v249
      %v277 = vmul.f32 %v241, %v249
      %v278 = vmul.f32 %v242, %v249
      %v279 = vmul.f32 %v243, %v249
      %v280 = vmul.f32 %v244, %v249
      %v281 = vmul.f32 %v245, %v249
      %v282 = vmul.f32 %v246, %v249
      %v283 = vld [vmem:[%s1] sm:$0x1]
      %v285 = vperm.slane %v283, 0
      %v287 = vadd.f32 %v251, %v285
      %v288 = vadd.f32 %v252, %v285
      %v289 = vadd.f32 %v253, %v285
      %v290 = vadd.f32 %v254, %v285
      %v291 = vadd.f32 %v255, %v285
      %v292 = vadd.f32 %v256, %v285
      %v293 = vadd.f32 %v257, %v285
      %v294 = vadd.f32 %v258, %v285
      %v295 = vadd.f32 %v259, %v285
      %v296 = vadd.f32 %v260, %v285
      %v297 = vadd.f32 %v261, %v285
      %v298 = vadd.f32 %v262, %v285
      %v299 = vadd.f32 %v263, %v285
      %v300 = vadd.f32 %v264, %v285
      %v301 = vadd.f32 %v265, %v285
      %v302 = vadd.f32 %v266, %v285
      %v303 = vadd.f32 %v267, %v285
      %v304 = vadd.f32 %v268, %v285
      %v305 = vadd.f32 %v269, %v285
      %v306 = vadd.f32 %v270, %v285
      %v307 = vadd.f32 %v271, %v285
      %v308 = vadd.f32 %v272, %v285
      %v309 = vadd.f32 %v273, %v285
      %v310 = vadd.f32 %v274, %v285
      %v311 = vadd.f32 %v275, %v285
      %v312 = vadd.f32 %v276, %v285
      %v313 = vadd.f32 %v277, %v285
      %v314 = vadd.f32 %v278, %v285
      %v315 = vadd.f32 %v279, %v285
      %v316 = vadd.f32 %v280, %v285
      %v317 = vadd.f32 %v281, %v285
      %v318 = vadd.f32 %v282, %v285
      %v319 = vmax.f32 %v287, 0.0
      %v320 = vmax.f32 %v288, 0.0
      %v321 = vmax.f32 %v289, 0.0
      %v322 = vmax.f32 %v290, 0.0
      %v323 = vmax.f32 %v291, 0.0
      %v324 = vmax.f32 %v292, 0.0
      %v325 = vmax.f32 %v293, 0.0
      %v326 = vmax.f32 %v294, 0.0
      %v327 = vmax.f32 %v295, 0.0
      %v328 = vmax.f32 %v296, 0.0
      %v329 = vmax.f32 %v297, 0.0
      %v330 = vmax.f32 %v298, 0.0
      %v331 = vmax.f32 %v299, 0.0
      %v332 = vmax.f32 %v300, 0.0
      %v333 = vmax.f32 %v301, 0.0
      %v334 = vmax.f32 %v302, 0.0
      %v335 = vmax.f32 %v303, 0.0
      %v336 = vmax.f32 %v304, 0.0
      %v337 = vmax.f32 %v305, 0.0
      %v338 = vmax.f32 %v306, 0.0
      %v339 = vmax.f32 %v307, 0.0
      %v340 = vmax.f32 %v308, 0.0
      %v341 = vmax.f32 %v309, 0.0
      %v342 = vmax.f32 %v310, 0.0
      %v343 = vmax.f32 %v311, 0.0
      %v344 = vmax.f32 %v312, 0.0
      %v345 = vmax.f32 %v313, 0.0
      %v346 = vmax.f32 %v314, 0.0
      %v347 = vmax.f32 %v315, 0.0
      %v348 = vmax.f32 %v316, 0.0
      %v349 = vmax.f32 %v317, 0.0
      %v350 = vmax.f32 %v318, 0.0
      %351 = vst [vmem:[%s213] sm:$0xff] %v319
      %352 = vst [vmem:[%s213 + $0x8] sm:$0xff] %v320
      %353 = vst [vmem:[%s213 + $0x10] sm:$0xff] %v321
      %354 = vst [vmem:[%s213 + $0x18] sm:$0xff] %v322
      %355 = vst [vmem:[%s213 + $0x20] sm:$0xff] %v323
      %356 = vst [vmem:[%s213 + $0x28] sm:$0xff] %v324
      %357 = vst [vmem:[%s213 + $0x30] sm:$0xff] %v325
      %358 = vst [vmem:[%s213 + $0x38] sm:$0xff] %v326
      %359 = vst [vmem:[%s213 + $0x40] sm:$0xff] %v327
      %360 = vst [vmem:[%s213 + $0x48] sm:$0xff] %v328
      %361 = vst [vmem:[%s213 + $0x50] sm:$0xff] %v329
      %362 = vst [vmem:[%s213 + $0x58] sm:$0xff] %v330
      %363 = vst [vmem:[%s213 + $0x60] sm:$0xff] %v331
      %364 = vst [vmem:[%s213 + $0x68] sm:$0xff] %v332
      %365 = vst [vmem:[%s213 + $0x70] sm:$0xff] %v333
      %366 = vst [vmem:[%s213 + $0x78] sm:$0xff] %v334
      %367 = vst [vmem:[%s213 + $0x80] sm:$0xff] %v335
      %368 = vst [vmem:[%s213 + $0x88] sm:$0xff] %v336
      %369 = vst [vmem:[%s213 + $0x90] sm:$0xff] %v337
      %370 = vst [vmem:[%s213 + $0x98] sm:$0xff] %v338
      %371 = vst [vmem:[%s213 + $0xa0] sm:$0xff] %v339
      %372 = vst [vmem:[%s213 + $0xa8] sm:$0xff] %v340
      %373 = vst [vmem:[%s213 + $0xb0] sm:$0xff] %v341
      %374 = vst [vmem:[%s213 + $0xb8] sm:$0xff] %v342
      %375 = vst [vmem:[%s213 + $0xc0] sm:$0xff] %v343
      %376 = vst [vmem:[%s213 + $0xc8] sm:$0xff] %v344
      %377 = vst [vmem:[%s213 + $0xd0] sm:$0xff] %v345
      %378 = vst [vmem:[%s213 + $0xd8] sm:$0xff] %v346
      %379 = vst [vmem:[%s213 + $0xe0] sm:$0xff] %v347
      %380 = vst [vmem:[%s213 + $0xe8] sm:$0xff] %v348
      %381 = vst [vmem:[%s213 + $0xf0] sm:$0xff] %v349
      %382 = vst [vmem:[%s213 + $0xf8] sm:$0xff] %v350
      %s383 = smul.u32 16, %s19
      %p384 = scmp.lt.s32.totalorder %s18, 1
      %s385 = scalar_select %p384, %s18, 1
      %p386 = scmp.lt.s32.totalorder %s383, 15
      %s387 = scalar_select %p386, %s383, 15
      %s388 = smul.addr %s387, 2
      %s389 = smul.addr %s385, 32
      %s390 = sadd.s32 %s388, %s389
      %s391 = smul.addr %s390, 8
      %s392 = scalar_lea.vmem %s3, %s391
      // Predicated region
      $region33: #{double_conv_forward.5} parent=31 // pred_check
        %p393 = pneg %p116
      $region34: #{double_conv_forward.5} parent=31 // pred_check_branch
        %395 = sbr.rel (%p393) target = $region36
      $region35: #{double_conv_forward.5} parent=31 // pred_region
        %s396 = smul.u32 16, %s19
      $region36: #{double_conv_forward.5} parent=31 // pred_fallthru
        _
    $region32: #{double_conv_forward.5} parent=5 // pred_fallthru
      _
    %p397 = scmp.le.s32.totalorder 2, %s9
    // Predicated region
    $region37: #{double_conv_forward.5} parent=5 // pred_check
      %p398 = pneg %p397
    $region38: #{double_conv_forward.5} parent=5 // pred_check_branch
      %400 = sbr.rel (%p398) target = $region40
    $region39: #{double_conv_forward.5} parent=5 // pred_region
      %s401 = ssub.s32 %s9, 2
      // Predicated region
      $region41: #{double_conv_forward.5} parent=39 // pred_check
        %p402 = pneg %p122
      $region42: #{double_conv_forward.5} parent=39 // pred_check_branch
        %404 = sbr.rel (%p402) target = $region44
      $region43: #{double_conv_forward.5} parent=39 // pred_region
        %s405 = smul.u32 16, %s21
        %p406 = scmp.lt.s32.totalorder %s20, 1
        %s407 = scalar_select %p406, %s20, 1
        %p408 = scmp.lt.s32.totalorder %s405, 15
        %s409 = scalar_select %p408, %s405, 15
        %s410 = smul.addr %s409, 2
        %s411 = smul.addr %s407, 32
        %s412 = sadd.s32 %s410, %s411
        %s413 = smul.addr %s412, 8
        %s414 = scalar_lea.vmem %s3, %s413
      $region44: #{double_conv_forward.5} parent=39 // pred_fallthru
        _
    $region40: #{double_conv_forward.5} parent=5 // pred_fallthru
      _
  $region6: #{double_conv_forward.5} parent=0 // loop_footer
    %s13 = sadd.s32 1, %s9
  $region7: #{double_conv_forward.5} parent=0 // loop_footer_branch
    %8 = sbr.rel target = $region3
  $region8: #{double_conv_forward.5} parent=0 // loop_exit
    _

// kernel: double_conv_forward.3
$region0: #{double_conv_forward.3}
  #allocation0 [shape = 'u32[]', space=smem, size = 0x4, offset = 0x4, fixed_abs, tag = 'smem constant byte address 0x4 - core index']
  #allocation1 [shape = 'u32[72,128]{1,0:T(1,128)}', space=vmem, size = 0x9000, scoped, tag = 'internal scratch']
  #allocation2 [shape = 'f32[18,18,128]{2,1,0:T(8,128)}', space=vmem, size = 0x36000, scoped, tag = 'scratch operand']
  #allocation3 [shape = 's32[1]{0}', space=sflag, size = 0x4, scoped, tag = 'scratch operand']
  #allocation4 [shape = 's32[]', space=sflag, size = 0x4, offset = 0, fixed_abs, tag = 'sflag constant byte address 0x0 - dummy sync flag']
  %s0 = inlined_call_operand.vmem [shape: f32[1,128], index: 0, kind: input, shape index: {}]
  %s1 = inlined_call_operand.vmem [shape: f32[1,128], index: 1, kind: input, shape index: {}]
  %s2 = inlined_call_operand.vmem [shape: f32[1152,128], index: 2, kind: input, shape index: {}]
  %s3 = inlined_call_operand.vmem [shape: f32[1,128], index: 3, kind: input, shape index: {}]
  %s4 = inlined_call_operand.vmem [shape: f32[2,18,18,128], index: 4, kind: input, shape index: {}]
  %s5 = inlined_call_operand.vmem [shape: f32[2,16,16,128], index: 5, kind: output, shape index: {0}]
  %s6 = inlined_call_operand.vmem [shape: f32[2,1,128], index: 6, kind: output, shape index: {1}]
  %s7 = inlined_call_operand.vmem [shape: f32[2,1,128], index: 7, kind: output, shape index: {2}]
  %8 = xla_tuple %s5, %s6, %s7
  %s9 = sld [smem:[#allocation0]]
  $region91: #{double_conv_forward.3} parent=0
    _
  %s11 = ssub.s32 1, %s9
  %s12 = scalar_select 0, %s11, %s9
  loop: start=0, step=1, limit=4
  $region2: #{double_conv_forward.3} parent=0 // loop_pre_header
    _
  $region3: #{double_conv_forward.3} parent=0 // loop_header
    %s14 = sphi 0, %s18
    %p15 = scmp.ge.s32.totalorder %s14, 4
    %s21 = sphi 0, %s33
    %s22 = sphi 0, %s29
    %s23 = sphi 0, %s21
    %s24 = sphi 0, %s22
    %s25 = sphi 0, %s23
    %s26 = sphi 0, %s24
    %s34 = sphi 0, %s34
    %s36 = sphi 0, %s34
    %s37 = sphi 0, %s36
    %s51 = sphi 0, %s37
    %s55 = sphi 0, %s55
    %s57 = sphi 0, %s55
    %s58 = sphi 0, %s57
    %s72 = sphi 0, %s58
    %s76 = sphi 0, %s76
    %s78 = sphi 0, %s76
    %s79 = sphi 0, %s78
    %s93 = sphi 0, %s79
    %s97 = sphi 0, %s97
    %s99 = sphi 0, %s97
    %s100 = sphi 0, %s99
    %s114 = sphi 0, %s100
    %s122 = sphi 0, %s124
    %s125 = sphi 0, %s122
    %s126 = sphi 0, %s125
    %s142 = sphi 0, %s126
    %s148 = sphi 0, %s150
    %s151 = sphi 0, %s148
    %s152 = sphi 0, %s151
    %s168 = sphi 0, %s152
    %s174 = sphi 0, %s176
    %s177 = sphi 0, %s174
    %s178 = sphi 0, %s177
    %s194 = sphi 0, %s178
  $region4: #{double_conv_forward.3} parent=0 // loop_header_branch
    %17 = sbr.rel (%p15) target = $region8
  $region5: #{double_conv_forward.3} parent=0 // loop_body
    %s19 = ssub.s32 %s14, 1
    %s20 = ssub.s32 %s14, 2
    %s27 = sadd.s32 1, %s22
    %p28 = scmp.ge.s32.totalorder %s27, 1
    %s29 = scalar_select %p28, 0, %s27
    %s30 = sadd.s32 1, %s21
    %s31 = scalar_select %p28, %s30, %s21
    %p32 = scmp.ge.s32.totalorder %s31, 2
    %s33 = scalar_select %p32, 0, %s31
    %s35 = sadd.s32 %s34, 1
    %p38 = scmp.eq.s32.totalorder %s14, 1
    %p39 = scmp.ne.s32.totalorder %s34, %s36
    %p40 = scmp.eq.s32.totalorder %s14, 0
    %p41 = por %p39, %p40
    %p42 = scmp.ne.s32.totalorder %s34, %s36
    %p43 = scmp.eq.s32.totalorder %s19, 1
    %p44 = por %p42, %p43
    %p45 = scmp.ne.s32.totalorder %s36, %s37
    %p46 = scmp.eq.s32.totalorder %s19, 0
    %p47 = por %p45, %p46
    %p48 = scmp.ne.s32.totalorder %s36, %s37
    %p49 = scmp.eq.s32.totalorder %s20, 1
    %p50 = por %p48, %p49
    %p52 = scmp.ne.s32.totalorder %s37, %s51
    %p53 = scmp.eq.s32.totalorder %s20, 0
    %p54 = por %p52, %p53
    %s56 = sadd.s32 %s55, 1
    %p59 = scmp.eq.s32.totalorder %s14, 1
    %p60 = scmp.ne.s32.totalorder %s55, %s57
    %p61 = scmp.eq.s32.totalorder %s14, 0
    %p62 = por %p60, %p61
    %p63 = scmp.ne.s32.totalorder %s55, %s57
    %p64 = scmp.eq.s32.totalorder %s19, 1
    %p65 = por %p63, %p64
    %p66 = scmp.ne.s32.totalorder %s57, %s58
    %p67 = scmp.eq.s32.totalorder %s19, 0
    %p68 = por %p66, %p67
    %p69 = scmp.ne.s32.totalorder %s57, %s58
    %p70 = scmp.eq.s32.totalorder %s20, 1
    %p71 = por %p69, %p70
    %p73 = scmp.ne.s32.totalorder %s58, %s72
    %p74 = scmp.eq.s32.totalorder %s20, 0
    %p75 = por %p73, %p74
    %s77 = sadd.s32 %s76, 1
    %p80 = scmp.eq.s32.totalorder %s14, 1
    %p81 = scmp.ne.s32.totalorder %s76, %s78
    %p82 = scmp.eq.s32.totalorder %s14, 0
    %p83 = por %p81, %p82
    %p84 = scmp.ne.s32.totalorder %s76, %s78
    %p85 = scmp.eq.s32.totalorder %s19, 1
    %p86 = por %p84, %p85
    %p87 = scmp.ne.s32.totalorder %s78, %s79
    %p88 = scmp.eq.s32.totalorder %s19, 0
    %p89 = por %p87, %p88
    %p90 = scmp.ne.s32.totalorder %s78, %s79
    %p91 = scmp.eq.s32.totalorder %s20, 1
    %p92 = por %p90, %p91
    %p94 = scmp.ne.s32.totalorder %s79, %s93
    %p95 = scmp.eq.s32.totalorder %s20, 0
    %p96 = por %p94, %p95
    %s98 = sadd.s32 %s97, 1
    %p101 = scmp.eq.s32.totalorder %s14, 1
    %p102 = scmp.ne.s32.totalorder %s97, %s99
    %p103 = scmp.eq.s32.totalorder %s14, 0
    %p104 = por %p102, %p103
    %p105 = scmp.ne.s32.totalorder %s97, %s99
    %p106 = scmp.eq.s32.totalorder %s19, 1
    %p107 = por %p105, %p106
    %p108 = scmp.ne.s32.totalorder %s99, %s100
    %p109 = scmp.eq.s32.totalorder %s19, 0
    %p110 = por %p108, %p109
    %p111 = scmp.ne.s32.totalorder %s99, %s100
    %p112 = scmp.eq.s32.totalorder %s20, 1
    %p113 = por %p111, %p112
    %p115 = scmp.ne.s32.totalorder %s100, %s114
    %p116 = scmp.eq.s32.totalorder %s20, 0
    %p117 = por %p115, %p116
    %s118 = ssub.s32 %s21, %s33
    %s119 = ssub.s32 %s22, %s29
    %s120 = sor.u32 %s118, %s119
    %p121 = scmp.eq.s32.totalorder %s120, 0
    %s123 = sadd.s32 %s122, 1
    %s124 = scalar_select %p121, %s122, %s123
    %p127 = pneg %p121
    %p128 = scmp.eq.s32.totalorder %s14, 1
    %p129 = por %p127, %p128
    %p130 = scmp.ne.s32.totalorder %s122, %s125
    %p131 = scmp.eq.s32.totalorder %s14, 0
    %p132 = por %p130, %p131
    %p133 = scmp.ne.s32.totalorder %s122, %s125
    %p134 = scmp.eq.s32.totalorder %s19, 1
    %p135 = por %p133, %p134
    %p136 = scmp.ne.s32.totalorder %s125, %s126
    %p137 = scmp.eq.s32.totalorder %s19, 0
    %p138 = por %p136, %p137
    %p139 = scmp.ne.s32.totalorder %s125, %s126
    %p140 = scmp.eq.s32.totalorder %s20, 1
    %p141 = por %p139, %p140
    %p143 = scmp.ne.s32.totalorder %s126, %s142
    %p144 = scmp.eq.s32.totalorder %s20, 0
    %p145 = por %p143, %p144
    %s146 = ssub.s32 %s21, %s33
    %p147 = scmp.eq.s32.totalorder %s146, 0
    %s149 = sadd.s32 %s148, 1
    %s150 = scalar_select %p147, %s148, %s149
    %p153 = pneg %p147
    %p154 = scmp.eq.s32.totalorder %s14, 1
    %p155 = por %p153, %p154
    %p156 = scmp.ne.s32.totalorder %s148, %s151
    %p157 = scmp.eq.s32.totalorder %s14, 0
    %p158 = por %p156, %p157
    %p159 = scmp.ne.s32.totalorder %s148, %s151
    %p160 = scmp.eq.s32.totalorder %s19, 1
    %p161 = por %p159, %p160
    %p162 = scmp.ne.s32.totalorder %s151, %s152
    %p163 = scmp.eq.s32.totalorder %s19, 0
    %p164 = por %p162, %p163
    %p165 = scmp.ne.s32.totalorder %s151, %s152
    %p166 = scmp.eq.s32.totalorder %s20, 1
    %p167 = por %p165, %p166
    %p169 = scmp.ne.s32.totalorder %s152, %s168
    %p170 = scmp.eq.s32.totalorder %s20, 0
    %p171 = por %p169, %p170
    %s172 = ssub.s32 %s21, %s33
    %p173 = scmp.eq.s32.totalorder %s172, 0
    %s175 = sadd.s32 %s174, 1
    %s176 = scalar_select %p173, %s174, %s175
    %p179 = pneg %p173
    %p180 = scmp.eq.s32.totalorder %s14, 1
    %p181 = por %p179, %p180
    %p182 = scmp.ne.s32.totalorder %s174, %s177
    %p183 = scmp.eq.s32.totalorder %s14, 0
    %p184 = por %p182, %p183
    %p185 = scmp.ne.s32.totalorder %s174, %s177
    %p186 = scmp.eq.s32.totalorder %s19, 1
    %p187 = por %p185, %p186
    %p188 = scmp.ne.s32.totalorder %s177, %s178
    %p189 = scmp.eq.s32.totalorder %s19, 0
    %p190 = por %p188, %p189
    %p191 = scmp.ne.s32.totalorder %s177, %s178
    %p192 = scmp.eq.s32.totalorder %s20, 1
    %p193 = por %p191, %p192
    %p195 = scmp.ne.s32.totalorder %s178, %s194
    %p196 = scmp.eq.s32.totalorder %s20, 0
    %p197 = por %p195, %p196
    %p198 = scmp.le.s32.totalorder 1, %s14
    %p199 = scmp.lt.s32.totalorder %s14, 3
    %p200 = pnand %p198, %p199
    %p201 = pneg %p200
    // Predicated region
    $region9: #{double_conv_forward.3} parent=5 // pred_check
      _
    $region10: #{double_conv_forward.3} parent=5 // pred_check_branch
      %203 = sbr.rel (%p200) target = $region12
    $region11: #{double_conv_forward.3} parent=5 // pred_region
      %s204 = ssub.s32 %s14, 1
      // Predicated region
      $region13: #{double_conv_forward.3} parent=11 // pred_check
        %p205 = pneg %p47
      $region14: #{double_conv_forward.3} parent=11 // pred_check_branch
        %207 = sbr.rel (%p205) target = $region16
      $region15: #{double_conv_forward.3} parent=11 // pred_region
        _
      $region16: #{double_conv_forward.3} parent=11 // pred_fallthru
        _
      // Predicated region
      $region17: #{double_conv_forward.3} parent=11 // pred_check
        %p208 = pneg %p68
      $region18: #{double_conv_forward.3} parent=11 // pred_check_branch
        %210 = sbr.rel (%p208) target = $region20
      $region19: #{double_conv_forward.3} parent=11 // pred_region
        _
      $region20: #{double_conv_forward.3} parent=11 // pred_fallthru
        _
      // Predicated region
      $region21: #{double_conv_forward.3} parent=11 // pred_check
        %p211 = pneg %p89
      $region22: #{double_conv_forward.3} parent=11 // pred_check_branch
        %213 = sbr.rel (%p211) target = $region24
      $region23: #{double_conv_forward.3} parent=11 // pred_region
        _
      $region24: #{double_conv_forward.3} parent=11 // pred_fallthru
        _
      // Predicated region
      $region25: #{double_conv_forward.3} parent=11 // pred_check
        %p214 = pneg %p110
      $region26: #{double_conv_forward.3} parent=11 // pred_check_branch
        %216 = sbr.rel (%p214) target = $region28
      $region27: #{double_conv_forward.3} parent=11 // pred_region
        _
      $region28: #{double_conv_forward.3} parent=11 // pred_fallthru
        _
    $region12: #{double_conv_forward.3} parent=5 // pred_fallthru
      _
    %p217 = scmp.lt.s32.totalorder %s14, 2
    // Predicated region
    $region29: #{double_conv_forward.3} parent=5 // pred_check
      %p218 = pneg %p217
    $region30: #{double_conv_forward.3} parent=5 // pred_check_branch
      %220 = sbr.rel (%p218) target = $region32
    $region31: #{double_conv_forward.3} parent=5 // pred_region
      _
    $region32: #{double_conv_forward.3} parent=5 // pred_fallthru
      _
    %p221 = scmp.le.s32.totalorder 1, %s14
    %p222 = scmp.lt.s32.totalorder %s14, 3
    %p223 = pnand %p221, %p222
    %p224 = pneg %p223
    // Predicated region
    $region33: #{double_conv_forward.3} parent=5 // pred_check
      _
    $region34: #{double_conv_forward.3} parent=5 // pred_check_branch
      %226 = sbr.rel (%p223) target = $region36
    $region35: #{double_conv_forward.3} parent=5 // pred_region
      %s227 = ssub.s32 %s14, 1
      %p228 = pneg %p47
      %p229 = pneg %p44
      %p230 = pneg %p68
      %p231 = pneg %p65
      %p232 = pneg %p89
      %p233 = pneg %p86
      %p234 = pneg %p110
      %p235 = pneg %p107
      %p236 = pneg %p138
      %p237 = pneg %p135
      %s238 = smul.u32 16, %s24
      %p239 = scmp.lt.s32.totalorder %s23, 1
      %s240 = scalar_select %p239, %s23, 1
      %p241 = scmp.lt.s32.totalorder %s238, 15
      %s242 = scalar_select %p241, %s238, 15
      %s243 = smul.addr %s242, 2
      %s244 = smul.addr %s240, 32
      %s245 = sadd.s32 %s243, %s244
      %s246 = smul.addr %s245, 8
      %s247 = scalar_lea.vmem %s5, %s246
      %p248 = pneg %p164
      %p249 = pneg %p161
      %p250 = scmp.lt.s32.totalorder %s23, 1
      %s251 = scalar_select %p250, %s23, 1
      %s252 = scalar_lea.vmem %s6, %s251
      %p253 = pneg %p190
      %p254 = pneg %p187
      %p255 = scmp.lt.s32.totalorder %s23, 1
      %s256 = scalar_select %p255, %s23, 1
      %s257 = scalar_lea.vmem %s7, %s256
      %s258 = smul.u32 16, %s24
      %p259 = scmp.lt.s32.totalorder %s23, 1
      %s260 = scalar_select %p259, %s23, 1
      %p261 = scmp.lt.s32.totalorder %s258, 15
      %s262 = scalar_select %p261, %s258, 15
      %s263 = smul.addr %s262, 2
      %s264 = smul.addr %s260, 32
      %s265 = sadd.s32 %s263, %s264
      %s266 = smul.addr %s265, 8
      %s267 = scalar_lea.vmem %s5, %s266
      %s268 = smul.u32 16, %s24
      %p269 = scmp.lt.s32.totalorder %s23, 1
      %s270 = scalar_select %p269, %s23, 1
      %s271 = scalar_lea.vmem %s6, %s270
      %p272 = scmp.lt.s32.totalorder %s23, 1
      %s273 = scalar_select %p272, %s23, 1
      %s274 = scalar_lea.vmem %s7, %s273
      %s275 = smul.u32 %s24, 16
      %s276 = smul.u32 %s275, 24
      %s277 = smul.u32 %s23, 432
      %s278 = sadd.s32 %s276, %s277
      %s279 = scalar_lea.vmem %s4, %s278
      // Predicated region
      $region37: #{double_conv_forward.3} parent=35 // pred_check
        _
      $region38: #{double_conv_forward.3} parent=35 // pred_check_branch
        %281 = sbr.rel (0) target = $region40
      $region39: #{double_conv_forward.3} parent=35 // pred_region
        %s282 = scalar_lea.vmem %s279, 16
        %s283 = scalar_lea.vmem [#allocation2], 16
        loop: start=0, step=1, limit=1
        $region41: #{double_conv_forward.3} parent=39 // loop_pre_header
          _
        $region42: #{double_conv_forward.3} parent=39 // loop_header
          %s285 = sphi 0, %s289
          %p286 = scmp.ge.s32.totalorder %s285, 1
          %s290 = sphi %s279, %s279
          %s291 = sphi [#allocation2], [#allocation2]
        $region43: #{double_conv_forward.3} parent=39 // loop_header_branch
          %288 = sbr.rel (%p286) target = $region47
        $region44: #{double_conv_forward.3} parent=39 // loop_body
          %v292 = vld [vmem:[%s290] sm:$0xff]
          %293 = vst [vmem:[%s291] sm:$0xff] %v292
          %v294 = vld [vmem:[%s290 + $0x8] sm:$0xff]
          %295 = vst [vmem:[%s291 + $0x8] sm:$0xff] %v294
          %v296 = vld [vmem:[%s290 + $0x18] sm:$0xff]
          %297 = vst [vmem:[%s291 + $0x18] sm:$0xff] %v296
          %v298 = vld [vmem:[%s290 + $0x20] sm:$0xff]
          %299 = vst [vmem:[%s291 + $0x20] sm:$0xff] %v298
          %v300 = vld [vmem:[%s290 + $0x30] sm:$0xff]
          %301 = vst [vmem:[%s291 + $0x30] sm:$0xff] %v300
          %v302 = vld [vmem:[%s290 + $0x38] sm:$0xff]
          %303 = vst [vmem:[%s291 + $0x38] sm:$0xff] %v302
          %v304 = vld [vmem:[%s290 + $0x48] sm:$0xff]
          %305 = vst [vmem:[%s291 + $0x48] sm:$0xff] %v304
          %v306 = vld [vmem:[%s290 + $0x50] sm:$0xff]
          %307 = vst [vmem:[%s291 + $0x50] sm:$0xff] %v306
          %v308 = vld [vmem:[%s290 + $0x60] sm:$0xff]
          %309 = vst [vmem:[%s291 + $0x60] sm:$0xff] %v308
          %v310 = vld [vmem:[%s290 + $0x68] sm:$0xff]
          %311 = vst [vmem:[%s291 + $0x68] sm:$0xff] %v310
          %v312 = vld [vmem:[%s290 + $0x78] sm:$0xff]
          %313 = vst [vmem:[%s291 + $0x78] sm:$0xff] %v312
          %v314 = vld [vmem:[%s290 + $0x80] sm:$0xff]
          %315 = vst [vmem:[%s291 + $0x80] sm:$0xff] %v314
          %v316 = vld [vmem:[%s290 + $0x90] sm:$0xff]
          %317 = vst [vmem:[%s291 + $0x90] sm:$0xff] %v316
          %v318 = vld [vmem:[%s290 + $0x98] sm:$0xff]
          %319 = vst [vmem:[%s291 + $0x98] sm:$0xff] %v318
          %v320 = vld [vmem:[%s290 + $0xa8] sm:$0xff]
          %321 = vst [vmem:[%s291 + $0xa8] sm:$0xff] %v320
          %v322 = vld [vmem:[%s290 + $0xb0] sm:$0xff]
          %323 = vst [vmem:[%s291 + $0xb0] sm:$0xff] %v322
          %v324 = vld [vmem:[%s290 + $0xc0] sm:$0xff]
          %325 = vst [vmem:[%s291 + $0xc0] sm:$0xff] %v324
          %v326 = vld [vmem:[%s290 + $0xc8] sm:$0xff]
          %327 = vst [vmem:[%s291 + $0xc8] sm:$0xff] %v326
          %v328 = vld [vmem:[%s290 + $0xd8] sm:$0xff]
          %329 = vst [vmem:[%s291 + $0xd8] sm:$0xff] %v328
          %v330 = vld [vmem:[%s290 + $0xe0] sm:$0xff]
          %331 = vst [vmem:[%s291 + $0xe0] sm:$0xff] %v330
          %v332 = vld [vmem:[%s290 + $0xf0] sm:$0xff]
          %333 = vst [vmem:[%s291 + $0xf0] sm:$0xff] %v332
          %v334 = vld [vmem:[%s290 + $0xf8] sm:$0xff]
          %335 = vst [vmem:[%s291 + $0xf8] sm:$0xff] %v334
          %v336 = vld [vmem:[%s290 + $0x108] sm:$0xff]
          %337 = vst [vmem:[%s291 + $0x108] sm:$0xff] %v336
          %v338 = vld [vmem:[%s290 + $0x110] sm:$0xff]
          %339 = vst [vmem:[%s291 + $0x110] sm:$0xff] %v338
          %v340 = vld [vmem:[%s290 + $0x120] sm:$0xff]
          %341 = vst [vmem:[%s291 + $0x120] sm:$0xff] %v340
          %v342 = vld [vmem:[%s290 + $0x128] sm:$0xff]
          %343 = vst [vmem:[%s291 + $0x128] sm:$0xff] %v342
          %v344 = vld [vmem:[%s290 + $0x138] sm:$0xff]
          %345 = vst [vmem:[%s291 + $0x138] sm:$0xff] %v344
          %v346 = vld [vmem:[%s290 + $0x140] sm:$0xff]
          %347 = vst [vmem:[%s291 + $0x140] sm:$0xff] %v346
          %v348 = vld [vmem:[%s290 + $0x150] sm:$0xff]
          %349 = vst [vmem:[%s291 + $0x150] sm:$0xff] %v348
          %v350 = vld [vmem:[%s290 + $0x158] sm:$0xff]
          %351 = vst [vmem:[%s291 + $0x158] sm:$0xff] %v350
          %v352 = vld [vmem:[%s290 + $0x168] sm:$0xff]
          %353 = vst [vmem:[%s291 + $0x168] sm:$0xff] %v352
          %v354 = vld [vmem:[%s290 + $0x170] sm:$0xff]
          %355 = vst [vmem:[%s291 + $0x170] sm:$0xff] %v354
          %v356 = vld [vmem:[%s290 + $0x180] sm:$0xff]
          %357 = vst [vmem:[%s291 + $0x180] sm:$0xff] %v356
          %v358 = vld [vmem:[%s290 + $0x188] sm:$0xff]
          %359 = vst [vmem:[%s291 + $0x188] sm:$0xff] %v358
          %v360 = vld [vmem:[%s290 + $0x198] sm:$0xff]
          %361 = vst [vmem:[%s291 + $0x198] sm:$0xff] %v360
          %v362 = vld [vmem:[%s290 + $0x1a0] sm:$0xff]
          %363 = vst [vmem:[%s291 + $0x1a0] sm:$0xff] %v362
        $region45: #{double_conv_forward.3} parent=39 // loop_footer
          %s289 = sadd.s32 1, %s285
        $region46: #{double_conv_forward.3} parent=39 // loop_footer_branch
          %284 = sbr.rel target = $region42
        $region47: #{double_conv_forward.3} parent=39 // loop_exit
          _
        %s365 = ssub.s32 4, 1
        loop: start=0, step=1, limit=1
        $region48: #{double_conv_forward.3} parent=39 // loop_pre_header
          _
        $region49: #{double_conv_forward.3} parent=39 // loop_header
          %s367 = sphi 0, %s371
          %p368 = scmp.ge.s32.totalorder %s367, 1
          %s372 = sphi %s282, %s282
          %s373 = sphi %s283, %s283
        $region50: #{double_conv_forward.3} parent=39 // loop_header_branch
          %370 = sbr.rel (%p368) target = $region54
        $region51: #{double_conv_forward.3} parent=39 // loop_body
          %v374 = vld [vmem:[%s372] sm:%s365]
          %375 = vst [vmem:[%s373] sm:%s365] %v374
          %v376 = vld [vmem:[%s372 + $0x18] sm:%s365]
          %377 = vst [vmem:[%s373 + $0x18] sm:%s365] %v376
          %v378 = vld [vmem:[%s372 + $0x30] sm:%s365]
          %379 = vst [vmem:[%s373 + $0x30] sm:%s365] %v378
          %v380 = vld [vmem:[%s372 + $0x48] sm:%s365]
          %381 = vst [vmem:[%s373 + $0x48] sm:%s365] %v380
          %v382 = vld [vmem:[%s372 + $0x60] sm:%s365]
          %383 = vst [vmem:[%s373 + $0x60] sm:%s365] %v382
          %v384 = vld [vmem:[%s372 + $0x78] sm:%s365]
          %385 = vst [vmem:[%s373 + $0x78] sm:%s365] %v384
          %v386 = vld [vmem:[%s372 + $0x90] sm:%s365]
          %387 = vst [vmem:[%s373 + $0x90] sm:%s365] %v386
          %v388 = vld [vmem:[%s372 + $0xa8] sm:%s365]
          %389 = vst [vmem:[%s373 + $0xa8] sm:%s365] %v388
          %v390 = vld [vmem:[%s372 + $0xc0] sm:%s365]
          %391 = vst [vmem:[%s373 + $0xc0] sm:%s365] %v390
          %v392 = vld [vmem:[%s372 + $0xd8] sm:%s365]
          %393 = vst [vmem:[%s373 + $0xd8] sm:%s365] %v392
          %v394 = vld [vmem:[%s372 + $0xf0] sm:%s365]
          %395 = vst [vmem:[%s373 + $0xf0] sm:%s365] %v394
          %v396 = vld [vmem:[%s372 + $0x108] sm:%s365]
          %397 = vst [vmem:[%s373 + $0x108] sm:%s365] %v396
          %v398 = vld [vmem:[%s372 + $0x120] sm:%s365]
          %399 = vst [vmem:[%s373 + $0x120] sm:%s365] %v398
          %v400 = vld [vmem:[%s372 + $0x138] sm:%s365]
          %401 = vst [vmem:[%s373 + $0x138] sm:%s365] %v400
          %v402 = vld [vmem:[%s372 + $0x150] sm:%s365]
          %403 = vst [vmem:[%s373 + $0x150] sm:%s365] %v402
          %v404 = vld [vmem:[%s372 + $0x168] sm:%s365]
          %405 = vst [vmem:[%s373 + $0x168] sm:%s365] %v404
          %v406 = vld [vmem:[%s372 + $0x180] sm:%s365]
          %407 = vst [vmem:[%s373 + $0x180] sm:%s365] %v406
          %v408 = vld [vmem:[%s372 + $0x198] sm:%s365]
          %409 = vst [vmem:[%s373 + $0x198] sm:%s365] %v408
        $region52: #{double_conv_forward.3} parent=39 // loop_footer
          %s371 = sadd.s32 1, %s367
        $region53: #{double_conv_forward.3} parent=39 // loop_footer_branch
          %366 = sbr.rel target = $region49
        $region54: #{double_conv_forward.3} parent=39 // loop_exit
          _
      $region40: #{double_conv_forward.3} parent=35 // pred_fallthru
        _
      // Predicated region
      $region55: #{double_conv_forward.3} parent=35 // pred_check
        _
      $region56: #{double_conv_forward.3} parent=35 // pred_check_branch
        %412 = sbr.rel (0) target = $region58
      $region57: #{double_conv_forward.3} parent=35 // pred_region
        %413 = vsyncadd [#allocation3], 5184
      $region58: #{double_conv_forward.3} parent=35 // pred_fallthru
        _
      %s414 = smul.u32 18, 18
      %s415 = smul.u32 %s414, 1
      %s416 = sshll.u32 %s415, 4
      %417 = dma.done [#allocation3], %s416
      %v418 = vld [vmem:[#allocation2] sm:$0xff]
      %v419 = vld [vmem:[#allocation2 + $0x8] sm:$0xff]
      %v420 = vld [vmem:[#allocation2 + $0x10] sm:$0x3]
      %v421 = vld [vmem:[#allocation2 + $0x18] sm:$0xff]
      %v422 = vld [vmem:[#allocation2 + $0x20] sm:$0xff]
      %v423 = vld [vmem:[#allocation2 + $0x28] sm:$0x3]
      %v424 = vld [vmem:[#allocation2 + $0x30] sm:$0xff]
      %v425 = vld [vmem:[#allocation2 + $0x38] sm:$0xff]
      %v426 = vld [vmem:[#allocation2 + $0x40] sm:$0x3]
      %v427 = vld [vmem:[#allocation2 + $0x48] sm:$0xff]
      %v428 = vld [vmem:[#allocation2 + $0x50] sm:$0xff]
      %v429 = vld [vmem:[#allocation2 + $0x58] sm:$0x3]
      %v430 = vld [vmem:[#allocation2 + $0x60] sm:$0xff]
      %v431 = vld [vmem:[#allocation2 + $0x68] sm:$0xff]
      %v432 = vld [vmem:[#allocation2 + $0x70] sm:$0x3]
      %v433 = vld [vmem:[#allocation2 + $0x78] sm:$0xff]
      %v434 = vld [vmem:[#allocation2 + $0x80] sm:$0xff]
      %v435 = vld [vmem:[#allocation2 + $0x88] sm:$0x3]
      %v436 = vld [vmem:[#allocation2 + $0x90] sm:$0xff]
      %v437 = vld [vmem:[#allocation2 + $0x98] sm:$0xff]
      %v438 = vld [vmem:[#allocation2 + $0xa0] sm:$0x3]
      %v439 = vld [vmem:[#allocation2 + $0xa8] sm:$0xff]
      %v440 = vld [vmem:[#allocation2 + $0xb0] sm:$0xff]
      %v441 = vld [vmem:[#allocation2 + $0xb8] sm:$0x3]
      %v442 = vld [vmem:[#allocation2 + $0xc0] sm:$0xff]
      %v443 = vld [vmem:[#allocation2 + $0xc8] sm:$0xff]
      %v444 = vld [vmem:[#allocation2 + $0xd0] sm:$0x3]
      %v445 = vld [vmem:[#allocation2 + $0xd8] sm:$0xff]
      %v446 = vld [vmem:[#allocation2 + $0xe0] sm:$0xff]
      %v447 = vld [vmem:[#allocation2 + $0xe8] sm:$0x3]
      %v448 = vld [vmem:[#allocation2 + $0xf0] sm:$0xff]
      %v449 = vld [vmem:[#allocation2 + $0xf8] sm:$0xff]
      %v450 = vld [vmem:[#allocation2 + $0x100] sm:$0x3]
      %v451 = vld [vmem:[#allocation2 + $0x108] sm:$0xff]
      %v452 = vld [vmem:[#allocation2 + $0x110] sm:$0xff]
      %v453 = vld [vmem:[#allocation2 + $0x118] sm:$0x3]
      %v454 = vld [vmem:[#allocation2 + $0x120] sm:$0xff]
      %v455 = vld [vmem:[#allocation2 + $0x128] sm:$0xff]
      %v456 = vld [vmem:[#allocation2 + $0x130] sm:$0x3]
      %v457 = vld [vmem:[#allocation2 + $0x138] sm:$0xff]
      %v458 = vld [vmem:[#allocation2 + $0x140] sm:$0xff]
      %v459 = vld [vmem:[#allocation2 + $0x148] sm:$0x3]
      %v460 = vld [vmem:[#allocation2 + $0x150] sm:$0xff]
      %v461 = vld [vmem:[#allocation2 + $0x158] sm:$0xff]
      %v462 = vld [vmem:[#allocation2 + $0x160] sm:$0x3]
      %v463 = vld [vmem:[#allocation2 + $0x168] sm:$0xff]
      %v464 = vld [vmem:[#allocation2 + $0x170] sm:$0xff]
      %v465 = vld [vmem:[#allocation2 + $0x178] sm:$0x3]
      %v466 = vld [vmem:[#allocation2 + $0x180] sm:$0xff]
      %v467 = vld [vmem:[#allocation2 + $0x188] sm:$0xff]
      %v468 = vld [vmem:[#allocation2 + $0x190] sm:$0x3]
      %v469 = vld [vmem:[#allocation2 + $0x198] sm:$0xff]
      %v470 = vld [vmem:[#allocation2 + $0x1a0] sm:$0xff]
      %v471 = vld [vmem:[#allocation2 + $0x1a8] sm:$0x3]
      %vm520 = vcmask 1046528
      %v521 = vrot.slane %v418, 1
      %v522 = vrot.slane %v419, 1
      %v523 = vsel %vm520, %v521, %v522
      %v524 = vrot.slane %v420, 1
      %v525 = vsel %vm520, %v522, %v524
      %v526 = vrot.slane %v421, 1
      %v527 = vrot.slane %v422, 1
      %v528 = vsel %vm520, %v526, %v527
      %v529 = vrot.slane %v423, 1
      %v530 = vsel %vm520, %v527, %v529
      %v531 = vrot.slane %v424, 1
      %v532 = vrot.slane %v425, 1
      %v533 = vsel %vm520, %v531, %v532
      %v534 = vrot.slane %v426, 1
      %v535 = vsel %vm520, %v532, %v534
      %v536 = vrot.slane %v427, 1
      %v537 = vrot.slane %v428, 1
      %v538 = vsel %vm520, %v536, %v537
      %v539 = vrot.slane %v429, 1
      %v540 = vsel %vm520, %v537, %v539
      %v541 = vrot.slane %v430, 1
      %v542 = vrot.slane %v431, 1
      %v543 = vsel %vm520, %v541, %v542
      %v544 = vrot.slane %v432, 1
      %v545 = vsel %vm520, %v542, %v544
      %v546 = vrot.slane %v433, 1
      %v547 = vrot.slane %v434, 1
      %v548 = vsel %vm520, %v546, %v547
      %v549 = vrot.slane %v435, 1
      %v550 = vsel %vm520, %v547, %v549
      %v551 = vrot.slane %v436, 1
      %v552 = vrot.slane %v437, 1
      %v553 = vsel %vm520, %v551, %v552
      %v554 = vrot.slane %v438, 1
      %v555 = vsel %vm520, %v552, %v554
      %v556 = vrot.slane %v439, 1
      %v557 = vrot.slane %v440, 1
      %v558 = vsel %vm520, %v556, %v557
      %v559 = vrot.slane %v441, 1
      %v560 = vsel %vm520, %v557, %v559
      %v561 = vrot.slane %v442, 1
      %v562 = vrot.slane %v443, 1
      %v563 = vsel %vm520, %v561, %v562
      %v564 = vrot.slane %v444, 1
      %v565 = vsel %vm520, %v562, %v564
      %v566 = vrot.slane %v445, 1
      %v567 = vrot.slane %v446, 1
      %v568 = vsel %vm520, %v566, %v567
      %v569 = vrot.slane %v447, 1
      %v570 = vsel %vm520, %v567, %v569
      %v571 = vrot.slane %v448, 1
      %v572 = vrot.slane %v449, 1
      %v573 = vsel %vm520, %v571, %v572
      %v574 = vrot.slane %v450, 1
      %v575 = vsel %vm520, %v572, %v574
      %v576 = vrot.slane %v451, 1
      %v577 = vrot.slane %v452, 1
      %v578 = vsel %vm520, %v576, %v577
      %v579 = vrot.slane %v453, 1
      %v580 = vsel %vm520, %v577, %v579
      %v581 = vrot.slane %v454, 1
      %v582 = vrot.slane %v455, 1
      %v583 = vsel %vm520, %v581, %v582
      %v584 = vrot.slane %v456, 1
      %v585 = vsel %vm520, %v582, %v584
      %v586 = vrot.slane %v457, 1
      %v587 = vrot.slane %v458, 1
      %v588 = vsel %vm520, %v586, %v587
      %v589 = vrot.slane %v459, 1
      %v590 = vsel %vm520, %v587, %v589
      %v591 = vrot.slane %v460, 1
      %v592 = vrot.slane %v461, 1
      %v593 = vsel %vm520, %v591, %v592
      %v594 = vrot.slane %v462, 1
      %v595 = vsel %vm520, %v592, %v594
      %v596 = vrot.slane %v463, 1
      %v597 = vrot.slane %v464, 1
      %v598 = vsel %vm520, %v596, %v597
      %v599 = vrot.slane %v465, 1
      %v600 = vsel %vm520, %v597, %v599
      %vm633 = vcmask 1045504
      %v634 = vrot.slane %v418, 2
      %v635 = vrot.slane %v419, 2
      %v636 = vsel %vm633, %v634, %v635
      %v637 = vrot.slane %v420, 2
      %v638 = vsel %vm633, %v635, %v637
      %v639 = vrot.slane %v421, 2
      %v640 = vrot.slane %v422, 2
      %v641 = vsel %vm633, %v639, %v640
      %v642 = vrot.slane %v423, 2
      %v643 = vsel %vm633, %v640, %v642
      %v644 = vrot.slane %v424, 2
      %v645 = vrot.slane %v425, 2
      %v646 = vsel %vm633, %v644, %v645
      %v647 = vrot.slane %v426, 2
      %v648 = vsel %vm633, %v645, %v647
      %v649 = vrot.slane %v427, 2
      %v650 = vrot.slane %v428, 2
      %v651 = vsel %vm633, %v649, %v650
      %v652 = vrot.slane %v429, 2
      %v653 = vsel %vm633, %v650, %v652
      %v654 = vrot.slane %v430, 2
      %v655 = vrot.slane %v431, 2
      %v656 = vsel %vm633, %v654, %v655
      %v657 = vrot.slane %v432, 2
      %v658 = vsel %vm633, %v655, %v657
      %v659 = vrot.slane %v433, 2
      %v660 = vrot.slane %v434, 2
      %v661 = vsel %vm633, %v659, %v660
      %v662 = vrot.slane %v435, 2
      %v663 = vsel %vm633, %v660, %v662
      %v664 = vrot.slane %v436, 2
      %v665 = vrot.slane %v437, 2
      %v666 = vsel %vm633, %v664, %v665
      %v667 = vrot.slane %v438, 2
      %v668 = vsel %vm633, %v665, %v667
      %v669 = vrot.slane %v439, 2
      %v670 = vrot.slane %v440, 2
      %v671 = vsel %vm633, %v669, %v670
      %v672 = vrot.slane %v441, 2
      %v673 = vsel %vm633, %v670, %v672
      %v674 = vrot.slane %v442, 2
      %v675 = vrot.slane %v443, 2
      %v676 = vsel %vm633, %v674, %v675
      %v677 = vrot.slane %v444, 2
      %v678 = vsel %vm633, %v675, %v677
      %v679 = vrot.slane %v445, 2
      %v680 = vrot.slane %v446, 2
      %v681 = vsel %vm633, %v679, %v680
      %v682 = vrot.slane %v447, 2
      %v683 = vsel %vm633, %v680, %v682
      %v684 = vrot.slane %v448, 2
      %v685 = vrot.slane %v449, 2
      %v686 = vsel %vm633, %v684, %v685
      %v687 = vrot.slane %v450, 2
      %v688 = vsel %vm633, %v685, %v687
      %v689 = vrot.slane %v451, 2
      %v690 = vrot.slane %v452, 2
      %v691 = vsel %vm633, %v689, %v690
      %v692 = vrot.slane %v453, 2
      %v693 = vsel %vm633, %v690, %v692
      %v694 = vrot.slane %v454, 2
      %v695 = vrot.slane %v455, 2
      %v696 = vsel %vm633, %v694, %v695
      %v697 = vrot.slane %v456, 2
      %v698 = vsel %vm633, %v695, %v697
      %v699 = vrot.slane %v457, 2
      %v700 = vrot.slane %v458, 2
      %v701 = vsel %vm633, %v699, %v700
      %v702 = vrot.slane %v459, 2
      %v703 = vsel %vm633, %v700, %v702
      %v704 = vrot.slane %v460, 2
      %v705 = vrot.slane %v461, 2
      %v706 = vsel %vm633, %v704, %v705
      %v707 = vrot.slane %v462, 2
      %v708 = vsel %vm633, %v705, %v707
      %v709 = vrot.slane %v463, 2
      %v710 = vrot.slane %v464, 2
      %v711 = vsel %vm633, %v709, %v710
      %v712 = vrot.slane %v465, 2
      %v713 = vsel %vm633, %v710, %v712
      %v749 = vrot.slane %v466, 1
      %v750 = vrot.slane %v467, 1
      %v751 = vsel %vm520, %v749, %v750
      %v752 = vrot.slane %v468, 1
      %v753 = vsel %vm520, %v750, %v752
      %v756 = vrot.slane %v466, 2
      %v757 = vrot.slane %v467, 2
      %v758 = vsel %vm633, %v756, %v757
      %v759 = vrot.slane %v468, 2
      %v760 = vsel %vm633, %v757, %v759
      %v766 = vrot.slane %v469, 1
      %v767 = vrot.slane %v470, 1
      %v768 = vsel %vm520, %v766, %v767
      %v769 = vrot.slane %v471, 1
      %v770 = vsel %vm520, %v767, %v769
      %v773 = vrot.slane %v469, 2
      %v774 = vrot.slane %v470, 2
      %v775 = vsel %vm633, %v773, %v774
      %v776 = vrot.slane %v471, 2
      %v777 = vsel %vm633, %v774, %v776
      %v780 = vld [vmem:[%s2] sm:$0xff]
      %v781 = vld [vmem:[%s2 + $0x8] sm:$0xff]
      %v782 = vld [vmem:[%s2 + $0x10] sm:$0xff]
      %v783 = vld [vmem:[%s2 + $0x18] sm:$0xff]
      %v784 = vld [vmem:[%s2 + $0x20] sm:$0xff]
      %v785 = vld [vmem:[%s2 + $0x28] sm:$0xff]
      %v786 = vld [vmem:[%s2 + $0x30] sm:$0xff]
      %v787 = vld [vmem:[%s2 + $0x38] sm:$0xff]
      %v788 = vld [vmem:[%s2 + $0x40] sm:$0xff]
      %v789 = vld [vmem:[%s2 + $0x48] sm:$0xff]
      %v790 = vld [vmem:[%s2 + $0x50] sm:$0xff]
      %v791 = vld [vmem:[%s2 + $0x58] sm:$0xff]
      %v792 = vld [vmem:[%s2 + $0x60] sm:$0xff]
      %v793 = vld [vmem:[%s2 + $0x68] sm:$0xff]
      %v794 = vld [vmem:[%s2 + $0x70] sm:$0xff]
      %v795 = vld [vmem:[%s2 + $0x78] sm:$0xff]
      %v796 = vld [vmem:[%s2 + $0x80] sm:$0xff]
      %v797 = vld [vmem:[%s2 + $0x88] sm:$0xff]
      %v798 = vld [vmem:[%s2 + $0x90] sm:$0xff]
      %v799 = vld [vmem:[%s2 + $0x98] sm:$0xff]
      %v800 = vld [vmem:[%s2 + $0xa0] sm:$0xff]
      %v801 = vld [vmem:[%s2 + $0xa8] sm:$0xff]
      %v802 = vld [vmem:[%s2 + $0xb0] sm:$0xff]
      %v803 = vld [vmem:[%s2 + $0xb8] sm:$0xff]
      %v804 = vld [vmem:[%s2 + $0xc0] sm:$0xff]
      %v805 = vld [vmem:[%s2 + $0xc8] sm:$0xff]
      %v806 = vld [vmem:[%s2 + $0xd0] sm:$0xff]
      %v807 = vld [vmem:[%s2 + $0xd8] sm:$0xff]
      %v808 = vld [vmem:[%s2 + $0xe0] sm:$0xff]
      %v809 = vld [vmem:[%s2 + $0xe8] sm:$0xff]
      %v810 = vld [vmem:[%s2 + $0xf0] sm:$0xff]
      %v811 = vld [vmem:[%s2 + $0xf8] sm:$0xff]
      %v812 = vld [vmem:[%s2 + $0x100] sm:$0xff]
      %v813 = vld [vmem:[%s2 + $0x108] sm:$0xff]
      %v814 = vld [vmem:[%s2 + $0x110] sm:$0xff]
      %v815 = vld [vmem:[%s2 + $0x118] sm:$0xff]
      %v816 = vld [vmem:[%s2 + $0x120] sm:$0xff]
      %v817 = vld [vmem:[%s2 + $0x128] sm:$0xff]
      %v818 = vld [vmem:[%s2 + $0x130] sm:$0xff]
      %v819 = vld [vmem:[%s2 + $0x138] sm:$0xff]
      %v820 = vld [vmem:[%s2 + $0x140] sm:$0xff]
      %v821 = vld [vmem:[%s2 + $0x148] sm:$0xff]
      %v822 = vld [vmem:[%s2 + $0x150] sm:$0xff]
      %v823 = vld [vmem:[%s2 + $0x158] sm:$0xff]
      %v824 = vld [vmem:[%s2 + $0x160] sm:$0xff]
      %v825 = vld [vmem:[%s2 + $0x168] sm:$0xff]
      %v826 = vld [vmem:[%s2 + $0x170] sm:$0xff]
      %v827 = vld [vmem:[%s2 + $0x178] sm:$0xff]
      %v828 = vld [vmem:[%s2 + $0x180] sm:$0xff]
      %v829 = vld [vmem:[%s2 + $0x188] sm:$0xff]
      %v830 = vld [vmem:[%s2 + $0x190] sm:$0xff]
      %v831 = vld [vmem:[%s2 + $0x198] sm:$0xff]
      %v832 = vld [vmem:[%s2 + $0x1a0] sm:$0xff]
      %v833 = vld [vmem:[%s2 + $0x1a8] sm:$0xff]
      %v834 = vld [vmem:[%s2 + $0x1b0] sm:$0xff]
      %v835 = vld [vmem:[%s2 + $0x1b8] sm:$0xff]
      %v836 = vld [vmem:[%s2 + $0x1c0] sm:$0xff]
      %v837 = vld [vmem:[%s2 + $0x1c8] sm:$0xff]
      %v838 = vld [vmem:[%s2 + $0x1d0] sm:$0xff]
      %v839 = vld [vmem:[%s2 + $0x1d8] sm:$0xff]
      %v840 = vld [vmem:[%s2 + $0x1e0] sm:$0xff]
      %v841 = vld [vmem:[%s2 + $0x1e8] sm:$0xff]
      %v842 = vld [vmem:[%s2 + $0x1f0] sm:$0xff]
      %v843 = vld [vmem:[%s2 + $0x1f8] sm:$0xff]
      %v844 = vld [vmem:[%s2 + $0x200] sm:$0xff]
      %v845 = vld [vmem:[%s2 + $0x208] sm:$0xff]
      %v846 = vld [vmem:[%s2 + $0x210] sm:$0xff]
      %v847 = vld [vmem:[%s2 + $0x218] sm:$0xff]
      %v848 = vld [vmem:[%s2 + $0x220] sm:$0xff]
      %v849 = vld [vmem:[%s2 + $0x228] sm:$0xff]
      %v850 = vld [vmem:[%s2 + $0x230] sm:$0xff]
      %v851 = vld [vmem:[%s2 + $0x238] sm:$0xff]
      %v852 = vld [vmem:[%s2 + $0x240] sm:$0xff]
      %v853 = vld [vmem:[%s2 + $0x248] sm:$0xff]
      %v854 = vld [vmem:[%s2 + $0x250] sm:$0xff]
      %v855 = vld [vmem:[%s2 + $0x258] sm:$0xff]
      %v856 = vld [vmem:[%s2 + $0x260] sm:$0xff]
      %v857 = vld [vmem:[%s2 + $0x268] sm:$0xff]
      %v858 = vld [vmem:[%s2 + $0x270] sm:$0xff]
      %v859 = vld [vmem:[%s2 + $0x278] sm:$0xff]
      %v860 = vld [vmem:[%s2 + $0x280] sm:$0xff]
      %v861 = vld [vmem:[%s2 + $0x288] sm:$0xff]
      %v862 = vld [vmem:[%s2 + $0x290] sm:$0xff]
      %v863 = vld [vmem:[%s2 + $0x298] sm:$0xff]
      %v864 = vld [vmem:[%s2 + $0x2a0] sm:$0xff]
      %v865 = vld [vmem:[%s2 + $0x2a8] sm:$0xff]
      %v866 = vld [vmem:[%s2 + $0x2b0] sm:$0xff]
      %v867 = vld [vmem:[%s2 + $0x2b8] sm:$0xff]
      %v868 = vld [vmem:[%s2 + $0x2c0] sm:$0xff]
      %v869 = vld [vmem:[%s2 + $0x2c8] sm:$0xff]
      %v870 = vld [vmem:[%s2 + $0x2d0] sm:$0xff]
      %v871 = vld [vmem:[%s2 + $0x2d8] sm:$0xff]
      %v872 = vld [vmem:[%s2 + $0x2e0] sm:$0xff]
      %v873 = vld [vmem:[%s2 + $0x2e8] sm:$0xff]
      %v874 = vld [vmem:[%s2 + $0x2f0] sm:$0xff]
      %v875 = vld [vmem:[%s2 + $0x2f8] sm:$0xff]
      %v876 = vld [vmem:[%s2 + $0x300] sm:$0xff]
      %v877 = vld [vmem:[%s2 + $0x308] sm:$0xff]
      %v878 = vld [vmem:[%s2 + $0x310] sm:$0xff]
      %v879 = vld [vmem:[%s2 + $0x318] sm:$0xff]
      %v880 = vld [vmem:[%s2 + $0x320] sm:$0xff]
      %v881 = vld [vmem:[%s2 + $0x328] sm:$0xff]
      %v882 = vld [vmem:[%s2 + $0x330] sm:$0xff]
      %v883 = vld [vmem:[%s2 + $0x338] sm:$0xff]
      %v884 = vld [vmem:[%s2 + $0x340] sm:$0xff]
      %v885 = vld [vmem:[%s2 + $0x348] sm:$0xff]
      %v886 = vld [vmem:[%s2 + $0x350] sm:$0xff]
      %v887 = vld [vmem:[%s2 + $0x358] sm:$0xff]
      %v888 = vld [vmem:[%s2 + $0x360] sm:$0xff]
      %v889 = vld [vmem:[%s2 + $0x368] sm:$0xff]
      %v890 = vld [vmem:[%s2 + $0x370] sm:$0xff]
      %v891 = vld [vmem:[%s2 + $0x378] sm:$0xff]
      %v892 = vld [vmem:[%s2 + $0x380] sm:$0xff]
      %v893 = vld [vmem:[%s2 + $0x388] sm:$0xff]
      %v894 = vld [vmem:[%s2 + $0x390] sm:$0xff]
      %v895 = vld [vmem:[%s2 + $0x398] sm:$0xff]
      %v896 = vld [vmem:[%s2 + $0x3a0] sm:$0xff]
      %v897 = vld [vmem:[%s2 + $0x3a8] sm:$0xff]
      %v898 = vld [vmem:[%s2 + $0x3b0] sm:$0xff]
      %v899 = vld [vmem:[%s2 + $0x3b8] sm:$0xff]
      %v900 = vld [vmem:[%s2 + $0x3c0] sm:$0xff]
      %v901 = vld [vmem:[%s2 + $0x3c8] sm:$0xff]
      %v902 = vld [vmem:[%s2 + $0x3d0] sm:$0xff]
      %v903 = vld [vmem:[%s2 + $0x3d8] sm:$0xff]
      %v904 = vld [vmem:[%s2 + $0x3e0] sm:$0xff]
      %v905 = vld [vmem:[%s2 + $0x3e8] sm:$0xff]
      %v906 = vld [vmem:[%s2 + $0x3f0] sm:$0xff]
      %v907 = vld [vmem:[%s2 + $0x3f8] sm:$0xff]
      %v908 = vld [vmem:[%s2 + $0x400] sm:$0xff]
      %v909 = vld [vmem:[%s2 + $0x408] sm:$0xff]
      %v910 = vld [vmem:[%s2 + $0x410] sm:$0xff]
      %v911 = vld [vmem:[%s2 + $0x418] sm:$0xff]
      %v912 = vld [vmem:[%s2 + $0x420] sm:$0xff]
      %v913 = vld [vmem:[%s2 + $0x428] sm:$0xff]
      %v914 = vld [vmem:[%s2 + $0x430] sm:$0xff]
      %v915 = vld [vmem:[%s2 + $0x438] sm:$0xff]
      %v916 = vld [vmem:[%s2 + $0x440] sm:$0xff]
      %v917 = vld [vmem:[%s2 + $0x448] sm:$0xff]
      %v918 = vld [vmem:[%s2 + $0x450] sm:$0xff]
      %v919 = vld [vmem:[%s2 + $0x458] sm:$0xff]
      %v920 = vld [vmem:[%s2 + $0x460] sm:$0xff]
      %v921 = vld [vmem:[%s2 + $0x468] sm:$0xff]
      %v922 = vld [vmem:[%s2 + $0x470] sm:$0xff]
      %v923 = vld [vmem:[%s2 + $0x478] sm:$0xff]
      %v924 = vld [vmem:[%s3] sm:$0x1]
      %v926 = vperm.slane %v924, 0
      %928 = vmatpush.msra.mxu0 %v795
      %929 = vmatpush.msra.mxu0 %v794
      %930 = vmatpush.msra.mxu0 %v793
      %931 = vmatpush.msra.mxu0 %v792
      %932 = vmatpush.msra.mxu0 %v791
      %933 = vmatpush.msra.mxu0 %v790
      %934 = vmatpush.msra.mxu0 %v789
      %935 = vmatpush.msra.mxu0 %v788
      %936 = vmatpush.msra.mxu0 %v787
      %937 = vmatpush.msra.mxu0 %v786
      %938 = vmatpush.msra.mxu0 %v785
      %939 = vmatpush.msra.mxu0 %v784
      %940 = vmatpush.msra.mxu0 %v783
      %941 = vmatpush.msra.mxu0 %v782
      %942 = vmatpush.msra.mxu0 %v781
      %943 = vmatpush.msra.mxu0 %v780
      %944 = vmatmul.f32.gmra.mxu0 %v418
      %v945 = vpop.f32.mrf.mxu0
      %v946 = vadd.f32 %v926, %v945
      %947 = vmatmul.f32.gmra.mxu0 %v419
      %v948 = vpop.f32.mrf.mxu0
      %v949 = vadd.f32 %v926, %v948
      %950 = vmatmul.f32.gmra.mxu0 %v421
      %v951 = vpop.f32.mrf.mxu0
      %v952 = vadd.f32 %v926, %v951
      %953 = vmatmul.f32.gmra.mxu0 %v422
      %v954 = vpop.f32.mrf.mxu0
      %v955 = vadd.f32 %v926, %v954
      %956 = vmatmul.f32.gmra.mxu0 %v424
      %v957 = vpop.f32.mrf.mxu0
      %v958 = vadd.f32 %v926, %v957
      %959 = vmatmul.f32.gmra.mxu0 %v425
      %v960 = vpop.f32.mrf.mxu0
      %v961 = vadd.f32 %v926, %v960
      %962 = vmatmul.f32.gmra.mxu0 %v427
      %v963 = vpop.f32.mrf.mxu0
      %v964 = vadd.f32 %v926, %v963
      %965 = vmatmul.f32.gmra.mxu0 %v428
      %v966 = vpop.f32.mrf.mxu0
      %v967 = vadd.f32 %v926, %v966
      %968 = vmatmul.f32.gmra.mxu0 %v430
      %v969 = vpop.f32.mrf.mxu0
      %v970 = vadd.f32 %v926, %v969
      %971 = vmatmul.f32.gmra.mxu0 %v431
      %v972 = vpop.f32.mrf.mxu0
      %v973 = vadd.f32 %v926, %v972
      %974 = vmatmul.f32.gmra.mxu0 %v433
      %v975 = vpop.f32.mrf.mxu0
      %v976 = vadd.f32 %v926, %v975
      %977 = vmatmul.f32.gmra.mxu0 %v434
      %v978 = vpop.f32.mrf.mxu0
      %v979 = vadd.f32 %v926, %v978
      %980 = vmatmul.f32.gmra.mxu0 %v436
      %v981 = vpop.f32.mrf.mxu0
      %v982 = vadd.f32 %v926, %v981
      %983 = vmatmul.f32.gmra.mxu0 %v437
      %v984 = vpop.f32.mrf.mxu0
      %v985 = vadd.f32 %v926, %v984
      %986 = vmatmul.f32.gmra.mxu0 %v439
      %v987 = vpop.f32.mrf.mxu0
      %v988 = vadd.f32 %v926, %v987
      %989 = vmatmul.f32.gmra.mxu0 %v440
      %v990 = vpop.f32.mrf.mxu0
      %v991 = vadd.f32 %v926, %v990
      %992 = vmatmul.f32.gmra.mxu0 %v442
      %v993 = vpop.f32.mrf.mxu0
      %v994 = vadd.f32 %v926, %v993
      %995 = vmatmul.f32.gmra.mxu0 %v443
      %v996 = vpop.f32.mrf.mxu0
      %v997 = vadd.f32 %v926, %v996
      %998 = vmatmul.f32.gmra.mxu0 %v445
      %v999 = vpop.f32.mrf.mxu0
      %v1000 = vadd.f32 %v926, %v999
      %1001 = vmatmul.f32.gmra.mxu0 %v446
      %v1002 = vpop.f32.mrf.mxu0
      %v1003 = vadd.f32 %v926, %v1002
      %1004 = vmatmul.f32.gmra.mxu0 %v448
      %v1005 = vpop.f32.mrf.mxu0
      %v1006 = vadd.f32 %v926, %v1005
      %1007 = vmatmul.f32.gmra.mxu0 %v449
      %v1008 = vpop.f32.mrf.mxu0
      %v1009 = vadd.f32 %v926, %v1008
      %1010 = vmatmul.f32.gmra.mxu0 %v451
      %v1011 = vpop.f32.mrf.mxu0
      %v1012 = vadd.f32 %v926, %v1011
      %1013 = vmatmul.f32.gmra.mxu0 %v452
      %v1014 = vpop.f32.mrf.mxu0
      %v1015 = vadd.f32 %v926, %v1014
      %1016 = vmatmul.f32.gmra.mxu0 %v454
      %v1017 = vpop.f32.mrf.mxu0
      %v1018 = vadd.f32 %v926, %v1017
      %1019 = vmatmul.f32.gmra.mxu0 %v455
      %v1020 = vpop.f32.mrf.mxu0
      %v1021 = vadd.f32 %v926, %v1020
      %1022 = vmatmul.f32.gmra.mxu0 %v457
      %v1023 = vpop.f32.mrf.mxu0
      %v1024 = vadd.f32 %v926, %v1023
      %1025 = vmatmul.f32.gmra.mxu0 %v458
      %v1026 = vpop.f32.mrf.mxu0
      %v1027 = vadd.f32 %v926, %v1026
      %1028 = vmatmul.f32.gmra.mxu0 %v460
      %v1029 = vpop.f32.mrf.mxu0
      %v1030 = vadd.f32 %v926, %v1029
      %1031 = vmatmul.f32.gmra.mxu0 %v461
      %v1032 = vpop.f32.mrf.mxu0
      %v1033 = vadd.f32 %v926, %v1032
      %1034 = vmatmul.f32.gmra.mxu0 %v463
      %v1035 = vpop.f32.mrf.mxu0
      %v1036 = vadd.f32 %v926, %v1035
      %1037 = vmatmul.f32.gmra.mxu0 %v464
      %v1038 = vpop.f32.mrf.mxu0
      %v1039 = vadd.f32 %v926, %v1038
      %1040 = vdwg.mxu0
      %1041 = vmatpush.msra.mxu0 %v811
      %1042 = vmatpush.msra.mxu0 %v810
      %1043 = vmatpush.msra.mxu0 %v809
      %1044 = vmatpush.msra.mxu0 %v808
      %1045 = vmatpush.msra.mxu0 %v807
      %1046 = vmatpush.msra.mxu0 %v806
      %1047 = vmatpush.msra.mxu0 %v805
      %1048 = vmatpush.msra.mxu0 %v804
      %1049 = vmatpush.msra.mxu0 %v803
      %1050 = vmatpush.msra.mxu0 %v802
      %1051 = vmatpush.msra.mxu0 %v801
      %1052 = vmatpush.msra.mxu0 %v800
      %1053 = vmatpush.msra.mxu0 %v799
      %1054 = vmatpush.msra.mxu0 %v798
      %1055 = vmatpush.msra.mxu0 %v797
      %1056 = vmatpush.msra.mxu0 %v796
      %1057 = vmatmul.f32.gmra.mxu0 %v523
      %v1058 = vpop.f32.mrf.mxu0
      %v1059 = vadd.f32 %v946, %v1058
      %1060 = vmatmul.f32.gmra.mxu0 %v525
      %v1061 = vpop.f32.mrf.mxu0
      %v1062 = vadd.f32 %v949, %v1061
      %1063 = vmatmul.f32.gmra.mxu0 %v528
      %v1064 = vpop.f32.mrf.mxu0
      %v1065 = vadd.f32 %v952, %v1064
      %1066 = vmatmul.f32.gmra.mxu0 %v530
      %v1067 = vpop.f32.mrf.mxu0
      %v1068 = vadd.f32 %v955, %v1067
      %1069 = vmatmul.f32.gmra.mxu0 %v533
      %v1070 = vpop.f32.mrf.mxu0
      %v1071 = vadd.f32 %v958, %v1070
      %1072 = vmatmul.f32.gmra.mxu0 %v535
      %v1073 = vpop.f32.mrf.mxu0
      %v1074 = vadd.f32 %v961, %v1073
      %1075 = vmatmul.f32.gmra.mxu0 %v538
      %v1076 = vpop.f32.mrf.mxu0
      %v1077 = vadd.f32 %v964, %v1076
      %1078 = vmatmul.f32.gmra.mxu0 %v540
      %v1079 = vpop.f32.mrf.mxu0
      %v1080 = vadd.f32 %v967, %v1079
      %1081 = vmatmul.f32.gmra.mxu0 %v543
      %v1082 = vpop.f32.mrf.mxu0
      %v1083 = vadd.f32 %v970, %v1082
      %1084 = vmatmul.f32.gmra.mxu0 %v545
      %v1085 = vpop.f32.mrf.mxu0
      %v1086 = vadd.f32 %v973, %v1085
      %1087 = vmatmul.f32.gmra.mxu0 %v548
      %v1088 = vpop.f32.mrf.mxu0
      %v1089 = vadd.f32 %v976, %v1088
      %1090 = vmatmul.f32.gmra.mxu0 %v550
      %v1091 = vpop.f32.mrf.mxu0
      %v1092 = vadd.f32 %v979, %v1091
      %1093 = vmatmul.f32.gmra.mxu0 %v553
      %v1094 = vpop.f32.mrf.mxu0
      %v1095 = vadd.f32 %v982, %v1094
      %1096 = vmatmul.f32.gmra.mxu0 %v555
      %v1097 = vpop.f32.mrf.mxu0
      %v1098 = vadd.f32 %v985, %v1097
      %1099 = vmatmul.f32.gmra.mxu0 %v558
      %v1100 = vpop.f32.mrf.mxu0
      %v1101 = vadd.f32 %v988, %v1100
      %1102 = vmatmul.f32.gmra.mxu0 %v560
      %v1103 = vpop.f32.mrf.mxu0
      %v1104 = vadd.f32 %v991, %v1103
      %1105 = vmatmul.f32.gmra.mxu0 %v563
      %v1106 = vpop.f32.mrf.mxu0
      %v1107 = vadd.f32 %v994, %v1106
      %1108 = vmatmul.f32.gmra.mxu0 %v565
      %v1109 = vpop.f32.mrf.mxu0
      %v1110 = vadd.f32 %v997, %v1109
      %1111 = vmatmul.f32.gmra.mxu0 %v568
      %v1112 = vpop.f32.mrf.mxu0
      %v1113 = vadd.f32 %v1000, %v1112
      %1114 = vmatmul.f32.gmra.mxu0 %v570
      %v1115 = vpop.f32.mrf.mxu0
      %v1116 = vadd.f32 %v1003, %v1115
      %1117 = vmatmul.f32.gmra.mxu0 %v573
      %v1118 = vpop.f32.mrf.mxu0
      %v1119 = vadd.f32 %v1006, %v1118
      %1120 = vmatmul.f32.gmra.mxu0 %v575
      %v1121 = vpop.f32.mrf.mxu0
      %v1122 = vadd.f32 %v1009, %v1121
      %1123 = vmatmul.f32.gmra.mxu0 %v578
      %v1124 = vpop.f32.mrf.mxu0
      %v1125 = vadd.f32 %v1012, %v1124
      %1126 = vmatmul.f32.gmra.mxu0 %v580
      %v1127 = vpop.f32.mrf.mxu0
      %v1128 = vadd.f32 %v1015, %v1127
      %1129 = vmatmul.f32.gmra.mxu0 %v583
      %v1130 = vpop.f32.mrf.mxu0
      %v1131 = vadd.f32 %v1018, %v1130
      %1132 = vmatmul.f32.gmra.mxu0 %v585
      %v1133 = vpop.f32.mrf.mxu0
      %v1134 = vadd.f32 %v1021, %v1133
      %1135 = vmatmul.f32.gmra.mxu0 %v588
      %v1136 = vpop.f32.mrf.mxu0
      %v1137 = vadd.f32 %v1024, %v1136
      %1138 = vmatmul.f32.gmra.mxu0 %v590
      %v1139 = vpop.f32.mrf.mxu0
      %v1140 = vadd.f32 %v1027, %v1139
      %1141 = vmatmul.f32.gmra.mxu0 %v593
      %v1142 = vpop.f32.mrf.mxu0
      %v1143 = vadd.f32 %v1030, %v1142
      %1144 = vmatmul.f32.gmra.mxu0 %v595
      %v1145 = vpop.f32.mrf.mxu0
      %v1146 = vadd.f32 %v1033, %v1145
      %1147 = vmatmul.f32.gmra.mxu0 %v598
      %v1148 = vpop.f32.mrf.mxu0
      %v1149 = vadd.f32 %v1036, %v1148
      %1150 = vmatmul.f32.gmra.mxu0 %v600
      %v1151 = vpop.f32.mrf.mxu0
      %v1152 = vadd.f32 %v1039, %v1151
      %1153 = vdwg.mxu0
      %1154 = vmatpush.msra.mxu0 %v827
      %1155 = vmatpush.msra.mxu0 %v826
      %1156 = vmatpush.msra.mxu0 %v825
      %1157 = vmatpush.msra.mxu0 %v824
      %1158 = vmatpush.msra.mxu0 %v823
      %1159 = vmatpush.msra.mxu0 %v822
      %1160 = vmatpush.msra.mxu0 %v821
      %1161 = vmatpush.msra.mxu0 %v820
      %1162 = vmatpush.msra.mxu0 %v819
      %1163 = vmatpush.msra.mxu0 %v818
      %1164 = vmatpush.msra.mxu0 %v817
      %1165 = vmatpush.msra.mxu0 %v816
      %1166 = vmatpush.msra.mxu0 %v815
      %1167 = vmatpush.msra.mxu0 %v814
      %1168 = vmatpush.msra.mxu0 %v813
      %1169 = vmatpush.msra.mxu0 %v812
      %1170 = vmatmul.f32.gmra.mxu0 %v636
      %v1171 = vpop.f32.mrf.mxu0
      %v1172 = vadd.f32 %v1059, %v1171
      %1173 = vmatmul.f32.gmra.mxu0 %v638
      %v1174 = vpop.f32.mrf.mxu0
      %v1175 = vadd.f32 %v1062, %v1174
      %1176 = vmatmul.f32.gmra.mxu0 %v641
      %v1177 = vpop.f32.mrf.mxu0
      %v1178 = vadd.f32 %v1065, %v1177
      %1179 = vmatmul.f32.gmra.mxu0 %v643
      %v1180 = vpop.f32.mrf.mxu0
      %v1181 = vadd.f32 %v1068, %v1180
      %1182 = vmatmul.f32.gmra.mxu0 %v646
      %v1183 = vpop.f32.mrf.mxu0
      %v1184 = vadd.f32 %v1071, %v1183
      %1185 = vmatmul.f32.gmra.mxu0 %v648
      %v1186 = vpop.f32.mrf.mxu0
      %v1187 = vadd.f32 %v1074, %v1186
      %1188 = vmatmul.f32.gmra.mxu0 %v651
      %v1189 = vpop.f32.mrf.mxu0
      %v1190 = vadd.f32 %v1077, %v1189
      %1191 = vmatmul.f32.gmra.mxu0 %v653
      %v1192 = vpop.f32.mrf.mxu0
      %v1193 = vadd.f32 %v1080, %v1192
      %1194 = vmatmul.f32.gmra.mxu0 %v656
      %v1195 = vpop.f32.mrf.mxu0
      %v1196 = vadd.f32 %v1083, %v1195
      %1197 = vmatmul.f32.gmra.mxu0 %v658
      %v1198 = vpop.f32.mrf.mxu0
      %v1199 = vadd.f32 %v1086, %v1198
      %1200 = vmatmul.f32.gmra.mxu0 %v661
      %v1201 = vpop.f32.mrf.mxu0
      %v1202 = vadd.f32 %v1089, %v1201
      %1203 = vmatmul.f32.gmra.mxu0 %v663
      %v1204 = vpop.f32.mrf.mxu0
      %v1205 = vadd.f32 %v1092, %v1204
      %1206 = vmatmul.f32.gmra.mxu0 %v666
      %v1207 = vpop.f32.mrf.mxu0
      %v1208 = vadd.f32 %v1095, %v1207
      %1209 = vmatmul.f32.gmra.mxu0 %v668
      %v1210 = vpop.f32.mrf.mxu0
      %v1211 = vadd.f32 %v1098, %v1210
      %1212 = vmatmul.f32.gmra.mxu0 %v671
      %v1213 = vpop.f32.mrf.mxu0
      %v1214 = vadd.f32 %v1101, %v1213
      %1215 = vmatmul.f32.gmra.mxu0 %v673
      %v1216 = vpop.f32.mrf.mxu0
      %v1217 = vadd.f32 %v1104, %v1216
      %1218 = vmatmul.f32.gmra.mxu0 %v676
      %v1219 = vpop.f32.mrf.mxu0
      %v1220 = vadd.f32 %v1107, %v1219
      %1221 = vmatmul.f32.gmra.mxu0 %v678
      %v1222 = vpop.f32.mrf.mxu0
      %v1223 = vadd.f32 %v1110, %v1222
      %1224 = vmatmul.f32.gmra.mxu0 %v681
      %v1225 = vpop.f32.mrf.mxu0
      %v1226 = vadd.f32 %v1113, %v1225
      %1227 = vmatmul.f32.gmra.mxu0 %v683
      %v1228 = vpop.f32.mrf.mxu0
      %v1229 = vadd.f32 %v1116, %v1228
      %1230 = vmatmul.f32.gmra.mxu0 %v686
      %v1231 = vpop.f32.mrf.mxu0
      %v1232 = vadd.f32 %v1119, %v1231
      %1233 = vmatmul.f32.gmra.mxu0 %v688
      %v1234 = vpop.f32.mrf.mxu0
      %v1235 = vadd.f32 %v1122, %v1234
      %1236 = vmatmul.f32.gmra.mxu0 %v691
      %v1237 = vpop.f32.mrf.mxu0
      %v1238 = vadd.f32 %v1125, %v1237
      %1239 = vmatmul.f32.gmra.mxu0 %v693
      %v1240 = vpop.f32.mrf.mxu0
      %v1241 = vadd.f32 %v1128, %v1240
      %1242 = vmatmul.f32.gmra.mxu0 %v696
      %v1243 = vpop.f32.mrf.mxu0
      %v1244 = vadd.f32 %v1131, %v1243
      %1245 = vmatmul.f32.gmra.mxu0 %v698
      %v1246 = vpop.f32.mrf.mxu0
      %v1247 = vadd.f32 %v1134, %v1246
      %1248 = vmatmul.f32.gmra.mxu0 %v701
      %v1249 = vpop.f32.mrf.mxu0
      %v1250 = vadd.f32 %v1137, %v1249
      %1251 = vmatmul.f32.gmra.mxu0 %v703
      %v1252 = vpop.f32.mrf.mxu0
      %v1253 = vadd.f32 %v1140, %v1252
      %1254 = vmatmul.f32.gmra.mxu0 %v706
      %v1255 = vpop.f32.mrf.mxu0
      %v1256 = vadd.f32 %v1143, %v1255
      %1257 = vmatmul.f32.gmra.mxu0 %v708
      %v1258 = vpop.f32.mrf.mxu0
      %v1259 = vadd.f32 %v1146, %v1258
      %1260 = vmatmul.f32.gmra.mxu0 %v711
      %v1261 = vpop.f32.mrf.mxu0
      %v1262 = vadd.f32 %v1149, %v1261
      %1263 = vmatmul.f32.gmra.mxu0 %v713
      %v1264 = vpop.f32.mrf.mxu0
      %v1265 = vadd.f32 %v1152, %v1264
      %1266 = vdwg.mxu0
      %1267 = vmatpush.msra.mxu0 %v843
      %1268 = vmatpush.msra.mxu0 %v842
      %1269 = vmatpush.msra.mxu0 %v841
      %1270 = vmatpush.msra.mxu0 %v840
      %1271 = vmatpush.msra.mxu0 %v839
      %1272 = vmatpush.msra.mxu0 %v838
      %1273 = vmatpush.msra.mxu0 %v837
      %1274 = vmatpush.msra.mxu0 %v836
      %1275 = vmatpush.msra.mxu0 %v835
      %1276 = vmatpush.msra.mxu0 %v834
      %1277 = vmatpush.msra.mxu0 %v833
      %1278 = vmatpush.msra.mxu0 %v832
      %1279 = vmatpush.msra.mxu0 %v831
      %1280 = vmatpush.msra.mxu0 %v830
      %1281 = vmatpush.msra.mxu0 %v829
      %1282 = vmatpush.msra.mxu0 %v828
      %1283 = vmatmul.f32.gmra.mxu0 %v421
      %v1284 = vpop.f32.mrf.mxu0
      %v1285 = vadd.f32 %v1172, %v1284
      %1286 = vmatmul.f32.gmra.mxu0 %v422
      %v1287 = vpop.f32.mrf.mxu0
      %v1288 = vadd.f32 %v1175, %v1287
      %1289 = vmatmul.f32.gmra.mxu0 %v424
      %v1290 = vpop.f32.mrf.mxu0
      %v1291 = vadd.f32 %v1178, %v1290
      %1292 = vmatmul.f32.gmra.mxu0 %v425
      %v1293 = vpop.f32.mrf.mxu0
      %v1294 = vadd.f32 %v1181, %v1293
      %1295 = vmatmul.f32.gmra.mxu0 %v427
      %v1296 = vpop.f32.mrf.mxu0
      %v1297 = vadd.f32 %v1184, %v1296
      %1298 = vmatmul.f32.gmra.mxu0 %v428
      %v1299 = vpop.f32.mrf.mxu0
      %v1300 = vadd.f32 %v1187, %v1299
      %1301 = vmatmul.f32.gmra.mxu0 %v430
      %v1302 = vpop.f32.mrf.mxu0
      %v1303 = vadd.f32 %v1190, %v1302
      %1304 = vmatmul.f32.gmra.mxu0 %v431
      %v1305 = vpop.f32.mrf.mxu0
      %v1306 = vadd.f32 %v1193, %v1305
      %1307 = vmatmul.f32.gmra.mxu0 %v433
      %v1308 = vpop.f32.mrf.mxu0
      %v1309 = vadd.f32 %v1196, %v1308
      %1310 = vmatmul.f32.gmra.mxu0 %v434
      %v1311 = vpop.f32.mrf.mxu0
      %v1312 = vadd.f32 %v1199, %v1311
      %1313 = vmatmul.f32.gmra.mxu0 %v436
      %v1314 = vpop.f32.mrf.mxu0
      %v1315 = vadd.f32 %v1202, %v1314
      %1316 = vmatmul.f32.gmra.mxu0 %v437
      %v1317 = vpop.f32.mrf.mxu0
      %v1318 = vadd.f32 %v1205, %v1317
      %1319 = vmatmul.f32.gmra.mxu0 %v439
      %v1320 = vpop.f32.mrf.mxu0
      %v1321 = vadd.f32 %v1208, %v1320
      %1322 = vmatmul.f32.gmra.mxu0 %v440
      %v1323 = vpop.f32.mrf.mxu0
      %v1324 = vadd.f32 %v1211, %v1323
      %1325 = vmatmul.f32.gmra.mxu0 %v442
      %v1326 = vpop.f32.mrf.mxu0
      %v1327 = vadd.f32 %v1214, %v1326
      %1328 = vmatmul.f32.gmra.mxu0 %v443
      %v1329 = vpop.f32.mrf.mxu0
      %v1330 = vadd.f32 %v1217, %v1329
      %1331 = vmatmul.f32.gmra.mxu0 %v445
      %v1332 = vpop.f32.mrf.mxu0
      %v1333 = vadd.f32 %v1220, %v1332
      %1334 = vmatmul.f32.gmra.mxu0 %v446
      %v1335 = vpop.f32.mrf.mxu0
      %v1336 = vadd.f32 %v1223, %v1335
      %1337 = vmatmul.f32.gmra.mxu0 %v448
      %v1338 = vpop.f32.mrf.mxu0
      %v1339 = vadd.f32 %v1226, %v1338
      %1340 = vmatmul.f32.gmra.mxu0 %v449
      %v1341 = vpop.f32.mrf.mxu0
      %v1342 = vadd.f32 %v1229, %v1341
      %1343 = vmatmul.f32.gmra.mxu0 %v451
      %v1344 = vpop.f32.mrf.mxu0
      %v1345 = vadd.f32 %v1232, %v1344
      %1346 = vmatmul.f32.gmra.mxu0 %v452
      %v1347 = vpop.f32.mrf.mxu0
      %v1348 = vadd.f32 %v1235, %v1347
      %1349 = vmatmul.f32.gmra.mxu0 %v454
      %v1350 = vpop.f32.mrf.mxu0
      %v1351 = vadd.f32 %v1238, %v1350
      %1352 = vmatmul.f32.gmra.mxu0 %v455
      %v1353 = vpop.f32.mrf.mxu0
      %v1354 = vadd.f32 %v1241, %v1353
      %1355 = vmatmul.f32.gmra.mxu0 %v457
      %v1356 = vpop.f32.mrf.mxu0
      %v1357 = vadd.f32 %v1244, %v1356
      %1358 = vmatmul.f32.gmra.mxu0 %v458
      %v1359 = vpop.f32.mrf.mxu0
      %v1360 = vadd.f32 %v1247, %v1359
      %1361 = vmatmul.f32.gmra.mxu0 %v460
      %v1362 = vpop.f32.mrf.mxu0
      %v1363 = vadd.f32 %v1250, %v1362
      %1364 = vmatmul.f32.gmra.mxu0 %v461
      %v1365 = vpop.f32.mrf.mxu0
      %v1366 = vadd.f32 %v1253, %v1365
      %1367 = vmatmul.f32.gmra.mxu0 %v463
      %v1368 = vpop.f32.mrf.mxu0
      %v1369 = vadd.f32 %v1256, %v1368
      %1370 = vmatmul.f32.gmra.mxu0 %v464
      %v1371 = vpop.f32.mrf.mxu0
      %v1372 = vadd.f32 %v1259, %v1371
      %1373 = vmatmul.f32.gmra.mxu0 %v466
      %v1374 = vpop.f32.mrf.mxu0
      %v1375 = vadd.f32 %v1262, %v1374
      %1376 = vmatmul.f32.gmra.mxu0 %v467
      %v1377 = vpop.f32.mrf.mxu0
      %v1378 = vadd.f32 %v1265, %v1377
      %1379 = vdwg.mxu0
      %1380 = vmatpush.msra.mxu0 %v859
      %1381 = vmatpush.msra.mxu0 %v858
      %1382 = vmatpush.msra.mxu0 %v857
      %1383 = vmatpush.msra.mxu0 %v856
      %1384 = vmatpush.msra.mxu0 %v855
      %1385 = vmatpush.msra.mxu0 %v854
      %1386 = vmatpush.msra.mxu0 %v853
      %1387 = vmatpush.msra.mxu0 %v852
      %1388 = vmatpush.msra.mxu0 %v851
      %1389 = vmatpush.msra.mxu0 %v850
      %1390 = vmatpush.msra.mxu0 %v849
      %1391 = vmatpush.msra.mxu0 %v848
      %1392 = vmatpush.msra.mxu0 %v847
      %1393 = vmatpush.msra.mxu0 %v846
      %1394 = vmatpush.msra.mxu0 %v845
      %1395 = vmatpush.msra.mxu0 %v844
      %1396 = vmatmul.f32.gmra.mxu0 %v528
      %v1397 = vpop.f32.mrf.mxu0
      %v1398 = vadd.f32 %v1285, %v1397
      %1399 = vmatmul.f32.gmra.mxu0 %v530
      %v1400 = vpop.f32.mrf.mxu0
      %v1401 = vadd.f32 %v1288, %v1400
      %1402 = vmatmul.f32.gmra.mxu0 %v533
      %v1403 = vpop.f32.mrf.mxu0
      %v1404 = vadd.f32 %v1291, %v1403
      %1405 = vmatmul.f32.gmra.mxu0 %v535
      %v1406 = vpop.f32.mrf.mxu0
      %v1407 = vadd.f32 %v1294, %v1406
      %1408 = vmatmul.f32.gmra.mxu0 %v538
      %v1409 = vpop.f32.mrf.mxu0
      %v1410 = vadd.f32 %v1297, %v1409
      %1411 = vmatmul.f32.gmra.mxu0 %v540
      %v1412 = vpop.f32.mrf.mxu0
      %v1413 = vadd.f32 %v1300, %v1412
      %1414 = vmatmul.f32.gmra.mxu0 %v543
      %v1415 = vpop.f32.mrf.mxu0
      %v1416 = vadd.f32 %v1303, %v1415
      %1417 = vmatmul.f32.gmra.mxu0 %v545
      %v1418 = vpop.f32.mrf.mxu0
      %v1419 = vadd.f32 %v1306, %v1418
      %1420 = vmatmul.f32.gmra.mxu0 %v548
      %v1421 = vpop.f32.mrf.mxu0
      %v1422 = vadd.f32 %v1309, %v1421
      %1423 = vmatmul.f32.gmra.mxu0 %v550
      %v1424 = vpop.f32.mrf.mxu0
      %v1425 = vadd.f32 %v1312, %v1424
      %1426 = vmatmul.f32.gmra.mxu0 %v553
      %v1427 = vpop.f32.mrf.mxu0
      %v1428 = vadd.f32 %v1315, %v1427
      %1429 = vmatmul.f32.gmra.mxu0 %v555
      %v1430 = vpop.f32.mrf.mxu0
      %v1431 = vadd.f32 %v1318, %v1430
      %1432 = vmatmul.f32.gmra.mxu0 %v558
      %v1433 = vpop.f32.mrf.mxu0
      %v1434 = vadd.f32 %v1321, %v1433
      %1435 = vmatmul.f32.gmra.mxu0 %v560
      %v1436 = vpop.f32.mrf.mxu0
      %v1437 = vadd.f32 %v1324, %v1436
      %1438 = vmatmul.f32.gmra.mxu0 %v563
      %v1439 = vpop.f32.mrf.mxu0
      %v1440 = vadd.f32 %v1327, %v1439
      %1441 = vmatmul.f32.gmra.mxu0 %v565
      %v1442 = vpop.f32.mrf.mxu0
      %v1443 = vadd.f32 %v1330, %v1442
      %1444 = vmatmul.f32.gmra.mxu0 %v568
      %v1445 = vpop.f32.mrf.mxu0
      %v1446 = vadd.f32 %v1333, %v1445
      %1447 = vmatmul.f32.gmra.mxu0 %v570
      %v1448 = vpop.f32.mrf.mxu0
      %v1449 = vadd.f32 %v1336, %v1448
      %1450 = vmatmul.f32.gmra.mxu0 %v573
      %v1451 = vpop.f32.mrf.mxu0
      %v1452 = vadd.f32 %v1339, %v1451
      %1453 = vmatmul.f32.gmra.mxu0 %v575
      %v1454 = vpop.f32.mrf.mxu0
      %v1455 = vadd.f32 %v1342, %v1454
      %1456 = vmatmul.f32.gmra.mxu0 %v578
      %v1457 = vpop.f32.mrf.mxu0
      %v1458 = vadd.f32 %v1345, %v1457
      %1459 = vmatmul.f32.gmra.mxu0 %v580
      %v1460 = vpop.f32.mrf.mxu0
      %v1461 = vadd.f32 %v1348, %v1460
      %1462 = vmatmul.f32.gmra.mxu0 %v583
      %v1463 = vpop.f32.mrf.mxu0
      %v1464 = vadd.f32 %v1351, %v1463
      %1465 = vmatmul.f32.gmra.mxu0 %v585
      %v1466 = vpop.f32.mrf.mxu0
      %v1467 = vadd.f32 %v1354, %v1466
      %1468 = vmatmul.f32.gmra.mxu0 %v588
      %v1469 = vpop.f32.mrf.mxu0
      %v1470 = vadd.f32 %v1357, %v1469
      %1471 = vmatmul.f32.gmra.mxu0 %v590
      %v1472 = vpop.f32.mrf.mxu0
      %v1473 = vadd.f32 %v1360, %v1472
      %1474 = vmatmul.f32.gmra.mxu0 %v593
      %v1475 = vpop.f32.mrf.mxu0
      %v1476 = vadd.f32 %v1363, %v1475
      %1477 = vmatmul.f32.gmra.mxu0 %v595
      %v1478 = vpop.f32.mrf.mxu0
      %v1479 = vadd.f32 %v1366, %v1478
      %1480 = vmatmul.f32.gmra.mxu0 %v598
      %v1481 = vpop.f32.mrf.mxu0
      %v1482 = vadd.f32 %v1369, %v1481
      %1483 = vmatmul.f32.gmra.mxu0 %v600
      %v1484 = vpop.f32.mrf.mxu0
      %v1485 = vadd.f32 %v1372, %v1484
      %1486 = vmatmul.f32.gmra.mxu0 %v751
      %v1487 = vpop.f32.mrf.mxu0
      %v1488 = vadd.f32 %v1375, %v1487
      %1489 = vmatmul.f32.gmra.mxu0 %v753
      %v1490 = vpop.f32.mrf.mxu0
      %v1491 = vadd.f32 %v1378, %v1490
      %1492 = vdwg.mxu0
      %1493 = vmatpush.msra.mxu0 %v875
      %1494 = vmatpush.msra.mxu0 %v874
      %1495 = vmatpush.msra.mxu0 %v873
      %1496 = vmatpush.msra.mxu0 %v872
      %1497 = vmatpush.msra.mxu0 %v871
      %1498 = vmatpush.msra.mxu0 %v870
      %1499 = vmatpush.msra.mxu0 %v869
      %1500 = vmatpush.msra.mxu0 %v868
      %1501 = vmatpush.msra.mxu0 %v867
      %1502 = vmatpush.msra.mxu0 %v866
      %1503 = vmatpush.msra.mxu0 %v865
      %1504 = vmatpush.msra.mxu0 %v864
      %1505 = vmatpush.msra.mxu0 %v863
      %1506 = vmatpush.msra.mxu0 %v862
      %1507 = vmatpush.msra.mxu0 %v861
      %1508 = vmatpush.msra.mxu0 %v860
      %1509 = vmatmul.f32.gmra.mxu0 %v641
      %v1510 = vpop.f32.mrf.mxu0
      %v1511 = vadd.f32 %v1398, %v1510
      %1512 = vmatmul.f32.gmra.mxu0 %v643
      %v1513 = vpop.f32.mrf.mxu0
      %v1514 = vadd.f32 %v1401, %v1513
      %1515 = vmatmul.f32.gmra.mxu0 %v646
      %v1516 = vpop.f32.mrf.mxu0
      %v1517 = vadd.f32 %v1404, %v1516
      %1518 = vmatmul.f32.gmra.mxu0 %v648
      %v1519 = vpop.f32.mrf.mxu0
      %v1520 = vadd.f32 %v1407, %v1519
      %1521 = vmatmul.f32.gmra.mxu0 %v651
      %v1522 = vpop.f32.mrf.mxu0
      %v1523 = vadd.f32 %v1410, %v1522
      %1524 = vmatmul.f32.gmra.mxu0 %v653
      %v1525 = vpop.f32.mrf.mxu0
      %v1526 = vadd.f32 %v1413, %v1525
      %1527 = vmatmul.f32.gmra.mxu0 %v656
      %v1528 = vpop.f32.mrf.mxu0
      %v1529 = vadd.f32 %v1416, %v1528
      %1530 = vmatmul.f32.gmra.mxu0 %v658
      %v1531 = vpop.f32.mrf.mxu0
      %v1532 = vadd.f32 %v1419, %v1531
      %1533 = vmatmul.f32.gmra.mxu0 %v661
      %v1534 = vpop.f32.mrf.mxu0
      %v1535 = vadd.f32 %v1422, %v1534
      %1536 = vmatmul.f32.gmra.mxu0 %v663
      %v1537 = vpop.f32.mrf.mxu0
      %v1538 = vadd.f32 %v1425, %v1537
      %1539 = vmatmul.f32.gmra.mxu0 %v666
      %v1540 = vpop.f32.mrf.mxu0
      %v1541 = vadd.f32 %v1428, %v1540
      %1542 = vmatmul.f32.gmra.mxu0 %v668
      %v1543 = vpop.f32.mrf.mxu0
      %v1544 = vadd.f32 %v1431, %v1543
      %1545 = vmatmul.f32.gmra.mxu0 %v671
      %v1546 = vpop.f32.mrf.mxu0
      %v1547 = vadd.f32 %v1434, %v1546
      %1548 = vmatmul.f32.gmra.mxu0 %v673
      %v1549 = vpop.f32.mrf.mxu0
      %v1550 = vadd.f32 %v1437, %v1549
      %1551 = vmatmul.f32.gmra.mxu0 %v676
      %v1552 = vpop.f32.mrf.mxu0
      %v1553 = vadd.f32 %v1440, %v1552
      %1554 = vmatmul.f32.gmra.mxu0 %v678
      %v1555 = vpop.f32.mrf.mxu0
      %v1556 = vadd.f32 %v1443, %v1555
      %1557 = vmatmul.f32.gmra.mxu0 %v681
      %v1558 = vpop.f32.mrf.mxu0
      %v1559 = vadd.f32 %v1446, %v1558
      %1560 = vmatmul.f32.gmra.mxu0 %v683
      %v1561 = vpop.f32.mrf.mxu0
      %v1562 = vadd.f32 %v1449, %v1561
      %1563 = vmatmul.f32.gmra.mxu0 %v686
      %v1564 = vpop.f32.mrf.mxu0
      %v1565 = vadd.f32 %v1452, %v1564
      %1566 = vmatmul.f32.gmra.mxu0 %v688
      %v1567 = vpop.f32.mrf.mxu0
      %v1568 = vadd.f32 %v1455, %v1567
      %1569 = vmatmul.f32.gmra.mxu0 %v691
      %v1570 = vpop.f32.mrf.mxu0
      %v1571 = vadd.f32 %v1458, %v1570
      %1572 = vmatmul.f32.gmra.mxu0 %v693
      %v1573 = vpop.f32.mrf.mxu0
      %v1574 = vadd.f32 %v1461, %v1573
      %1575 = vmatmul.f32.gmra.mxu0 %v696
      %v1576 = vpop.f32.mrf.mxu0
      %v1577 = vadd.f32 %v1464, %v1576
      %1578 = vmatmul.f32.gmra.mxu0 %v698
      %v1579 = vpop.f32.mrf.mxu0
      %v1580 = vadd.f32 %v1467, %v1579
      %1581 = vmatmul.f32.gmra.mxu0 %v701
      %v1582 = vpop.f32.mrf.mxu0
      %v1583 = vadd.f32 %v1470, %v1582
      %1584 = vmatmul.f32.gmra.mxu0 %v703
      %v1585 = vpop.f32.mrf.mxu0
      %v1586 = vadd.f32 %v1473, %v1585
      %1587 = vmatmul.f32.gmra.mxu0 %v706
      %v1588 = vpop.f32.mrf.mxu0
      %v1589 = vadd.f32 %v1476, %v1588
      %1590 = vmatmul.f32.gmra.mxu0 %v708
      %v1591 = vpop.f32.mrf.mxu0
      %v1592 = vadd.f32 %v1479, %v1591
      %1593 = vmatmul.f32.gmra.mxu0 %v711
      %v1594 = vpop.f32.mrf.mxu0
      %v1595 = vadd.f32 %v1482, %v1594
      %1596 = vmatmul.f32.gmra.mxu0 %v713
      %v1597 = vpop.f32.mrf.mxu0
      %v1598 = vadd.f32 %v1485, %v1597
      %1599 = vmatmul.f32.gmra.mxu0 %v758
      %v1600 = vpop.f32.mrf.mxu0
      %v1601 = vadd.f32 %v1488, %v1600
      %1602 = vmatmul.f32.gmra.mxu0 %v760
      %v1603 = vpop.f32.mrf.mxu0
      %v1604 = vadd.f32 %v1491, %v1603
      %1605 = vdwg.mxu0
      %1606 = vmatpush.msra.mxu0 %v891
      %1607 = vmatpush.msra.mxu0 %v890
      %1608 = vmatpush.msra.mxu0 %v889
      %1609 = vmatpush.msra.mxu0 %v888
      %1610 = vmatpush.msra.mxu0 %v887
      %1611 = vmatpush.msra.mxu0 %v886
      %1612 = vmatpush.msra.mxu0 %v885
      %1613 = vmatpush.msra.mxu0 %v884
      %1614 = vmatpush.msra.mxu0 %v883
      %1615 = vmatpush.msra.mxu0 %v882
      %1616 = vmatpush.msra.mxu0 %v881
      %1617 = vmatpush.msra.mxu0 %v880
      %1618 = vmatpush.msra.mxu0 %v879
      %1619 = vmatpush.msra.mxu0 %v878
      %1620 = vmatpush.msra.mxu0 %v877
      %1621 = vmatpush.msra.mxu0 %v876
      %1622 = vmatmul.f32.gmra.mxu0 %v424
      %v1623 = vpop.f32.mrf.mxu0
      %v1624 = vadd.f32 %v1511, %v1623
      %1625 = vmatmul.f32.gmra.mxu0 %v425
      %v1626 = vpop.f32.mrf.mxu0
      %v1627 = vadd.f32 %v1514, %v1626
      %1628 = vmatmul.f32.gmra.mxu0 %v427
      %v1629 = vpop.f32.mrf.mxu0
      %v1630 = vadd.f32 %v1517, %v1629
      %1631 = vmatmul.f32.gmra.mxu0 %v428
      %v1632 = vpop.f32.mrf.mxu0
      %v1633 = vadd.f32 %v1520, %v1632
      %1634 = vmatmul.f32.gmra.mxu0 %v430
      %v1635 = vpop.f32.mrf.mxu0
      %v1636 = vadd.f32 %v1523, %v1635
      %1637 = vmatmul.f32.gmra.mxu0 %v431
      %v1638 = vpop.f32.mrf.mxu0
      %v1639 = vadd.f32 %v1526, %v1638
      %1640 = vmatmul.f32.gmra.mxu0 %v433
      %v1641 = vpop.f32.mrf.mxu0
      %v1642 = vadd.f32 %v1529, %v1641
      %1643 = vmatmul.f32.gmra.mxu0 %v434
      %v1644 = vpop.f32.mrf.mxu0
      %v1645 = vadd.f32 %v1532, %v1644
      %1646 = vmatmul.f32.gmra.mxu0 %v436
      %v1647 = vpop.f32.mrf.mxu0
      %v1648 = vadd.f32 %v1535, %v1647
      %1649 = vmatmul.f32.gmra.mxu0 %v437
      %v1650 = vpop.f32.mrf.mxu0
      %v1651 = vadd.f32 %v1538, %v1650
      %1652 = vmatmul.f32.gmra.mxu0 %v439
      %v1653 = vpop.f32.mrf.mxu0
      %v1654 = vadd.f32 %v1541, %v1653
      %1655 = vmatmul.f32.gmra.mxu0 %v440
      %v1656 = vpop.f32.mrf.mxu0
      %v1657 = vadd.f32 %v1544, %v1656
      %1658 = vmatmul.f32.gmra.mxu0 %v442
      %v1659 = vpop.f32.mrf.mxu0
      %v1660 = vadd.f32 %v1547, %v1659
      %1661 = vmatmul.f32.gmra.mxu0 %v443
      %v1662 = vpop.f32.mrf.mxu0
      %v1663 = vadd.f32 %v1550, %v1662
      %1664 = vmatmul.f32.gmra.mxu0 %v445
      %v1665 = vpop.f32.mrf.mxu0
      %v1666 = vadd.f32 %v1553, %v1665
      %1667 = vmatmul.f32.gmra.mxu0 %v446
      %v1668 = vpop.f32.mrf.mxu0
      %v1669 = vadd.f32 %v1556, %v1668
      %1670 = vmatmul.f32.gmra.mxu0 %v448
      %v1671 = vpop.f32.mrf.mxu0
      %v1672 = vadd.f32 %v1559, %v1671
      %1673 = vmatmul.f32.gmra.mxu0 %v449
      %v1674 = vpop.f32.mrf.mxu0
      %v1675 = vadd.f32 %v1562, %v1674
      %1676 = vmatmul.f32.gmra.mxu0 %v451
      %v1677 = vpop.f32.mrf.mxu0
      %v1678 = vadd.f32 %v1565, %v1677
      %1679 = vmatmul.f32.gmra.mxu0 %v452
      %v1680 = vpop.f32.mrf.mxu0
      %v1681 = vadd.f32 %v1568, %v1680
      %1682 = vmatmul.f32.gmra.mxu0 %v454
      %v1683 = vpop.f32.mrf.mxu0
      %v1684 = vadd.f32 %v1571, %v1683
      %1685 = vmatmul.f32.gmra.mxu0 %v455
      %v1686 = vpop.f32.mrf.mxu0
      %v1687 = vadd.f32 %v1574, %v1686
      %1688 = vmatmul.f32.gmra.mxu0 %v457
      %v1689 = vpop.f32.mrf.mxu0
      %v1690 = vadd.f32 %v1577, %v1689
      %1691 = vmatmul.f32.gmra.mxu0 %v458
      %v1692 = vpop.f32.mrf.mxu0
      %v1693 = vadd.f32 %v1580, %v1692
      %1694 = vmatmul.f32.gmra.mxu0 %v460
      %v1695 = vpop.f32.mrf.mxu0
      %v1696 = vadd.f32 %v1583, %v1695
      %1697 = vmatmul.f32.gmra.mxu0 %v461
      %v1698 = vpop.f32.mrf.mxu0
      %v1699 = vadd.f32 %v1586, %v1698
      %1700 = vmatmul.f32.gmra.mxu0 %v463
      %v1701 = vpop.f32.mrf.mxu0
      %v1702 = vadd.f32 %v1589, %v1701
      %1703 = vmatmul.f32.gmra.mxu0 %v464
      %v1704 = vpop.f32.mrf.mxu0
      %v1705 = vadd.f32 %v1592, %v1704
      %1706 = vmatmul.f32.gmra.mxu0 %v466
      %v1707 = vpop.f32.mrf.mxu0
      %v1708 = vadd.f32 %v1595, %v1707
      %1709 = vmatmul.f32.gmra.mxu0 %v467
      %v1710 = vpop.f32.mrf.mxu0
      %v1711 = vadd.f32 %v1598, %v1710
      %1712 = vmatmul.f32.gmra.mxu0 %v469
      %v1713 = vpop.f32.mrf.mxu0
      %v1714 = vadd.f32 %v1601, %v1713
      %1715 = vmatmul.f32.gmra.mxu0 %v470
      %v1716 = vpop.f32.mrf.mxu0
      %v1717 = vadd.f32 %v1604, %v1716
      %1718 = vdwg.mxu0
      %1719 = vmatpush.msra.mxu0 %v907
      %1720 = vmatpush.msra.mxu0 %v906
      %1721 = vmatpush.msra.mxu0 %v905
      %1722 = vmatpush.msra.mxu0 %v904
      %1723 = vmatpush.msra.mxu0 %v903
      %1724 = vmatpush.msra.mxu0 %v902
      %1725 = vmatpush.msra.mxu0 %v901
      %1726 = vmatpush.msra.mxu0 %v900
      %1727 = vmatpush.msra.mxu0 %v899
      %1728 = vmatpush.msra.mxu0 %v898
      %1729 = vmatpush.msra.mxu0 %v897
      %1730 = vmatpush.msra.mxu0 %v896
      %1731 = vmatpush.msra.mxu0 %v895
      %1732 = vmatpush.msra.mxu0 %v894
      %1733 = vmatpush.msra.mxu0 %v893
      %1734 = vmatpush.msra.mxu0 %v892
      %1735 = vmatmul.f32.gmra.mxu0 %v533
      %v1736 = vpop.f32.mrf.mxu0
      %v1737 = vadd.f32 %v1624, %v1736
      %1738 = vmatmul.f32.gmra.mxu0 %v535
      %v1739 = vpop.f32.mrf.mxu0
      %v1740 = vadd.f32 %v1627, %v1739
      %1741 = vmatmul.f32.gmra.mxu0 %v538
      %v1742 = vpop.f32.mrf.mxu0
      %v1743 = vadd.f32 %v1630, %v1742
      %1744 = vmatmul.f32.gmra.mxu0 %v540
      %v1745 = vpop.f32.mrf.mxu0
      %v1746 = vadd.f32 %v1633, %v1745
      %1747 = vmatmul.f32.gmra.mxu0 %v543
      %v1748 = vpop.f32.mrf.mxu0
      %v1749 = vadd.f32 %v1636, %v1748
      %1750 = vmatmul.f32.gmra.mxu0 %v545
      %v1751 = vpop.f32.mrf.mxu0
      %v1752 = vadd.f32 %v1639, %v1751
      %1753 = vmatmul.f32.gmra.mxu0 %v548
      %v1754 = vpop.f32.mrf.mxu0
      %v1755 = vadd.f32 %v1642, %v1754
      %1756 = vmatmul.f32.gmra.mxu0 %v550
      %v1757 = vpop.f32.mrf.mxu0
      %v1758 = vadd.f32 %v1645, %v1757
      %1759 = vmatmul.f32.gmra.mxu0 %v553
      %v1760 = vpop.f32.mrf.mxu0
      %v1761 = vadd.f32 %v1648, %v1760
      %1762 = vmatmul.f32.gmra.mxu0 %v555
      %v1763 = vpop.f32.mrf.mxu0
      %v1764 = vadd.f32 %v1651, %v1763
      %1765 = vmatmul.f32.gmra.mxu0 %v558
      %v1766 = vpop.f32.mrf.mxu0
      %v1767 = vadd.f32 %v1654, %v1766
      %1768 = vmatmul.f32.gmra.mxu0 %v560
      %v1769 = vpop.f32.mrf.mxu0
      %v1770 = vadd.f32 %v1657, %v1769
      %1771 = vmatmul.f32.gmra.mxu0 %v563
      %v1772 = vpop.f32.mrf.mxu0
      %v1773 = vadd.f32 %v1660, %v1772
      %1774 = vmatmul.f32.gmra.mxu0 %v565
      %v1775 = vpop.f32.mrf.mxu0
      %v1776 = vadd.f32 %v1663, %v1775
      %1777 = vmatmul.f32.gmra.mxu0 %v568
      %v1778 = vpop.f32.mrf.mxu0
      %v1779 = vadd.f32 %v1666, %v1778
      %1780 = vmatmul.f32.gmra.mxu0 %v570
      %v1781 = vpop.f32.mrf.mxu0
      %v1782 = vadd.f32 %v1669, %v1781
      %1783 = vmatmul.f32.gmra.mxu0 %v573
      %v1784 = vpop.f32.mrf.mxu0
      %v1785 = vadd.f32 %v1672, %v1784
      %1786 = vmatmul.f32.gmra.mxu0 %v575
      %v1787 = vpop.f32.mrf.mxu0
      %v1788 = vadd.f32 %v1675, %v1787
      %1789 = vmatmul.f32.gmra.mxu0 %v578
      %v1790 = vpop.f32.mrf.mxu0
      %v1791 = vadd.f32 %v1678, %v1790
      %1792 = vmatmul.f32.gmra.mxu0 %v580
      %v1793 = vpop.f32.mrf.mxu0
      %v1794 = vadd.f32 %v1681, %v1793
      %1795 = vmatmul.f32.gmra.mxu0 %v583
      %v1796 = vpop.f32.mrf.mxu0
      %v1797 = vadd.f32 %v1684, %v1796
      %1798 = vmatmul.f32.gmra.mxu0 %v585
      %v1799 = vpop.f32.mrf.mxu0
      %v1800 = vadd.f32 %v1687, %v1799
      %1801 = vmatmul.f32.gmra.mxu0 %v588
      %v1802 = vpop.f32.mrf.mxu0
      %v1803 = vadd.f32 %v1690, %v1802
      %1804 = vmatmul.f32.gmra.mxu0 %v590
      %v1805 = vpop.f32.mrf.mxu0
      %v1806 = vadd.f32 %v1693, %v1805
      %1807 = vmatmul.f32.gmra.mxu0 %v593
      %v1808 = vpop.f32.mrf.mxu0
      %v1809 = vadd.f32 %v1696, %v1808
      %1810 = vmatmul.f32.gmra.mxu0 %v595
      %v1811 = vpop.f32.mrf.mxu0
      %v1812 = vadd.f32 %v1699, %v1811
      %1813 = vmatmul.f32.gmra.mxu0 %v598
      %v1814 = vpop.f32.mrf.mxu0
      %v1815 = vadd.f32 %v1702, %v1814
      %1816 = vmatmul.f32.gmra.mxu0 %v600
      %v1817 = vpop.f32.mrf.mxu0
      %v1818 = vadd.f32 %v1705, %v1817
      %1819 = vmatmul.f32.gmra.mxu0 %v751
      %v1820 = vpop.f32.mrf.mxu0
      %v1821 = vadd.f32 %v1708, %v1820
      %1822 = vmatmul.f32.gmra.mxu0 %v753
      %v1823 = vpop.f32.mrf.mxu0
      %v1824 = vadd.f32 %v1711, %v1823
      %1825 = vmatmul.f32.gmra.mxu0 %v768
      %v1826 = vpop.f32.mrf.mxu0
      %v1827 = vadd.f32 %v1714, %v1826
      %1828 = vmatmul.f32.gmra.mxu0 %v770
      %v1829 = vpop.f32.mrf.mxu0
      %v1830 = vadd.f32 %v1717, %v1829
      %1831 = vdwg.mxu0
      %1832 = vmatpush.msra.mxu0 %v923
      %1833 = vmatpush.msra.mxu0 %v922
      %1834 = vmatpush.msra.mxu0 %v921
      %1835 = vmatpush.msra.mxu0 %v920
      %1836 = vmatpush.msra.mxu0 %v919
      %1837 = vmatpush.msra.mxu0 %v918
      %1838 = vmatpush.msra.mxu0 %v917
      %1839 = vmatpush.msra.mxu0 %v916
      %1840 = vmatpush.msra.mxu0 %v915
      %1841 = vmatpush.msra.mxu0 %v914
      %1842 = vmatpush.msra.mxu0 %v913
      %1843 = vmatpush.msra.mxu0 %v912
      %1844 = vmatpush.msra.mxu0 %v911
      %1845 = vmatpush.msra.mxu0 %v910
      %1846 = vmatpush.msra.mxu0 %v909
      %1847 = vmatpush.msra.mxu0 %v908
      %1848 = vmatmul.f32.gmra.mxu0 %v646
      %v1849 = vpop.f32.mrf.mxu0
      %v1850 = vadd.f32 %v1737, %v1849
      %1851 = vmatmul.f32.gmra.mxu0 %v648
      %v1852 = vpop.f32.mrf.mxu0
      %v1853 = vadd.f32 %v1740, %v1852
      %1854 = vmatmul.f32.gmra.mxu0 %v651
      %v1855 = vpop.f32.mrf.mxu0
      %v1856 = vadd.f32 %v1743, %v1855
      %1857 = vmatmul.f32.gmra.mxu0 %v653
      %v1858 = vpop.f32.mrf.mxu0
      %v1859 = vadd.f32 %v1746, %v1858
      %1860 = vmatmul.f32.gmra.mxu0 %v656
      %v1861 = vpop.f32.mrf.mxu0
      %v1862 = vadd.f32 %v1749, %v1861
      %1863 = vmatmul.f32.gmra.mxu0 %v658
      %v1864 = vpop.f32.mrf.mxu0
      %v1865 = vadd.f32 %v1752, %v1864
      %1866 = vmatmul.f32.gmra.mxu0 %v661
      %v1867 = vpop.f32.mrf.mxu0
      %v1868 = vadd.f32 %v1755, %v1867
      %1869 = vmatmul.f32.gmra.mxu0 %v663
      %v1870 = vpop.f32.mrf.mxu0
      %v1871 = vadd.f32 %v1758, %v1870
      %1872 = vmatmul.f32.gmra.mxu0 %v666
      %v1873 = vpop.f32.mrf.mxu0
      %v1874 = vadd.f32 %v1761, %v1873
      %1875 = vmatmul.f32.gmra.mxu0 %v668
      %v1876 = vpop.f32.mrf.mxu0
      %v1877 = vadd.f32 %v1764, %v1876
      %1878 = vmatmul.f32.gmra.mxu0 %v671
      %v1879 = vpop.f32.mrf.mxu0
      %v1880 = vadd.f32 %v1767, %v1879
      %1881 = vmatmul.f32.gmra.mxu0 %v673
      %v1882 = vpop.f32.mrf.mxu0
      %v1883 = vadd.f32 %v1770, %v1882
      %1884 = vmatmul.f32.gmra.mxu0 %v676
      %v1885 = vpop.f32.mrf.mxu0
      %v1886 = vadd.f32 %v1773, %v1885
      %1887 = vmatmul.f32.gmra.mxu0 %v678
      %v1888 = vpop.f32.mrf.mxu0
      %v1889 = vadd.f32 %v1776, %v1888
      %1890 = vmatmul.f32.gmra.mxu0 %v681
      %v1891 = vpop.f32.mrf.mxu0
      %v1892 = vadd.f32 %v1779, %v1891
      %1893 = vmatmul.f32.gmra.mxu0 %v683
      %v1894 = vpop.f32.mrf.mxu0
      %v1895 = vadd.f32 %v1782, %v1894
      %1896 = vmatmul.f32.gmra.mxu0 %v686
      %v1897 = vpop.f32.mrf.mxu0
      %v1898 = vadd.f32 %v1785, %v1897
      %1899 = vmatmul.f32.gmra.mxu0 %v688
      %v1900 = vpop.f32.mrf.mxu0
      %v1901 = vadd.f32 %v1788, %v1900
      %1902 = vmatmul.f32.gmra.mxu0 %v691
      %v1903 = vpop.f32.mrf.mxu0
      %v1904 = vadd.f32 %v1791, %v1903
      %1905 = vmatmul.f32.gmra.mxu0 %v693
      %v1906 = vpop.f32.mrf.mxu0
      %v1907 = vadd.f32 %v1794, %v1906
      %1908 = vmatmul.f32.gmra.mxu0 %v696
      %v1909 = vpop.f32.mrf.mxu0
      %v1910 = vadd.f32 %v1797, %v1909
      %1911 = vmatmul.f32.gmra.mxu0 %v698
      %v1912 = vpop.f32.mrf.mxu0
      %v1913 = vadd.f32 %v1800, %v1912
      %1914 = vmatmul.f32.gmra.mxu0 %v701
      %v1915 = vpop.f32.mrf.mxu0
      %v1916 = vadd.f32 %v1803, %v1915
      %1917 = vmatmul.f32.gmra.mxu0 %v703
      %v1918 = vpop.f32.mrf.mxu0
      %v1919 = vadd.f32 %v1806, %v1918
      %1920 = vmatmul.f32.gmra.mxu0 %v706
      %v1921 = vpop.f32.mrf.mxu0
      %v1922 = vadd.f32 %v1809, %v1921
      %1923 = vmatmul.f32.gmra.mxu0 %v708
      %v1924 = vpop.f32.mrf.mxu0
      %v1925 = vadd.f32 %v1812, %v1924
      %1926 = vmatmul.f32.gmra.mxu0 %v711
      %v1927 = vpop.f32.mrf.mxu0
      %v1928 = vadd.f32 %v1815, %v1927
      %1929 = vmatmul.f32.gmra.mxu0 %v713
      %v1930 = vpop.f32.mrf.mxu0
      %v1931 = vadd.f32 %v1818, %v1930
      %1932 = vmatmul.f32.gmra.mxu0 %v758
      %v1933 = vpop.f32.mrf.mxu0
      %v1934 = vadd.f32 %v1821, %v1933
      %1935 = vmatmul.f32.gmra.mxu0 %v760
      %v1936 = vpop.f32.mrf.mxu0
      %v1937 = vadd.f32 %v1824, %v1936
      %1938 = vmatmul.f32.gmra.mxu0 %v775
      %v1939 = vpop.f32.mrf.mxu0
      %v1940 = vadd.f32 %v1827, %v1939
      %1941 = vmatmul.f32.gmra.mxu0 %v777
      %v1942 = vpop.f32.mrf.mxu0
      %v1943 = vadd.f32 %v1830, %v1942
      %1944 = vdwg.mxu0
      %1945 = vst [vmem:[%s267] sm:$0xff] %v1850
      %1946 = vst [vmem:[%s267 + $0x8] sm:$0xff] %v1853
      %1947 = vst [vmem:[%s267 + $0x10] sm:$0xff] %v1856
      %1948 = vst [vmem:[%s267 + $0x18] sm:$0xff] %v1859
      %1949 = vst [vmem:[%s267 + $0x20] sm:$0xff] %v1862
      %1950 = vst [vmem:[%s267 + $0x28] sm:$0xff] %v1865
      %1951 = vst [vmem:[%s267 + $0x30] sm:$0xff] %v1868
      %1952 = vst [vmem:[%s267 + $0x38] sm:$0xff] %v1871
      %1953 = vst [vmem:[%s267 + $0x40] sm:$0xff] %v1874
      %1954 = vst [vmem:[%s267 + $0x48] sm:$0xff] %v1877
      %1955 = vst [vmem:[%s267 + $0x50] sm:$0xff] %v1880
      %1956 = vst [vmem:[%s267 + $0x58] sm:$0xff] %v1883
      %1957 = vst [vmem:[%s267 + $0x60] sm:$0xff] %v1886
      %1958 = vst [vmem:[%s267 + $0x68] sm:$0xff] %v1889
      %1959 = vst [vmem:[%s267 + $0x70] sm:$0xff] %v1892
      %1960 = vst [vmem:[%s267 + $0x78] sm:$0xff] %v1895
      %1961 = vst [vmem:[%s267 + $0x80] sm:$0xff] %v1898
      %1962 = vst [vmem:[%s267 + $0x88] sm:$0xff] %v1901
      %1963 = vst [vmem:[%s267 + $0x90] sm:$0xff] %v1904
      %1964 = vst [vmem:[%s267 + $0x98] sm:$0xff] %v1907
      %1965 = vst [vmem:[%s267 + $0xa0] sm:$0xff] %v1910
      %1966 = vst [vmem:[%s267 + $0xa8] sm:$0xff] %v1913
      %1967 = vst [vmem:[%s267 + $0xb0] sm:$0xff] %v1916
      %1968 = vst [vmem:[%s267 + $0xb8] sm:$0xff] %v1919
      %1969 = vst [vmem:[%s267 + $0xc0] sm:$0xff] %v1922
      %1970 = vst [vmem:[%s267 + $0xc8] sm:$0xff] %v1925
      %1971 = vst [vmem:[%s267 + $0xd0] sm:$0xff] %v1928
      %1972 = vst [vmem:[%s267 + $0xd8] sm:$0xff] %v1931
      %1973 = vst [vmem:[%s267 + $0xe0] sm:$0xff] %v1934
      %1974 = vst [vmem:[%s267 + $0xe8] sm:$0xff] %v1937
      %1975 = vst [vmem:[%s267 + $0xf0] sm:$0xff] %v1940
      %1976 = vst [vmem:[%s267 + $0xf8] sm:$0xff] %v1943
      %v1977 = vadd.f32 %v1850, %v1853
      %v1978 = vadd.f32 %v1977, %v1856
      %v1979 = vadd.f32 %v1978, %v1859
      %v1980 = vadd.f32 %v1979, %v1862
      %v1981 = vadd.f32 %v1980, %v1865
      %v1982 = vadd.f32 %v1981, %v1868
      %v1983 = vadd.f32 %v1982, %v1871
      %v1984 = vadd.f32 %v1983, %v1874
      %v1985 = vadd.f32 %v1984, %v1877
      %v1986 = vadd.f32 %v1985, %v1880
      %v1987 = vadd.f32 %v1986, %v1883
      %v1988 = vadd.f32 %v1987, %v1886
      %v1989 = vadd.f32 %v1988, %v1889
      %v1990 = vadd.f32 %v1989, %v1892
      %v1991 = vadd.f32 %v1990, %v1895
      %v1992 = vadd.f32 %v1991, %v1898
      %v1993 = vadd.f32 %v1992, %v1901
      %v1994 = vadd.f32 %v1993, %v1904
      %v1995 = vadd.f32 %v1994, %v1907
      %v1996 = vadd.f32 %v1995, %v1910
      %v1997 = vadd.f32 %v1996, %v1913
      %v1998 = vadd.f32 %v1997, %v1916
      %v1999 = vadd.f32 %v1998, %v1919
      %v2000 = vadd.f32 %v1999, %v1922
      %v2001 = vadd.f32 %v2000, %v1925
      %v2002 = vadd.f32 %v2001, %v1928
      %v2003 = vadd.f32 %v2002, %v1931
      %v2004 = vadd.f32 %v2003, %v1934
      %v2005 = vadd.f32 %v2004, %v1937
      %v2006 = vadd.f32 %v2005, %v1940
      %v2007 = vadd.f32 %v2006, %v1943
      %v2008 = vrot.slane %v2007, 4
      %v2009 = vadd.f32 %v2007, %v2008
      %v2010 = vrot.slane %v2009, 2
      %v2011 = vadd.f32 %v2009, %v2010
      %v2012 = vrot.slane %v2011, 1
      %v2013 = vadd.f32 %v2011, %v2012
      %v2014 = vmul.f32 %v1850, %v1850
      %v2015 = vmul.f32 %v1853, %v1853
      %v2016 = vmul.f32 %v1856, %v1856
      %v2017 = vmul.f32 %v1859, %v1859
      %v2018 = vmul.f32 %v1862, %v1862
      %v2019 = vmul.f32 %v1865, %v1865
      %v2020 = vmul.f32 %v1868, %v1868
      %v2021 = vmul.f32 %v1871, %v1871
      %v2022 = vmul.f32 %v1874, %v1874
      %v2023 = vmul.f32 %v1877, %v1877
      %v2024 = vmul.f32 %v1880, %v1880
      %v2025 = vmul.f32 %v1883, %v1883
      %v2026 = vmul.f32 %v1886, %v1886
      %v2027 = vmul.f32 %v1889, %v1889
      %v2028 = vmul.f32 %v1892, %v1892
      %v2029 = vmul.f32 %v1895, %v1895
      %v2030 = vmul.f32 %v1898, %v1898
      %v2031 = vmul.f32 %v1901, %v1901
      %v2032 = vmul.f32 %v1904, %v1904
      %v2033 = vmul.f32 %v1907, %v1907
      %v2034 = vmul.f32 %v1910, %v1910
      %v2035 = vmul.f32 %v1913, %v1913
      %v2036 = vmul.f32 %v1916, %v1916
      %v2037 = vmul.f32 %v1919, %v1919
      %v2038 = vmul.f32 %v1922, %v1922
      %v2039 = vmul.f32 %v1925, %v1925
      %v2040 = vmul.f32 %v1928, %v1928
      %v2041 = vmul.f32 %v1931, %v1931
      %v2042 = vmul.f32 %v1934, %v1934
      %v2043 = vmul.f32 %v1937, %v1937
      %v2044 = vmul.f32 %v1940, %v1940
      %v2045 = vmul.f32 %v1943, %v1943
      %v2046 = vadd.f32 %v2014, %v2015
      %v2047 = vadd.f32 %v2046, %v2016
      %v2048 = vadd.f32 %v2047, %v2017
      %v2049 = vadd.f32 %v2048, %v2018
      %v2050 = vadd.f32 %v2049, %v2019
      %v2051 = vadd.f32 %v2050, %v2020
      %v2052 = vadd.f32 %v2051, %v2021
      %v2053 = vadd.f32 %v2052, %v2022
      %v2054 = vadd.f32 %v2053, %v2023
      %v2055 = vadd.f32 %v2054, %v2024
      %v2056 = vadd.f32 %v2055, %v2025
      %v2057 = vadd.f32 %v2056, %v2026
      %v2058 = vadd.f32 %v2057, %v2027
      %v2059 = vadd.f32 %v2058, %v2028
      %v2060 = vadd.f32 %v2059, %v2029
      %v2061 = vadd.f32 %v2060, %v2030
      %v2062 = vadd.f32 %v2061, %v2031
      %v2063 = vadd.f32 %v2062, %v2032
      %v2064 = vadd.f32 %v2063, %v2033
      %v2065 = vadd.f32 %v2064, %v2034
      %v2066 = vadd.f32 %v2065, %v2035
      %v2067 = vadd.f32 %v2066, %v2036
      %v2068 = vadd.f32 %v2067, %v2037
      %v2069 = vadd.f32 %v2068, %v2038
      %v2070 = vadd.f32 %v2069, %v2039
      %v2071 = vadd.f32 %v2070, %v2040
      %v2072 = vadd.f32 %v2071, %v2041
      %v2073 = vadd.f32 %v2072, %v2042
      %v2074 = vadd.f32 %v2073, %v2043
      %v2075 = vadd.f32 %v2074, %v2044
      %v2076 = vadd.f32 %v2075, %v2045
      %v2077 = vrot.slane %v2076, 4
      %v2078 = vadd.f32 %v2076, %v2077
      %v2079 = vrot.slane %v2078, 2
      %v2080 = vadd.f32 %v2078, %v2079
      %v2081 = vrot.slane %v2080, 1
      %v2082 = vadd.f32 %v2080, %v2081
      %p2083 = scmp.eq.s32.totalorder %s24, 0
      // Predicated region
      $region59: #{double_conv_forward.3} parent=35 // pred_check
        %p2084 = pneg %p2083
      $region60: #{double_conv_forward.3} parent=35 // pred_check_branch
        %2086 = sbr.rel (%p2084) target = $region62
      $region61: #{double_conv_forward.3} parent=35 // pred_region
        %2087 = vst [vmem:[%s271] sm:$0x1] 0.0
        %2088 = vst [vmem:[%s274] sm:$0x1] 0.0
      $region62: #{double_conv_forward.3} parent=35 // pred_fallthru
        _
      %v2089 = vld [vmem:[%s271] sm:$0x1]
      %v2090 = vadd.f32 %v2089, %v2013
      %2091 = vst [vmem:[%s271] sm:$0x1] %v2090
      %v2092 = vld [vmem:[%s274] sm:$0x1]
      %v2093 = vadd.f32 %v2092, %v2082
      %2094 = vst [vmem:[%s274] sm:$0x1] %v2093
      %s2095 = smul.u32 16, %s24
      %p2096 = scmp.lt.s32.totalorder %s23, 1
      %s2097 = scalar_select %p2096, %s23, 1
      %p2098 = scmp.lt.s32.totalorder %s2095, 15
      %s2099 = scalar_select %p2098, %s2095, 15
      %s2100 = smul.addr %s2099, 2
      %s2101 = smul.addr %s2097, 32
      %s2102 = sadd.s32 %s2100, %s2101
      %s2103 = smul.addr %s2102, 8
      %s2104 = scalar_lea.vmem %s5, %s2103
      %p2105 = scmp.lt.s32.totalorder %s23, 1
      %s2106 = scalar_select %p2105, %s23, 1
      %s2107 = scalar_lea.vmem %s6, %s2106
      %p2108 = scmp.lt.s32.totalorder %s23, 1
      %s2109 = scalar_select %p2108, %s23, 1
      %s2110 = scalar_lea.vmem %s7, %s2109
      // Predicated region
      $region63: #{double_conv_forward.3} parent=35 // pred_check
        %p2111 = pneg %p135
      $region64: #{double_conv_forward.3} parent=35 // pred_check_branch
        %2113 = sbr.rel (%p2111) target = $region66
      $region65: #{double_conv_forward.3} parent=35 // pred_region
        %s2114 = smul.u32 16, %s24
      $region66: #{double_conv_forward.3} parent=35 // pred_fallthru
        _
      // Predicated region
      $region67: #{double_conv_forward.3} parent=35 // pred_check
        %p2115 = pneg %p161
      $region68: #{double_conv_forward.3} parent=35 // pred_check_branch
        %2117 = sbr.rel (%p2115) target = $region70
      $region69: #{double_conv_forward.3} parent=35 // pred_region
        _
      $region70: #{double_conv_forward.3} parent=35 // pred_fallthru
        _
      // Predicated region
      $region71: #{double_conv_forward.3} parent=35 // pred_check
        %p2118 = pneg %p187
      $region72: #{double_conv_forward.3} parent=35 // pred_check_branch
        %2120 = sbr.rel (%p2118) target = $region74
      $region73: #{double_conv_forward.3} parent=35 // pred_region
        _
      $region74: #{double_conv_forward.3} parent=35 // pred_fallthru
        _
    $region36: #{double_conv_forward.3} parent=5 // pred_fallthru
      _
    %p2121 = scmp.le.s32.totalorder 2, %s14
    // Predicated region
    $region75: #{double_conv_forward.3} parent=5 // pred_check
      %p2122 = pneg %p2121
    $region76: #{double_conv_forward.3} parent=5 // pred_check_branch
      %2124 = sbr.rel (%p2122) target = $region78
    $region77: #{double_conv_forward.3} parent=5 // pred_region
      %s2125 = ssub.s32 %s14, 2
      // Predicated region
      $region79: #{double_conv_forward.3} parent=77 // pred_check
        %p2126 = pneg %p141
      $region80: #{double_conv_forward.3} parent=77 // pred_check_branch
        %2128 = sbr.rel (%p2126) target = $region82
      $region81: #{double_conv_forward.3} parent=77 // pred_region
        %s2129 = smul.u32 16, %s26
        %p2130 = scmp.lt.s32.totalorder %s25, 1
        %s2131 = scalar_select %p2130, %s25, 1
        %p2132 = scmp.lt.s32.totalorder %s2129, 15
        %s2133 = scalar_select %p2132, %s2129, 15
        %s2134 = smul.addr %s2133, 2
        %s2135 = smul.addr %s2131, 32
        %s2136 = sadd.s32 %s2134, %s2135
        %s2137 = smul.addr %s2136, 8
        %s2138 = scalar_lea.vmem %s5, %s2137
      $region82: #{double_conv_forward.3} parent=77 // pred_fallthru
        _
      // Predicated region
      $region83: #{double_conv_forward.3} parent=77 // pred_check
        %p2139 = pneg %p167
      $region84: #{double_conv_forward.3} parent=77 // pred_check_branch
        %2141 = sbr.rel (%p2139) target = $region86
      $region85: #{double_conv_forward.3} parent=77 // pred_region
        %p2142 = scmp.lt.s32.totalorder %s25, 1
        %s2143 = scalar_select %p2142, %s25, 1
        %s2144 = scalar_lea.vmem %s6, %s2143
      $region86: #{double_conv_forward.3} parent=77 // pred_fallthru
        _
      // Predicated region
      $region87: #{double_conv_forward.3} parent=77 // pred_check
        %p2145 = pneg %p193
      $region88: #{double_conv_forward.3} parent=77 // pred_check_branch
        %2147 = sbr.rel (%p2145) target = $region90
      $region89: #{double_conv_forward.3} parent=77 // pred_region
        %p2148 = scmp.lt.s32.totalorder %s25, 1
        %s2149 = scalar_select %p2148, %s25, 1
        %s2150 = scalar_lea.vmem %s7, %s2149
      $region90: #{double_conv_forward.3} parent=77 // pred_fallthru
        _
    $region78: #{double_conv_forward.3} parent=5 // pred_fallthru
      _
  $region6: #{double_conv_forward.3} parent=0 // loop_footer
    %s18 = sadd.s32 1, %s14
  $region7: #{double_conv_forward.3} parent=0 // loop_footer_branch
    %13 = sbr.rel target = $region3
  $region8: #{double_conv_forward.3} parent=0 // loop_exit
    _
  %2151 = vsyncmov [#allocation3]
  %s2152 = vpop.sfrf %2151
  %p2153 = scmp.eq.s32.totalorder %s2152, 0
  %p2154 = pneg %p2153
  %2156 = shalt.err (%p2154)

// kernel: double_conv_forward.4
$region0: #{double_conv_forward.4}
  #allocation0 [shape = 'u32[]', space=smem, size = 0x4, offset = 0x4, fixed_abs, tag = 'smem constant byte address 0x4 - core index']
  #allocation1 [shape = 'u32[72,128]{1,0:T(1,128)}', space=vmem, size = 0x9000, scoped, tag = 'internal scratch']
  #allocation2 [shape = 'f32[18,18,128]{2,1,0:T(8,128)}', space=vmem, size = 0x36000, scoped, tag = 'scratch operand']
  #allocation3 [shape = 's32[1]{0}', space=sflag, size = 0x4, scoped, tag = 'scratch operand']
  #allocation4 [shape = 's32[]', space=sflag, size = 0x4, offset = 0, fixed_abs, tag = 'sflag constant byte address 0x0 - dummy sync flag']
  %s0 = inlined_call_operand.vmem [shape: f32[1,128], index: 0, kind: input, shape index: {}]
  %s1 = inlined_call_operand.vmem [shape: f32[1,128], index: 1, kind: input, shape index: {}]
  %s2 = inlined_call_operand.vmem [shape: f32[1152,128], index: 2, kind: input, shape index: {}]
  %s3 = inlined_call_operand.vmem [shape: f32[1,128], index: 3, kind: input, shape index: {}]
  %s4 = inlined_call_operand.vmem [shape: f32[2,18,18,128], index: 4, kind: input, shape index: {}]
  %s5 = inlined_call_operand.vmem [shape: f32[2,16,16,128], index: 5, kind: output, shape index: {0}]
  %s6 = inlined_call_operand.vmem [shape: f32[2,1,128], index: 6, kind: output, shape index: {1}]
  %s7 = inlined_call_operand.vmem [shape: f32[2,1,128], index: 7, kind: output, shape index: {2}]
  %8 = xla_tuple %s5, %s6, %s7
  %s9 = sld [smem:[#allocation0]]
  $region91: #{double_conv_forward.4} parent=0
    _
  %s11 = ssub.s32 1, %s9
  %s12 = scalar_select 0, %s11, %s9
  loop: start=0, step=1, limit=4
  $region2: #{double_conv_forward.4} parent=0 // loop_pre_header
    _
  $region3: #{double_conv_forward.4} parent=0 // loop_header
    %s14 = sphi 0, %s18
    %p15 = scmp.ge.s32.totalorder %s14, 4
    %s21 = sphi 0, %s33
    %s22 = sphi 0, %s29
    %s23 = sphi 0, %s21
    %s24 = sphi 0, %s22
    %s25 = sphi 0, %s23
    %s26 = sphi 0, %s24
    %s34 = sphi 0, %s34
    %s36 = sphi 0, %s34
    %s37 = sphi 0, %s36
    %s51 = sphi 0, %s37
    %s55 = sphi 0, %s55
    %s57 = sphi 0, %s55
    %s58 = sphi 0, %s57
    %s72 = sphi 0, %s58
    %s76 = sphi 0, %s76
    %s78 = sphi 0, %s76
    %s79 = sphi 0, %s78
    %s93 = sphi 0, %s79
    %s97 = sphi 0, %s97
    %s99 = sphi 0, %s97
    %s100 = sphi 0, %s99
    %s114 = sphi 0, %s100
    %s122 = sphi 0, %s124
    %s125 = sphi 0, %s122
    %s126 = sphi 0, %s125
    %s142 = sphi 0, %s126
    %s148 = sphi 0, %s150
    %s151 = sphi 0, %s148
    %s152 = sphi 0, %s151
    %s168 = sphi 0, %s152
    %s174 = sphi 0, %s176
    %s177 = sphi 0, %s174
    %s178 = sphi 0, %s177
    %s194 = sphi 0, %s178
  $region4: #{double_conv_forward.4} parent=0 // loop_header_branch
    %17 = sbr.rel (%p15) target = $region8
  $region5: #{double_conv_forward.4} parent=0 // loop_body
    %s19 = ssub.s32 %s14, 1
    %s20 = ssub.s32 %s14, 2
    %s27 = sadd.s32 1, %s22
    %p28 = scmp.ge.s32.totalorder %s27, 1
    %s29 = scalar_select %p28, 0, %s27
    %s30 = sadd.s32 1, %s21
    %s31 = scalar_select %p28, %s30, %s21
    %p32 = scmp.ge.s32.totalorder %s31, 2
    %s33 = scalar_select %p32, 0, %s31
    %s35 = sadd.s32 %s34, 1
    %p38 = scmp.eq.s32.totalorder %s14, 1
    %p39 = scmp.ne.s32.totalorder %s34, %s36
    %p40 = scmp.eq.s32.totalorder %s14, 0
    %p41 = por %p39, %p40
    %p42 = scmp.ne.s32.totalorder %s34, %s36
    %p43 = scmp.eq.s32.totalorder %s19, 1
    %p44 = por %p42, %p43
    %p45 = scmp.ne.s32.totalorder %s36, %s37
    %p46 = scmp.eq.s32.totalorder %s19, 0
    %p47 = por %p45, %p46
    %p48 = scmp.ne.s32.totalorder %s36, %s37
    %p49 = scmp.eq.s32.totalorder %s20, 1
    %p50 = por %p48, %p49
    %p52 = scmp.ne.s32.totalorder %s37, %s51
    %p53 = scmp.eq.s32.totalorder %s20, 0
    %p54 = por %p52, %p53
    %s56 = sadd.s32 %s55, 1
    %p59 = scmp.eq.s32.totalorder %s14, 1
    %p60 = scmp.ne.s32.totalorder %s55, %s57
    %p61 = scmp.eq.s32.totalorder %s14, 0
    %p62 = por %p60, %p61
    %p63 = scmp.ne.s32.totalorder %s55, %s57
    %p64 = scmp.eq.s32.totalorder %s19, 1
    %p65 = por %p63, %p64
    %p66 = scmp.ne.s32.totalorder %s57, %s58
    %p67 = scmp.eq.s32.totalorder %s19, 0
    %p68 = por %p66, %p67
    %p69 = scmp.ne.s32.totalorder %s57, %s58
    %p70 = scmp.eq.s32.totalorder %s20, 1
    %p71 = por %p69, %p70
    %p73 = scmp.ne.s32.totalorder %s58, %s72
    %p74 = scmp.eq.s32.totalorder %s20, 0
    %p75 = por %p73, %p74
    %s77 = sadd.s32 %s76, 1
    %p80 = scmp.eq.s32.totalorder %s14, 1
    %p81 = scmp.ne.s32.totalorder %s76, %s78
    %p82 = scmp.eq.s32.totalorder %s14, 0
    %p83 = por %p81, %p82
    %p84 = scmp.ne.s32.totalorder %s76, %s78
    %p85 = scmp.eq.s32.totalorder %s19, 1
    %p86 = por %p84, %p85
    %p87 = scmp.ne.s32.totalorder %s78, %s79
    %p88 = scmp.eq.s32.totalorder %s19, 0
    %p89 = por %p87, %p88
    %p90 = scmp.ne.s32.totalorder %s78, %s79
    %p91 = scmp.eq.s32.totalorder %s20, 1
    %p92 = por %p90, %p91
    %p94 = scmp.ne.s32.totalorder %s79, %s93
    %p95 = scmp.eq.s32.totalorder %s20, 0
    %p96 = por %p94, %p95
    %s98 = sadd.s32 %s97, 1
    %p101 = scmp.eq.s32.totalorder %s14, 1
    %p102 = scmp.ne.s32.totalorder %s97, %s99
    %p103 = scmp.eq.s32.totalorder %s14, 0
    %p104 = por %p102, %p103
    %p105 = scmp.ne.s32.totalorder %s97, %s99
    %p106 = scmp.eq.s32.totalorder %s19, 1
    %p107 = por %p105, %p106
    %p108 = scmp.ne.s32.totalorder %s99, %s100
    %p109 = scmp.eq.s32.totalorder %s19, 0
    %p110 = por %p108, %p109
    %p111 = scmp.ne.s32.totalorder %s99, %s100
    %p112 = scmp.eq.s32.totalorder %s20, 1
    %p113 = por %p111, %p112
    %p115 = scmp.ne.s32.totalorder %s100, %s114
    %p116 = scmp.eq.s32.totalorder %s20, 0
    %p117 = por %p115, %p116
    %s118 = ssub.s32 %s21, %s33
    %s119 = ssub.s32 %s22, %s29
    %s120 = sor.u32 %s118, %s119
    %p121 = scmp.eq.s32.totalorder %s120, 0
    %s123 = sadd.s32 %s122, 1
    %s124 = scalar_select %p121, %s122, %s123
    %p127 = pneg %p121
    %p128 = scmp.eq.s32.totalorder %s14, 1
    %p129 = por %p127, %p128
    %p130 = scmp.ne.s32.totalorder %s122, %s125
    %p131 = scmp.eq.s32.totalorder %s14, 0
    %p132 = por %p130, %p131
    %p133 = scmp.ne.s32.totalorder %s122, %s125
    %p134 = scmp.eq.s32.totalorder %s19, 1
    %p135 = por %p133, %p134
    %p136 = scmp.ne.s32.totalorder %s125, %s126
    %p137 = scmp.eq.s32.totalorder %s19, 0
    %p138 = por %p136, %p137
    %p139 = scmp.ne.s32.totalorder %s125, %s126
    %p140 = scmp.eq.s32.totalorder %s20, 1
    %p141 = por %p139, %p140
    %p143 = scmp.ne.s32.totalorder %s126, %s142
    %p144 = scmp.eq.s32.totalorder %s20, 0
    %p145 = por %p143, %p144
    %s146 = ssub.s32 %s21, %s33
    %p147 = scmp.eq.s32.totalorder %s146, 0
    %s149 = sadd.s32 %s148, 1
    %s150 = scalar_select %p147, %s148, %s149
    %p153 = pneg %p147
    %p154 = scmp.eq.s32.totalorder %s14, 1
    %p155 = por %p153, %p154
    %p156 = scmp.ne.s32.totalorder %s148, %s151
    %p157 = scmp.eq.s32.totalorder %s14, 0
    %p158 = por %p156, %p157
    %p159 = scmp.ne.s32.totalorder %s148, %s151
    %p160 = scmp.eq.s32.totalorder %s19, 1
    %p161 = por %p159, %p160
    %p162 = scmp.ne.s32.totalorder %s151, %s152
    %p163 = scmp.eq.s32.totalorder %s19, 0
    %p164 = por %p162, %p163
    %p165 = scmp.ne.s32.totalorder %s151, %s152
    %p166 = scmp.eq.s32.totalorder %s20, 1
    %p167 = por %p165, %p166
    %p169 = scmp.ne.s32.totalorder %s152, %s168
    %p170 = scmp.eq.s32.totalorder %s20, 0
    %p171 = por %p169, %p170
    %s172 = ssub.s32 %s21, %s33
    %p173 = scmp.eq.s32.totalorder %s172, 0
    %s175 = sadd.s32 %s174, 1
    %s176 = scalar_select %p173, %s174, %s175
    %p179 = pneg %p173
    %p180 = scmp.eq.s32.totalorder %s14, 1
    %p181 = por %p179, %p180
    %p182 = scmp.ne.s32.totalorder %s174, %s177
    %p183 = scmp.eq.s32.totalorder %s14, 0
    %p184 = por %p182, %p183
    %p185 = scmp.ne.s32.totalorder %s174, %s177
    %p186 = scmp.eq.s32.totalorder %s19, 1
    %p187 = por %p185, %p186
    %p188 = scmp.ne.s32.totalorder %s177, %s178
    %p189 = scmp.eq.s32.totalorder %s19, 0
    %p190 = por %p188, %p189
    %p191 = scmp.ne.s32.totalorder %s177, %s178
    %p192 = scmp.eq.s32.totalorder %s20, 1
    %p193 = por %p191, %p192
    %p195 = scmp.ne.s32.totalorder %s178, %s194
    %p196 = scmp.eq.s32.totalorder %s20, 0
    %p197 = por %p195, %p196
    %p198 = scmp.le.s32.totalorder 1, %s14
    %p199 = scmp.lt.s32.totalorder %s14, 3
    %p200 = pnand %p198, %p199
    %p201 = pneg %p200
    // Predicated region
    $region9: #{double_conv_forward.4} parent=5 // pred_check
      _
    $region10: #{double_conv_forward.4} parent=5 // pred_check_branch
      %203 = sbr.rel (%p200) target = $region12
    $region11: #{double_conv_forward.4} parent=5 // pred_region
      %s204 = ssub.s32 %s14, 1
      // Predicated region
      $region13: #{double_conv_forward.4} parent=11 // pred_check
        %p205 = pneg %p47
      $region14: #{double_conv_forward.4} parent=11 // pred_check_branch
        %207 = sbr.rel (%p205) target = $region16
      $region15: #{double_conv_forward.4} parent=11 // pred_region
        _
      $region16: #{double_conv_forward.4} parent=11 // pred_fallthru
        _
      // Predicated region
      $region17: #{double_conv_forward.4} parent=11 // pred_check
        %p208 = pneg %p68
      $region18: #{double_conv_forward.4} parent=11 // pred_check_branch
        %210 = sbr.rel (%p208) target = $region20
      $region19: #{double_conv_forward.4} parent=11 // pred_region
        _
      $region20: #{double_conv_forward.4} parent=11 // pred_fallthru
        _
      // Predicated region
      $region21: #{double_conv_forward.4} parent=11 // pred_check
        %p211 = pneg %p89
      $region22: #{double_conv_forward.4} parent=11 // pred_check_branch
        %213 = sbr.rel (%p211) target = $region24
      $region23: #{double_conv_forward.4} parent=11 // pred_region
        _
      $region24: #{double_conv_forward.4} parent=11 // pred_fallthru
        _
      // Predicated region
      $region25: #{double_conv_forward.4} parent=11 // pred_check
        %p214 = pneg %p110
      $region26: #{double_conv_forward.4} parent=11 // pred_check_branch
        %216 = sbr.rel (%p214) target = $region28
      $region27: #{double_conv_forward.4} parent=11 // pred_region
        _
      $region28: #{double_conv_forward.4} parent=11 // pred_fallthru
        _
    $region12: #{double_conv_forward.4} parent=5 // pred_fallthru
      _
    %p217 = scmp.lt.s32.totalorder %s14, 2
    // Predicated region
    $region29: #{double_conv_forward.4} parent=5 // pred_check
      %p218 = pneg %p217
    $region30: #{double_conv_forward.4} parent=5 // pred_check_branch
      %220 = sbr.rel (%p218) target = $region32
    $region31: #{double_conv_forward.4} parent=5 // pred_region
      _
    $region32: #{double_conv_forward.4} parent=5 // pred_fallthru
      _
    %p221 = scmp.le.s32.totalorder 1, %s14
    %p222 = scmp.lt.s32.totalorder %s14, 3
    %p223 = pnand %p221, %p222
    %p224 = pneg %p223
    // Predicated region
    $region33: #{double_conv_forward.4} parent=5 // pred_check
      _
    $region34: #{double_conv_forward.4} parent=5 // pred_check_branch
      %226 = sbr.rel (%p223) target = $region36
    $region35: #{double_conv_forward.4} parent=5 // pred_region
      %s227 = ssub.s32 %s14, 1
      %p228 = pneg %p47
      %p229 = pneg %p44
      %p230 = pneg %p68
      %p231 = pneg %p65
      %p232 = pneg %p89
      %p233 = pneg %p86
      %p234 = pneg %p110
      %p235 = pneg %p107
      %p236 = pneg %p138
      %p237 = pneg %p135
      %s238 = smul.u32 16, %s24
      %p239 = scmp.lt.s32.totalorder %s23, 1
      %s240 = scalar_select %p239, %s23, 1
      %p241 = scmp.lt.s32.totalorder %s238, 15
      %s242 = scalar_select %p241, %s238, 15
      %s243 = smul.addr %s242, 2
      %s244 = smul.addr %s240, 32
      %s245 = sadd.s32 %s243, %s244
      %s246 = smul.addr %s245, 8
      %s247 = scalar_lea.vmem %s5, %s246
      %p248 = pneg %p164
      %p249 = pneg %p161
      %p250 = scmp.lt.s32.totalorder %s23, 1
      %s251 = scalar_select %p250, %s23, 1
      %s252 = scalar_lea.vmem %s6, %s251
      %p253 = pneg %p190
      %p254 = pneg %p187
      %p255 = scmp.lt.s32.totalorder %s23, 1
      %s256 = scalar_select %p255, %s23, 1
      %s257 = scalar_lea.vmem %s7, %s256
      %s258 = smul.u32 16, %s24
      %p259 = scmp.lt.s32.totalorder %s23, 1
      %s260 = scalar_select %p259, %s23, 1
      %p261 = scmp.lt.s32.totalorder %s258, 15
      %s262 = scalar_select %p261, %s258, 15
      %s263 = smul.addr %s262, 2
      %s264 = smul.addr %s260, 32
      %s265 = sadd.s32 %s263, %s264
      %s266 = smul.addr %s265, 8
      %s267 = scalar_lea.vmem %s5, %s266
      %s268 = smul.u32 16, %s24
      %p269 = scmp.lt.s32.totalorder %s23, 1
      %s270 = scalar_select %p269, %s23, 1
      %s271 = scalar_lea.vmem %s6, %s270
      %p272 = scmp.lt.s32.totalorder %s23, 1
      %s273 = scalar_select %p272, %s23, 1
      %s274 = scalar_lea.vmem %s7, %s273
      %s275 = smul.u32 %s24, 16
      %s276 = smul.u32 %s275, 24
      %s277 = smul.u32 %s23, 432
      %s278 = sadd.s32 %s276, %s277
      %s279 = scalar_lea.vmem %s4, %s278
      // Predicated region
      $region37: #{double_conv_forward.4} parent=35 // pred_check
        _
      $region38: #{double_conv_forward.4} parent=35 // pred_check_branch
        %281 = sbr.rel (0) target = $region40
      $region39: #{double_conv_forward.4} parent=35 // pred_region
        %s282 = scalar_lea.vmem %s279, 16
        %s283 = scalar_lea.vmem [#allocation2], 16
        loop: start=0, step=1, limit=1
        $region41: #{double_conv_forward.4} parent=39 // loop_pre_header
          _
        $region42: #{double_conv_forward.4} parent=39 // loop_header
          %s285 = sphi 0, %s289
          %p286 = scmp.ge.s32.totalorder %s285, 1
          %s290 = sphi %s279, %s279
          %s291 = sphi [#allocation2], [#allocation2]
        $region43: #{double_conv_forward.4} parent=39 // loop_header_branch
          %288 = sbr.rel (%p286) target = $region47
        $region44: #{double_conv_forward.4} parent=39 // loop_body
          %v292 = vld [vmem:[%s290] sm:$0xff]
          %293 = vst [vmem:[%s291] sm:$0xff] %v292
          %v294 = vld [vmem:[%s290 + $0x8] sm:$0xff]
          %295 = vst [vmem:[%s291 + $0x8] sm:$0xff] %v294
          %v296 = vld [vmem:[%s290 + $0x18] sm:$0xff]
          %297 = vst [vmem:[%s291 + $0x18] sm:$0xff] %v296
          %v298 = vld [vmem:[%s290 + $0x20] sm:$0xff]
          %299 = vst [vmem:[%s291 + $0x20] sm:$0xff] %v298
          %v300 = vld [vmem:[%s290 + $0x30] sm:$0xff]
          %301 = vst [vmem:[%s291 + $0x30] sm:$0xff] %v300
          %v302 = vld [vmem:[%s290 + $0x38] sm:$0xff]
          %303 = vst [vmem:[%s291 + $0x38] sm:$0xff] %v302
          %v304 = vld [vmem:[%s290 + $0x48] sm:$0xff]
          %305 = vst [vmem:[%s291 + $0x48] sm:$0xff] %v304
          %v306 = vld [vmem:[%s290 + $0x50] sm:$0xff]
          %307 = vst [vmem:[%s291 + $0x50] sm:$0xff] %v306
          %v308 = vld [vmem:[%s290 + $0x60] sm:$0xff]
          %309 = vst [vmem:[%s291 + $0x60] sm:$0xff] %v308
          %v310 = vld [vmem:[%s290 + $0x68] sm:$0xff]
          %311 = vst [vmem:[%s291 + $0x68] sm:$0xff] %v310
          %v312 = vld [vmem:[%s290 + $0x78] sm:$0xff]
          %313 = vst [vmem:[%s291 + $0x78] sm:$0xff] %v312
          %v314 = vld [vmem:[%s290 + $0x80] sm:$0xff]
          %315 = vst [vmem:[%s291 + $0x80] sm:$0xff] %v314
          %v316 = vld [vmem:[%s290 + $0x90] sm:$0xff]
          %317 = vst [vmem:[%s291 + $0x90] sm:$0xff] %v316
          %v318 = vld [vmem:[%s290 + $0x98] sm:$0xff]
          %319 = vst [vmem:[%s291 + $0x98] sm:$0xff] %v318
          %v320 = vld [vmem:[%s290 + $0xa8] sm:$0xff]
          %321 = vst [vmem:[%s291 + $0xa8] sm:$0xff] %v320
          %v322 = vld [vmem:[%s290 + $0xb0] sm:$0xff]
          %323 = vst [vmem:[%s291 + $0xb0] sm:$0xff] %v322
          %v324 = vld [vmem:[%s290 + $0xc0] sm:$0xff]
          %325 = vst [vmem:[%s291 + $0xc0] sm:$0xff] %v324
          %v326 = vld [vmem:[%s290 + $0xc8] sm:$0xff]
          %327 = vst [vmem:[%s291 + $0xc8] sm:$0xff] %v326
          %v328 = vld [vmem:[%s290 + $0xd8] sm:$0xff]
          %329 = vst [vmem:[%s291 + $0xd8] sm:$0xff] %v328
          %v330 = vld [vmem:[%s290 + $0xe0] sm:$0xff]
          %331 = vst [vmem:[%s291 + $0xe0] sm:$0xff] %v330
          %v332 = vld [vmem:[%s290 + $0xf0] sm:$0xff]
          %333 = vst [vmem:[%s291 + $0xf0] sm:$0xff] %v332
          %v334 = vld [vmem:[%s290 + $0xf8] sm:$0xff]
          %335 = vst [vmem:[%s291 + $0xf8] sm:$0xff] %v334
          %v336 = vld [vmem:[%s290 + $0x108] sm:$0xff]
          %337 = vst [vmem:[%s291 + $0x108] sm:$0xff] %v336
          %v338 = vld [vmem:[%s290 + $0x110] sm:$0xff]
          %339 = vst [vmem:[%s291 + $0x110] sm:$0xff] %v338
          %v340 = vld [vmem:[%s290 + $0x120] sm:$0xff]
          %341 = vst [vmem:[%s291 + $0x120] sm:$0xff] %v340
          %v342 = vld [vmem:[%s290 + $0x128] sm:$0xff]
          %343 = vst [vmem:[%s291 + $0x128] sm:$0xff] %v342
          %v344 = vld [vmem:[%s290 + $0x138] sm:$0xff]
          %345 = vst [vmem:[%s291 + $0x138] sm:$0xff] %v344
          %v346 = vld [vmem:[%s290 + $0x140] sm:$0xff]
          %347 = vst [vmem:[%s291 + $0x140] sm:$0xff] %v346
          %v348 = vld [vmem:[%s290 + $0x150] sm:$0xff]
          %349 = vst [vmem:[%s291 + $0x150] sm:$0xff] %v348
          %v350 = vld [vmem:[%s290 + $0x158] sm:$0xff]
          %351 = vst [vmem:[%s291 + $0x158] sm:$0xff] %v350
          %v352 = vld [vmem:[%s290 + $0x168] sm:$0xff]
          %353 = vst [vmem:[%s291 + $0x168] sm:$0xff] %v352
          %v354 = vld [vmem:[%s290 + $0x170] sm:$0xff]
          %355 = vst [vmem:[%s291 + $0x170] sm:$0xff] %v354
          %v356 = vld [vmem:[%s290 + $0x180] sm:$0xff]
          %357 = vst [vmem:[%s291 + $0x180] sm:$0xff] %v356
          %v358 = vld [vmem:[%s290 + $0x188] sm:$0xff]
          %359 = vst [vmem:[%s291 + $0x188] sm:$0xff] %v358
          %v360 = vld [vmem:[%s290 + $0x198] sm:$0xff]
          %361 = vst [vmem:[%s291 + $0x198] sm:$0xff] %v360
          %v362 = vld [vmem:[%s290 + $0x1a0] sm:$0xff]
          %363 = vst [vmem:[%s291 + $0x1a0] sm:$0xff] %v362
        $region45: #{double_conv_forward.4} parent=39 // loop_footer
          %s289 = sadd.s32 1, %s285
        $region46: #{double_conv_forward.4} parent=39 // loop_footer_branch
          %284 = sbr.rel target = $region42
        $region47: #{double_conv_forward.4} parent=39 // loop_exit
          _
        %s365 = ssub.s32 4, 1
        loop: start=0, step=1, limit=1
        $region48: #{double_conv_forward.4} parent=39 // loop_pre_header
          _
        $region49: #{double_conv_forward.4} parent=39 // loop_header
          %s367 = sphi 0, %s371
          %p368 = scmp.ge.s32.totalorder %s367, 1
          %s372 = sphi %s282, %s282
          %s373 = sphi %s283, %s283
        $region50: #{double_conv_forward.4} parent=39 // loop_header_branch
          %370 = sbr.rel (%p368) target = $region54
        $region51: #{double_conv_forward.4} parent=39 // loop_body
          %v374 = vld [vmem:[%s372] sm:%s365]
          %375 = vst [vmem:[%s373] sm:%s365] %v374
          %v376 = vld [vmem:[%s372 + $0x18] sm:%s365]
          %377 = vst [vmem:[%s373 + $0x18] sm:%s365] %v376
          %v378 = vld [vmem:[%s372 + $0x30] sm:%s365]
          %379 = vst [vmem:[%s373 + $0x30] sm:%s365] %v378
          %v380 = vld [vmem:[%s372 + $0x48] sm:%s365]
          %381 = vst [vmem:[%s373 + $0x48] sm:%s365] %v380
          %v382 = vld [vmem:[%s372 + $0x60] sm:%s365]
          %383 = vst [vmem:[%s373 + $0x60] sm:%s365] %v382
          %v384 = vld [vmem:[%s372 + $0x78] sm:%s365]
          %385 = vst [vmem:[%s373 + $0x78] sm:%s365] %v384
          %v386 = vld [vmem:[%s372 + $0x90] sm:%s365]
          %387 = vst [vmem:[%s373 + $0x90] sm:%s365] %v386
          %v388 = vld [vmem:[%s372 + $0xa8] sm:%s365]
          %389 = vst [vmem:[%s373 + $0xa8] sm:%s365] %v388
          %v390 = vld [vmem:[%s372 + $0xc0] sm:%s365]
          %391 = vst [vmem:[%s373 + $0xc0] sm:%s365] %v390
          %v392 = vld [vmem:[%s372 + $0xd8] sm:%s365]
          %393 = vst [vmem:[%s373 + $0xd8] sm:%s365] %v392
          %v394 = vld [vmem:[%s372 + $0xf0] sm:%s365]
          %395 = vst [vmem:[%s373 + $0xf0] sm:%s365] %v394
          %v396 = vld [vmem:[%s372 + $0x108] sm:%s365]
          %397 = vst [vmem:[%s373 + $0x108] sm:%s365] %v396
          %v398 = vld [vmem:[%s372 + $0x120] sm:%s365]
          %399 = vst [vmem:[%s373 + $0x120] sm:%s365] %v398
          %v400 = vld [vmem:[%s372 + $0x138] sm:%s365]
          %401 = vst [vmem:[%s373 + $0x138] sm:%s365] %v400
          %v402 = vld [vmem:[%s372 + $0x150] sm:%s365]
          %403 = vst [vmem:[%s373 + $0x150] sm:%s365] %v402
          %v404 = vld [vmem:[%s372 + $0x168] sm:%s365]
          %405 = vst [vmem:[%s373 + $0x168] sm:%s365] %v404
          %v406 = vld [vmem:[%s372 + $0x180] sm:%s365]
          %407 = vst [vmem:[%s373 + $0x180] sm:%s365] %v406
          %v408 = vld [vmem:[%s372 + $0x198] sm:%s365]
          %409 = vst [vmem:[%s373 + $0x198] sm:%s365] %v408
        $region52: #{double_conv_forward.4} parent=39 // loop_footer
          %s371 = sadd.s32 1, %s367
        $region53: #{double_conv_forward.4} parent=39 // loop_footer_branch
          %366 = sbr.rel target = $region49
        $region54: #{double_conv_forward.4} parent=39 // loop_exit
          _
      $region40: #{double_conv_forward.4} parent=35 // pred_fallthru
        _
      // Predicated region
      $region55: #{double_conv_forward.4} parent=35 // pred_check
        _
      $region56: #{double_conv_forward.4} parent=35 // pred_check_branch
        %412 = sbr.rel (0) target = $region58
      $region57: #{double_conv_forward.4} parent=35 // pred_region
        %413 = vsyncadd [#allocation3], 5184
      $region58: #{double_conv_forward.4} parent=35 // pred_fallthru
        _
      %s414 = smul.u32 18, 18
      %s415 = smul.u32 %s414, 1
      %s416 = sshll.u32 %s415, 4
      %417 = dma.done [#allocation3], %s416
      %v418 = vld [vmem:[#allocation2] sm:$0xff]
      %v419 = vld [vmem:[#allocation2 + $0x8] sm:$0xff]
      %v420 = vld [vmem:[#allocation2 + $0x10] sm:$0x3]
      %v421 = vld [vmem:[#allocation2 + $0x18] sm:$0xff]
      %v422 = vld [vmem:[#allocation2 + $0x20] sm:$0xff]
      %v423 = vld [vmem:[#allocation2 + $0x28] sm:$0x3]
      %v424 = vld [vmem:[#allocation2 + $0x30] sm:$0xff]
      %v425 = vld [vmem:[#allocation2 + $0x38] sm:$0xff]
      %v426 = vld [vmem:[#allocation2 + $0x40] sm:$0x3]
      %v427 = vld [vmem:[#allocation2 + $0x48] sm:$0xff]
      %v428 = vld [vmem:[#allocation2 + $0x50] sm:$0xff]
      %v429 = vld [vmem:[#allocation2 + $0x58] sm:$0x3]
      %v430 = vld [vmem:[#allocation2 + $0x60] sm:$0xff]
      %v431 = vld [vmem:[#allocation2 + $0x68] sm:$0xff]
      %v432 = vld [vmem:[#allocation2 + $0x70] sm:$0x3]
      %v433 = vld [vmem:[#allocation2 + $0x78] sm:$0xff]
      %v434 = vld [vmem:[#allocation2 + $0x80] sm:$0xff]
      %v435 = vld [vmem:[#allocation2 + $0x88] sm:$0x3]
      %v436 = vld [vmem:[#allocation2 + $0x90] sm:$0xff]
      %v437 = vld [vmem:[#allocation2 + $0x98] sm:$0xff]
      %v438 = vld [vmem:[#allocation2 + $0xa0] sm:$0x3]
      %v439 = vld [vmem:[#allocation2 + $0xa8] sm:$0xff]
      %v440 = vld [vmem:[#allocation2 + $0xb0] sm:$0xff]
      %v441 = vld [vmem:[#allocation2 + $0xb8] sm:$0x3]
      %v442 = vld [vmem:[#allocation2 + $0xc0] sm:$0xff]
      %v443 = vld [vmem:[#allocation2 + $0xc8] sm:$0xff]
      %v444 = vld [vmem:[#allocation2 + $0xd0] sm:$0x3]
      %v445 = vld [vmem:[#allocation2 + $0xd8] sm:$0xff]
      %v446 = vld [vmem:[#allocation2 + $0xe0] sm:$0xff]
      %v447 = vld [vmem:[#allocation2 + $0xe8] sm:$0x3]
      %v448 = vld [vmem:[#allocation2 + $0xf0] sm:$0xff]
      %v449 = vld [vmem:[#allocation2 + $0xf8] sm:$0xff]
      %v450 = vld [vmem:[#allocation2 + $0x100] sm:$0x3]
      %v451 = vld [vmem:[#allocation2 + $0x108] sm:$0xff]
      %v452 = vld [vmem:[#allocation2 + $0x110] sm:$0xff]
      %v453 = vld [vmem:[#allocation2 + $0x118] sm:$0x3]
      %v454 = vld [vmem:[#allocation2 + $0x120] sm:$0xff]
      %v455 = vld [vmem:[#allocation2 + $0x128] sm:$0xff]
      %v456 = vld [vmem:[#allocation2 + $0x130] sm:$0x3]
      %v457 = vld [vmem:[#allocation2 + $0x138] sm:$0xff]
      %v458 = vld [vmem:[#allocation2 + $0x140] sm:$0xff]
      %v459 = vld [vmem:[#allocation2 + $0x148] sm:$0x3]
      %v460 = vld [vmem:[#allocation2 + $0x150] sm:$0xff]
      %v461 = vld [vmem:[#allocation2 + $0x158] sm:$0xff]
      %v462 = vld [vmem:[#allocation2 + $0x160] sm:$0x3]
      %v463 = vld [vmem:[#allocation2 + $0x168] sm:$0xff]
      %v464 = vld [vmem:[#allocation2 + $0x170] sm:$0xff]
      %v465 = vld [vmem:[#allocation2 + $0x178] sm:$0x3]
      %v466 = vld [vmem:[#allocation2 + $0x180] sm:$0xff]
      %v467 = vld [vmem:[#allocation2 + $0x188] sm:$0xff]
      %v468 = vld [vmem:[#allocation2 + $0x190] sm:$0x3]
      %v469 = vld [vmem:[#allocation2 + $0x198] sm:$0xff]
      %v470 = vld [vmem:[#allocation2 + $0x1a0] sm:$0xff]
      %v471 = vld [vmem:[#allocation2 + $0x1a8] sm:$0x3]
      %v472 = vld [vmem:[%s0] sm:$0x1]
      %v474 = vperm.slane %v472, 0
      %v476 = vmul.f32 %v418, %v474
      %v477 = vmul.f32 %v419, %v474
      %v478 = vmul.f32 %v420, %v474
      %v479 = vmul.f32 %v421, %v474
      %v480 = vmul.f32 %v422, %v474
      %v481 = vmul.f32 %v423, %v474
      %v482 = vmul.f32 %v424, %v474
      %v483 = vmul.f32 %v425, %v474
      %v484 = vmul.f32 %v426, %v474
      %v485 = vmul.f32 %v427, %v474
      %v486 = vmul.f32 %v428, %v474
      %v487 = vmul.f32 %v429, %v474
      %v488 = vmul.f32 %v430, %v474
      %v489 = vmul.f32 %v431, %v474
      %v490 = vmul.f32 %v432, %v474
      %v491 = vmul.f32 %v433, %v474
      %v492 = vmul.f32 %v434, %v474
      %v493 = vmul.f32 %v435, %v474
      %v494 = vmul.f32 %v436, %v474
      %v495 = vmul.f32 %v437, %v474
      %v496 = vmul.f32 %v438, %v474
      %v497 = vmul.f32 %v439, %v474
      %v498 = vmul.f32 %v440, %v474
      %v499 = vmul.f32 %v441, %v474
      %v500 = vmul.f32 %v442, %v474
      %v501 = vmul.f32 %v443, %v474
      %v502 = vmul.f32 %v444, %v474
      %v503 = vmul.f32 %v445, %v474
      %v504 = vmul.f32 %v446, %v474
      %v505 = vmul.f32 %v447, %v474
      %v506 = vmul.f32 %v448, %v474
      %v507 = vmul.f32 %v449, %v474
      %v508 = vmul.f32 %v450, %v474
      %v509 = vmul.f32 %v451, %v474
      %v510 = vmul.f32 %v452, %v474
      %v511 = vmul.f32 %v453, %v474
      %v512 = vmul.f32 %v454, %v474
      %v513 = vmul.f32 %v455, %v474
      %v514 = vmul.f32 %v456, %v474
      %v515 = vmul.f32 %v457, %v474
      %v516 = vmul.f32 %v458, %v474
      %v517 = vmul.f32 %v459, %v474
      %v518 = vmul.f32 %v460, %v474
      %v519 = vmul.f32 %v461, %v474
      %v520 = vmul.f32 %v462, %v474
      %v521 = vmul.f32 %v463, %v474
      %v522 = vmul.f32 %v464, %v474
      %v523 = vmul.f32 %v465, %v474
      %v524 = vmul.f32 %v466, %v474
      %v525 = vmul.f32 %v467, %v474
      %v526 = vmul.f32 %v468, %v474
      %v527 = vmul.f32 %v469, %v474
      %v528 = vmul.f32 %v470, %v474
      %v529 = vmul.f32 %v471, %v474
      %v530 = vld [vmem:[%s1] sm:$0x1]
      %v532 = vperm.slane %v530, 0
      %v534 = vadd.f32 %v476, %v532
      %v535 = vadd.f32 %v477, %v532
      %v536 = vadd.f32 %v478, %v532
      %v537 = vadd.f32 %v479, %v532
      %v538 = vadd.f32 %v480, %v532
      %v539 = vadd.f32 %v481, %v532
      %v540 = vadd.f32 %v482, %v532
      %v541 = vadd.f32 %v483, %v532
      %v542 = vadd.f32 %v484, %v532
      %v543 = vadd.f32 %v485, %v532
      %v544 = vadd.f32 %v486, %v532
      %v545 = vadd.f32 %v487, %v532
      %v546 = vadd.f32 %v488, %v532
      %v547 = vadd.f32 %v489, %v532
      %v548 = vadd.f32 %v490, %v532
      %v549 = vadd.f32 %v491, %v532
      %v550 = vadd.f32 %v492, %v532
      %v551 = vadd.f32 %v493, %v532
      %v552 = vadd.f32 %v494, %v532
      %v553 = vadd.f32 %v495, %v532
      %v554 = vadd.f32 %v496, %v532
      %v555 = vadd.f32 %v497, %v532
      %v556 = vadd.f32 %v498, %v532
      %v557 = vadd.f32 %v499, %v532
      %v558 = vadd.f32 %v500, %v532
      %v559 = vadd.f32 %v501, %v532
      %v560 = vadd.f32 %v502, %v532
      %v561 = vadd.f32 %v503, %v532
      %v562 = vadd.f32 %v504, %v532
      %v563 = vadd.f32 %v505, %v532
      %v564 = vadd.f32 %v506, %v532
      %v565 = vadd.f32 %v507, %v532
      %v566 = vadd.f32 %v508, %v532
      %v567 = vadd.f32 %v509, %v532
      %v568 = vadd.f32 %v510, %v532
      %v569 = vadd.f32 %v511, %v532
      %v570 = vadd.f32 %v512, %v532
      %v571 = vadd.f32 %v513, %v532
      %v572 = vadd.f32 %v514, %v532
      %v573 = vadd.f32 %v515, %v532
      %v574 = vadd.f32 %v516, %v532
      %v575 = vadd.f32 %v517, %v532
      %v576 = vadd.f32 %v518, %v532
      %v577 = vadd.f32 %v519, %v532
      %v578 = vadd.f32 %v520, %v532
      %v579 = vadd.f32 %v521, %v532
      %v580 = vadd.f32 %v522, %v532
      %v581 = vadd.f32 %v523, %v532
      %v582 = vadd.f32 %v524, %v532
      %v583 = vadd.f32 %v525, %v532
      %v584 = vadd.f32 %v526, %v532
      %v585 = vadd.f32 %v527, %v532
      %v586 = vadd.f32 %v528, %v532
      %v587 = vadd.f32 %v529, %v532
      %v588 = vmax.f32 %v534, 0.0
      %v589 = vmax.f32 %v535, 0.0
      %v590 = vmax.f32 %v536, 0.0
      %v591 = vmax.f32 %v537, 0.0
      %v592 = vmax.f32 %v538, 0.0
      %v593 = vmax.f32 %v539, 0.0
      %v594 = vmax.f32 %v540, 0.0
      %v595 = vmax.f32 %v541, 0.0
      %v596 = vmax.f32 %v542, 0.0
      %v597 = vmax.f32 %v543, 0.0
      %v598 = vmax.f32 %v544, 0.0
      %v599 = vmax.f32 %v545, 0.0
      %v600 = vmax.f32 %v546, 0.0
      %v601 = vmax.f32 %v547, 0.0
      %v602 = vmax.f32 %v548, 0.0
      %v603 = vmax.f32 %v549, 0.0
      %v604 = vmax.f32 %v550, 0.0
      %v605 = vmax.f32 %v551, 0.0
      %v606 = vmax.f32 %v552, 0.0
      %v607 = vmax.f32 %v553, 0.0
      %v608 = vmax.f32 %v554, 0.0
      %v609 = vmax.f32 %v555, 0.0
      %v610 = vmax.f32 %v556, 0.0
      %v611 = vmax.f32 %v557, 0.0
      %v612 = vmax.f32 %v558, 0.0
      %v613 = vmax.f32 %v559, 0.0
      %v614 = vmax.f32 %v560, 0.0
      %v615 = vmax.f32 %v561, 0.0
      %v616 = vmax.f32 %v562, 0.0
      %v617 = vmax.f32 %v563, 0.0
      %v618 = vmax.f32 %v564, 0.0
      %v619 = vmax.f32 %v565, 0.0
      %v620 = vmax.f32 %v566, 0.0
      %v621 = vmax.f32 %v567, 0.0
      %v622 = vmax.f32 %v568, 0.0
      %v623 = vmax.f32 %v569, 0.0
      %v624 = vmax.f32 %v570, 0.0
      %v625 = vmax.f32 %v571, 0.0
      %v626 = vmax.f32 %v572, 0.0
      %v627 = vmax.f32 %v573, 0.0
      %v628 = vmax.f32 %v574, 0.0
      %v629 = vmax.f32 %v575, 0.0
      %v630 = vmax.f32 %v576, 0.0
      %v631 = vmax.f32 %v577, 0.0
      %v632 = vmax.f32 %v578, 0.0
      %v633 = vmax.f32 %v579, 0.0
      %v634 = vmax.f32 %v580, 0.0
      %v635 = vmax.f32 %v581, 0.0
      %v636 = vmax.f32 %v582, 0.0
      %v637 = vmax.f32 %v583, 0.0
      %v638 = vmax.f32 %v584, 0.0
      %v639 = vmax.f32 %v585, 0.0
      %v640 = vmax.f32 %v586, 0.0
      %v641 = vmax.f32 %v587, 0.0
      %v642 = vstv %s275
      %v643 = vadd.s32 %v642, 1
      %v644 = vadd.s32 %v642, 2
      %v645 = vadd.s32 %v642, 3
      %v646 = vadd.s32 %v642, 4
      %v647 = vadd.s32 %v642, 5
      %v648 = vadd.s32 %v642, 6
      %v649 = vadd.s32 %v642, 7
      %v650 = vadd.s32 %v642, 8
      %v651 = vadd.s32 %v642, 9
      %v652 = vadd.s32 %v642, 10
      %v653 = vadd.s32 %v642, 11
      %v654 = vadd.s32 %v642, 12
      %v655 = vadd.s32 %v642, 13
      %v656 = vadd.s32 %v642, 14
      %v657 = vadd.s32 %v642, 15
      %v658 = vadd.s32 %v642, 16
      %v659 = vadd.s32 %v642, 17
      %v660 = vlaneseq
      %v661 = vshrl.u32 %v660, 7
      %v662 = vadd.s32 %v661, 8
      %v663 = vadd.s32 %v661, 16
      %vm664 = vcmp.ge.s32.totalorder %v642, 1
      %vm665 = vcmp.ge.s32.totalorder %v643, 1
      %vm666 = vcmp.ge.s32.totalorder %v644, 1
      %vm667 = vcmp.ge.s32.totalorder %v645, 1
      %vm668 = vcmp.ge.s32.totalorder %v646, 1
      %vm669 = vcmp.ge.s32.totalorder %v647, 1
      %vm670 = vcmp.ge.s32.totalorder %v648, 1
      %vm671 = vcmp.ge.s32.totalorder %v649, 1
      %vm672 = vcmp.ge.s32.totalorder %v650, 1
      %vm673 = vcmp.ge.s32.totalorder %v651, 1
      %vm674 = vcmp.ge.s32.totalorder %v652, 1
      %vm675 = vcmp.ge.s32.totalorder %v653, 1
      %vm676 = vcmp.ge.s32.totalorder %v654, 1
      %vm677 = vcmp.ge.s32.totalorder %v655, 1
      %vm678 = vcmp.ge.s32.totalorder %v656, 1
      %vm679 = vcmp.ge.s32.totalorder %v657, 1
      %vm680 = vcmp.ge.s32.totalorder %v658, 1
      %vm681 = vcmp.ge.s32.totalorder %v659, 1
      %vm682 = vcmp.le.s32.totalorder %v642, 16
      %vm683 = vcmp.le.s32.totalorder %v643, 16
      %vm684 = vcmp.le.s32.totalorder %v644, 16
      %vm685 = vcmp.le.s32.totalorder %v645, 16
      %vm686 = vcmp.le.s32.totalorder %v646, 16
      %vm687 = vcmp.le.s32.totalorder %v647, 16
      %vm688 = vcmp.le.s32.totalorder %v648, 16
      %vm689 = vcmp.le.s32.totalorder %v649, 16
      %vm690 = vcmp.le.s32.totalorder %v650, 16
      %vm691 = vcmp.le.s32.totalorder %v651, 16
      %vm692 = vcmp.le.s32.totalorder %v652, 16
      %vm693 = vcmp.le.s32.totalorder %v653, 16
      %vm694 = vcmp.le.s32.totalorder %v654, 16
      %vm695 = vcmp.le.s32.totalorder %v655, 16
      %vm696 = vcmp.le.s32.totalorder %v656, 16
      %vm697 = vcmp.le.s32.totalorder %v657, 16
      %vm698 = vcmp.le.s32.totalorder %v658, 16
      %vm699 = vcmp.le.s32.totalorder %v659, 16
      %vm700 = vmand %vm664, %vm682
      %vm701 = vmand %vm665, %vm683
      %vm702 = vmand %vm666, %vm684
      %vm703 = vmand %vm667, %vm685
      %vm704 = vmand %vm668, %vm686
      %vm705 = vmand %vm669, %vm687
      %vm706 = vmand %vm670, %vm688
      %vm707 = vmand %vm671, %vm689
      %vm708 = vmand %vm672, %vm690
      %vm709 = vmand %vm673, %vm691
      %vm710 = vmand %vm674, %vm692
      %vm711 = vmand %vm675, %vm693
      %vm712 = vmand %vm676, %vm694
      %vm713 = vmand %vm677, %vm695
      %vm714 = vmand %vm678, %vm696
      %vm715 = vmand %vm679, %vm697
      %vm716 = vmand %vm680, %vm698
      %vm717 = vmand %vm681, %vm699
      %vm718 = vcmp.ge.s32.totalorder %v661, 1
      %vm719 = vcmp.ge.s32.totalorder %v662, 1
      %vm720 = vcmp.ge.s32.totalorder %v663, 1
      %vm721 = vmand %vm700, %vm718
      %vm722 = vmand %vm700, %vm719
      %vm723 = vmand %vm700, %vm720
      %vm724 = vmand %vm701, %vm718
      %vm725 = vmand %vm701, %vm719
      %vm726 = vmand %vm701, %vm720
      %vm727 = vmand %vm702, %vm718
      %vm728 = vmand %vm702, %vm719
      %vm729 = vmand %vm702, %vm720
      %vm730 = vmand %vm703, %vm718
      %vm731 = vmand %vm703, %vm719
      %vm732 = vmand %vm703, %vm720
      %vm733 = vmand %vm704, %vm718
      %vm734 = vmand %vm704, %vm719
      %vm735 = vmand %vm704, %vm720
      %vm736 = vmand %vm705, %vm718
      %vm737 = vmand %vm705, %vm719
      %vm738 = vmand %vm705, %vm720
      %vm739 = vmand %vm706, %vm718
      %vm740 = vmand %vm706, %vm719
      %vm741 = vmand %vm706, %vm720
      %vm742 = vmand %vm707, %vm718
      %vm743 = vmand %vm707, %vm719
      %vm744 = vmand %vm707, %vm720
      %vm745 = vmand %vm708, %vm718
      %vm746 = vmand %vm708, %vm719
      %vm747 = vmand %vm708, %vm720
      %vm748 = vmand %vm709, %vm718
      %vm749 = vmand %vm709, %vm719
      %vm750 = vmand %vm709, %vm720
      %vm751 = vmand %vm710, %vm718
      %vm752 = vmand %vm710, %vm719
      %vm753 = vmand %vm710, %vm720
      %vm754 = vmand %vm711, %vm718
      %vm755 = vmand %vm711, %vm719
      %vm756 = vmand %vm711, %vm720
      %vm757 = vmand %vm712, %vm718
      %vm758 = vmand %vm712, %vm719
      %vm759 = vmand %vm712, %vm720
      %vm760 = vmand %vm713, %vm718
      %vm761 = vmand %vm713, %vm719
      %vm762 = vmand %vm713, %vm720
      %vm763 = vmand %vm714, %vm718
      %vm764 = vmand %vm714, %vm719
      %vm765 = vmand %vm714, %vm720
      %vm766 = vmand %vm715, %vm718
      %vm767 = vmand %vm715, %vm719
      %vm768 = vmand %vm715, %vm720
      %vm769 = vmand %vm716, %vm718
      %vm770 = vmand %vm716, %vm719
      %vm771 = vmand %vm716, %vm720
      %vm772 = vmand %vm717, %vm718
      %vm773 = vmand %vm717, %vm719
      %vm774 = vmand %vm717, %vm720
      %vm775 = vcmp.le.s32.totalorder %v661, 16
      %vm776 = vcmp.le.s32.totalorder %v662, 16
      %vm777 = vcmp.le.s32.totalorder %v663, 16
      %vm778 = vmand %vm721, %vm775
      %vm779 = vmand %vm722, %vm776
      %vm780 = vmand %vm723, %vm777
      %vm781 = vmand %vm724, %vm775
      %vm782 = vmand %vm725, %vm776
      %vm783 = vmand %vm726, %vm777
      %vm784 = vmand %vm727, %vm775
      %vm785 = vmand %vm728, %vm776
      %vm786 = vmand %vm729, %vm777
      %vm787 = vmand %vm730, %vm775
      %vm788 = vmand %vm731, %vm776
      %vm789 = vmand %vm732, %vm777
      %vm790 = vmand %vm733, %vm775
      %vm791 = vmand %vm734, %vm776
      %vm792 = vmand %vm735, %vm777
      %vm793 = vmand %vm736, %vm775
      %vm794 = vmand %vm737, %vm776
      %vm795 = vmand %vm738, %vm777
      %vm796 = vmand %vm739, %vm775
      %vm797 = vmand %vm740, %vm776
      %vm798 = vmand %vm741, %vm777
      %vm799 = vmand %vm742, %vm775
      %vm800 = vmand %vm743, %vm776
      %vm801 = vmand %vm744, %vm777
      %vm802 = vmand %vm745, %vm775
      %vm803 = vmand %vm746, %vm776
      %vm804 = vmand %vm747, %vm777
      %vm805 = vmand %vm748, %vm775
      %vm806 = vmand %vm749, %vm776
      %vm807 = vmand %vm750, %vm777
      %vm808 = vmand %vm751, %vm775
      %vm809 = vmand %vm752, %vm776
      %vm810 = vmand %vm753, %vm777
      %vm811 = vmand %vm754, %vm775
      %vm812 = vmand %vm755, %vm776
      %vm813 = vmand %vm756, %vm777
      %vm814 = vmand %vm757, %vm775
      %vm815 = vmand %vm758, %vm776
      %vm816 = vmand %vm759, %vm777
      %vm817 = vmand %vm760, %vm775
      %vm818 = vmand %vm761, %vm776
      %vm819 = vmand %vm762, %vm777
      %vm820 = vmand %vm763, %vm775
      %vm821 = vmand %vm764, %vm776
      %vm822 = vmand %vm765, %vm777
      %vm823 = vmand %vm766, %vm775
      %vm824 = vmand %vm767, %vm776
      %vm825 = vmand %vm768, %vm777
      %vm826 = vmand %vm769, %vm775
      %vm827 = vmand %vm770, %vm776
      %vm828 = vmand %vm771, %vm777
      %vm829 = vmand %vm772, %vm775
      %vm830 = vmand %vm773, %vm776
      %vm831 = vmand %vm774, %vm777
      %v832 = vsel %vm778, 1, 0
      %v833 = vsel %vm779, 1, 0
      %v834 = vsel %vm780, 1, 0
      %v835 = vsel %vm781, 1, 0
      %v836 = vsel %vm782, 1, 0
      %v837 = vsel %vm783, 1, 0
      %v838 = vsel %vm784, 1, 0
      %v839 = vsel %vm785, 1, 0
      %v840 = vsel %vm786, 1, 0
      %v841 = vsel %vm787, 1, 0
      %v842 = vsel %vm788, 1, 0
      %v843 = vsel %vm789, 1, 0
      %v844 = vsel %vm790, 1, 0
      %v845 = vsel %vm791, 1, 0
      %v846 = vsel %vm792, 1, 0
      %v847 = vsel %vm793, 1, 0
      %v848 = vsel %vm794, 1, 0
      %v849 = vsel %vm795, 1, 0
      %v850 = vsel %vm796, 1, 0
      %v851 = vsel %vm797, 1, 0
      %v852 = vsel %vm798, 1, 0
      %v853 = vsel %vm799, 1, 0
      %v854 = vsel %vm800, 1, 0
      %v855 = vsel %vm801, 1, 0
      %v856 = vsel %vm802, 1, 0
      %v857 = vsel %vm803, 1, 0
      %v858 = vsel %vm804, 1, 0
      %v859 = vsel %vm805, 1, 0
      %v860 = vsel %vm806, 1, 0
      %v861 = vsel %vm807, 1, 0
      %v862 = vsel %vm808, 1, 0
      %v863 = vsel %vm809, 1, 0
      %v864 = vsel %vm810, 1, 0
      %v865 = vsel %vm811, 1, 0
      %v866 = vsel %vm812, 1, 0
      %v867 = vsel %vm813, 1, 0
      %v868 = vsel %vm814, 1, 0
      %v869 = vsel %vm815, 1, 0
      %v870 = vsel %vm816, 1, 0
      %v871 = vsel %vm817, 1, 0
      %v872 = vsel %vm818, 1, 0
      %v873 = vsel %vm819, 1, 0
      %v874 = vsel %vm820, 1, 0
      %v875 = vsel %vm821, 1, 0
      %v876 = vsel %vm822, 1, 0
      %v877 = vsel %vm823, 1, 0
      %v878 = vsel %vm824, 1, 0
      %v879 = vsel %vm825, 1, 0
      %v880 = vsel %vm826, 1, 0
      %v881 = vsel %vm827, 1, 0
      %v882 = vsel %vm828, 1, 0
      %v883 = vsel %vm829, 1, 0
      %v884 = vsel %vm830, 1, 0
      %v885 = vsel %vm831, 1, 0
      %vm886 = vcmp.eq.s32.totalorder %v832, 1
      %vm887 = vcmp.eq.s32.totalorder %v833, 1
      %vm888 = vcmp.eq.s32.totalorder %v834, 1
      %vm889 = vcmp.eq.s32.totalorder %v835, 1
      %vm890 = vcmp.eq.s32.totalorder %v836, 1
      %vm891 = vcmp.eq.s32.totalorder %v837, 1
      %vm892 = vcmp.eq.s32.totalorder %v838, 1
      %vm893 = vcmp.eq.s32.totalorder %v839, 1
      %vm894 = vcmp.eq.s32.totalorder %v840, 1
      %vm895 = vcmp.eq.s32.totalorder %v841, 1
      %vm896 = vcmp.eq.s32.totalorder %v842, 1
      %vm897 = vcmp.eq.s32.totalorder %v843, 1
      %vm898 = vcmp.eq.s32.totalorder %v844, 1
      %vm899 = vcmp.eq.s32.totalorder %v845, 1
      %vm900 = vcmp.eq.s32.totalorder %v846, 1
      %vm901 = vcmp.eq.s32.totalorder %v847, 1
      %vm902 = vcmp.eq.s32.totalorder %v848, 1
      %vm903 = vcmp.eq.s32.totalorder %v849, 1
      %vm904 = vcmp.eq.s32.totalorder %v850, 1
      %vm905 = vcmp.eq.s32.totalorder %v851, 1
      %vm906 = vcmp.eq.s32.totalorder %v852, 1
      %vm907 = vcmp.eq.s32.totalorder %v853, 1
      %vm908 = vcmp.eq.s32.totalorder %v854, 1
      %vm909 = vcmp.eq.s32.totalorder %v855, 1
      %vm910 = vcmp.eq.s32.totalorder %v856, 1
      %vm911 = vcmp.eq.s32.totalorder %v857, 1
      %vm912 = vcmp.eq.s32.totalorder %v858, 1
      %vm913 = vcmp.eq.s32.totalorder %v859, 1
      %vm914 = vcmp.eq.s32.totalorder %v860, 1
      %vm915 = vcmp.eq.s32.totalorder %v861, 1
      %vm916 = vcmp.eq.s32.totalorder %v862, 1
      %vm917 = vcmp.eq.s32.totalorder %v863, 1
      %vm918 = vcmp.eq.s32.totalorder %v864, 1
      %vm919 = vcmp.eq.s32.totalorder %v865, 1
      %vm920 = vcmp.eq.s32.totalorder %v866, 1
      %vm921 = vcmp.eq.s32.totalorder %v867, 1
      %vm922 = vcmp.eq.s32.totalorder %v868, 1
      %vm923 = vcmp.eq.s32.totalorder %v869, 1
      %vm924 = vcmp.eq.s32.totalorder %v870, 1
      %vm925 = vcmp.eq.s32.totalorder %v871, 1
      %vm926 = vcmp.eq.s32.totalorder %v872, 1
      %vm927 = vcmp.eq.s32.totalorder %v873, 1
      %vm928 = vcmp.eq.s32.totalorder %v874, 1
      %vm929 = vcmp.eq.s32.totalorder %v875, 1
      %vm930 = vcmp.eq.s32.totalorder %v876, 1
      %vm931 = vcmp.eq.s32.totalorder %v877, 1
      %vm932 = vcmp.eq.s32.totalorder %v878, 1
      %vm933 = vcmp.eq.s32.totalorder %v879, 1
      %vm934 = vcmp.eq.s32.totalorder %v880, 1
      %vm935 = vcmp.eq.s32.totalorder %v881, 1
      %vm936 = vcmp.eq.s32.totalorder %v882, 1
      %vm937 = vcmp.eq.s32.totalorder %v883, 1
      %vm938 = vcmp.eq.s32.totalorder %v884, 1
      %vm939 = vcmp.eq.s32.totalorder %v885, 1
      %v940 = vsel %vm886, %v588, 0.0
      %v941 = vsel %vm887, %v589, 0.0
      %v942 = vsel %vm888, %v590, 0.0
      %v943 = vsel %vm889, %v591, 0.0
      %v944 = vsel %vm890, %v592, 0.0
      %v945 = vsel %vm891, %v593, 0.0
      %v946 = vsel %vm892, %v594, 0.0
      %v947 = vsel %vm893, %v595, 0.0
      %v948 = vsel %vm894, %v596, 0.0
      %v949 = vsel %vm895, %v597, 0.0
      %v950 = vsel %vm896, %v598, 0.0
      %v951 = vsel %vm897, %v599, 0.0
      %v952 = vsel %vm898, %v600, 0.0
      %v953 = vsel %vm899, %v601, 0.0
      %v954 = vsel %vm900, %v602, 0.0
      %v955 = vsel %vm901, %v603, 0.0
      %v956 = vsel %vm902, %v604, 0.0
      %v957 = vsel %vm903, %v605, 0.0
      %v958 = vsel %vm904, %v606, 0.0
      %v959 = vsel %vm905, %v607, 0.0
      %v960 = vsel %vm906, %v608, 0.0
      %v961 = vsel %vm907, %v609, 0.0
      %v962 = vsel %vm908, %v610, 0.0
      %v963 = vsel %vm909, %v611, 0.0
      %v964 = vsel %vm910, %v612, 0.0
      %v965 = vsel %vm911, %v613, 0.0
      %v966 = vsel %vm912, %v614, 0.0
      %v967 = vsel %vm913, %v615, 0.0
      %v968 = vsel %vm914, %v616, 0.0
      %v969 = vsel %vm915, %v617, 0.0
      %v970 = vsel %vm916, %v618, 0.0
      %v971 = vsel %vm917, %v619, 0.0
      %v972 = vsel %vm918, %v620, 0.0
      %v973 = vsel %vm919, %v621, 0.0
      %v974 = vsel %vm920, %v622, 0.0
      %v975 = vsel %vm921, %v623, 0.0
      %v976 = vsel %vm922, %v624, 0.0
      %v977 = vsel %vm923, %v625, 0.0
      %v978 = vsel %vm924, %v626, 0.0
      %v979 = vsel %vm925, %v627, 0.0
      %v980 = vsel %vm926, %v628, 0.0
      %v981 = vsel %vm927, %v629, 0.0
      %v982 = vsel %vm928, %v630, 0.0
      %v983 = vsel %vm929, %v631, 0.0
      %v984 = vsel %vm930, %v632, 0.0
      %v985 = vsel %vm931, %v633, 0.0
      %v986 = vsel %vm932, %v634, 0.0
      %v987 = vsel %vm933, %v635, 0.0
      %v988 = vsel %vm934, %v636, 0.0
      %v989 = vsel %vm935, %v637, 0.0
      %v990 = vsel %vm936, %v638, 0.0
      %v991 = vsel %vm937, %v639, 0.0
      %v992 = vsel %vm938, %v640, 0.0
      %v993 = vsel %vm939, %v641, 0.0
      %vm1042 = vcmask 1046528
      %v1043 = vrot.slane %v940, 1
      %v1044 = vrot.slane %v941, 1
      %v1045 = vsel %vm1042, %v1043, %v1044
      %v1046 = vrot.slane %v942, 1
      %v1047 = vsel %vm1042, %v1044, %v1046
      %v1048 = vrot.slane %v943, 1
      %v1049 = vrot.slane %v944, 1
      %v1050 = vsel %vm1042, %v1048, %v1049
      %v1051 = vrot.slane %v945, 1
      %v1052 = vsel %vm1042, %v1049, %v1051
      %v1053 = vrot.slane %v946, 1
      %v1054 = vrot.slane %v947, 1
      %v1055 = vsel %vm1042, %v1053, %v1054
      %v1056 = vrot.slane %v948, 1
      %v1057 = vsel %vm1042, %v1054, %v1056
      %v1058 = vrot.slane %v949, 1
      %v1059 = vrot.slane %v950, 1
      %v1060 = vsel %vm1042, %v1058, %v1059
      %v1061 = vrot.slane %v951, 1
      %v1062 = vsel %vm1042, %v1059, %v1061
      %v1063 = vrot.slane %v952, 1
      %v1064 = vrot.slane %v953, 1
      %v1065 = vsel %vm1042, %v1063, %v1064
      %v1066 = vrot.slane %v954, 1
      %v1067 = vsel %vm1042, %v1064, %v1066
      %v1068 = vrot.slane %v955, 1
      %v1069 = vrot.slane %v956, 1
      %v1070 = vsel %vm1042, %v1068, %v1069
      %v1071 = vrot.slane %v957, 1
      %v1072 = vsel %vm1042, %v1069, %v1071
      %v1073 = vrot.slane %v958, 1
      %v1074 = vrot.slane %v959, 1
      %v1075 = vsel %vm1042, %v1073, %v1074
      %v1076 = vrot.slane %v960, 1
      %v1077 = vsel %vm1042, %v1074, %v1076
      %v1078 = vrot.slane %v961, 1
      %v1079 = vrot.slane %v962, 1
      %v1080 = vsel %vm1042, %v1078, %v1079
      %v1081 = vrot.slane %v963, 1
      %v1082 = vsel %vm1042, %v1079, %v1081
      %v1083 = vrot.slane %v964, 1
      %v1084 = vrot.slane %v965, 1
      %v1085 = vsel %vm1042, %v1083, %v1084
      %v1086 = vrot.slane %v966, 1
      %v1087 = vsel %vm1042, %v1084, %v1086
      %v1088 = vrot.slane %v967, 1
      %v1089 = vrot.slane %v968, 1
      %v1090 = vsel %vm1042, %v1088, %v1089
      %v1091 = vrot.slane %v969, 1
      %v1092 = vsel %vm1042, %v1089, %v1091
      %v1093 = vrot.slane %v970, 1
      %v1094 = vrot.slane %v971, 1
      %v1095 = vsel %vm1042, %v1093, %v1094
      %v1096 = vrot.slane %v972, 1
      %v1097 = vsel %vm1042, %v1094, %v1096
      %v1098 = vrot.slane %v973, 1
      %v1099 = vrot.slane %v974, 1
      %v1100 = vsel %vm1042, %v1098, %v1099
      %v1101 = vrot.slane %v975, 1
      %v1102 = vsel %vm1042, %v1099, %v1101
      %v1103 = vrot.slane %v976, 1
      %v1104 = vrot.slane %v977, 1
      %v1105 = vsel %vm1042, %v1103, %v1104
      %v1106 = vrot.slane %v978, 1
      %v1107 = vsel %vm1042, %v1104, %v1106
      %v1108 = vrot.slane %v979, 1
      %v1109 = vrot.slane %v980, 1
      %v1110 = vsel %vm1042, %v1108, %v1109
      %v1111 = vrot.slane %v981, 1
      %v1112 = vsel %vm1042, %v1109, %v1111
      %v1113 = vrot.slane %v982, 1
      %v1114 = vrot.slane %v983, 1
      %v1115 = vsel %vm1042, %v1113, %v1114
      %v1116 = vrot.slane %v984, 1
      %v1117 = vsel %vm1042, %v1114, %v1116
      %v1118 = vrot.slane %v985, 1
      %v1119 = vrot.slane %v986, 1
      %v1120 = vsel %vm1042, %v1118, %v1119
      %v1121 = vrot.slane %v987, 1
      %v1122 = vsel %vm1042, %v1119, %v1121
      %vm1155 = vcmask 1045504
      %v1156 = vrot.slane %v940, 2
      %v1157 = vrot.slane %v941, 2
      %v1158 = vsel %vm1155, %v1156, %v1157
      %v1159 = vrot.slane %v942, 2
      %v1160 = vsel %vm1155, %v1157, %v1159
      %v1161 = vrot.slane %v943, 2
      %v1162 = vrot.slane %v944, 2
      %v1163 = vsel %vm1155, %v1161, %v1162
      %v1164 = vrot.slane %v945, 2
      %v1165 = vsel %vm1155, %v1162, %v1164
      %v1166 = vrot.slane %v946, 2
      %v1167 = vrot.slane %v947, 2
      %v1168 = vsel %vm1155, %v1166, %v1167
      %v1169 = vrot.slane %v948, 2
      %v1170 = vsel %vm1155, %v1167, %v1169
      %v1171 = vrot.slane %v949, 2
      %v1172 = vrot.slane %v950, 2
      %v1173 = vsel %vm1155, %v1171, %v1172
      %v1174 = vrot.slane %v951, 2
      %v1175 = vsel %vm1155, %v1172, %v1174
      %v1176 = vrot.slane %v952, 2
      %v1177 = vrot.slane %v953, 2
      %v1178 = vsel %vm1155, %v1176, %v1177
      %v1179 = vrot.slane %v954, 2
      %v1180 = vsel %vm1155, %v1177, %v1179
      %v1181 = vrot.slane %v955, 2
      %v1182 = vrot.slane %v956, 2
      %v1183 = vsel %vm1155, %v1181, %v1182
      %v1184 = vrot.slane %v957, 2
      %v1185 = vsel %vm1155, %v1182, %v1184
      %v1186 = vrot.slane %v958, 2
      %v1187 = vrot.slane %v959, 2
      %v1188 = vsel %vm1155, %v1186, %v1187
      %v1189 = vrot.slane %v960, 2
      %v1190 = vsel %vm1155, %v1187, %v1189
      %v1191 = vrot.slane %v961, 2
      %v1192 = vrot.slane %v962, 2
      %v1193 = vsel %vm1155, %v1191, %v1192
      %v1194 = vrot.slane %v963, 2
      %v1195 = vsel %vm1155, %v1192, %v1194
      %v1196 = vrot.slane %v964, 2
      %v1197 = vrot.slane %v965, 2
      %v1198 = vsel %vm1155, %v1196, %v1197
      %v1199 = vrot.slane %v966, 2
      %v1200 = vsel %vm1155, %v1197, %v1199
      %v1201 = vrot.slane %v967, 2
      %v1202 = vrot.slane %v968, 2
      %v1203 = vsel %vm1155, %v1201, %v1202
      %v1204 = vrot.slane %v969, 2
      %v1205 = vsel %vm1155, %v1202, %v1204
      %v1206 = vrot.slane %v970, 2
      %v1207 = vrot.slane %v971, 2
      %v1208 = vsel %vm1155, %v1206, %v1207
      %v1209 = vrot.slane %v972, 2
      %v1210 = vsel %vm1155, %v1207, %v1209
      %v1211 = vrot.slane %v973, 2
      %v1212 = vrot.slane %v974, 2
      %v1213 = vsel %vm1155, %v1211, %v1212
      %v1214 = vrot.slane %v975, 2
      %v1215 = vsel %vm1155, %v1212, %v1214
      %v1216 = vrot.slane %v976, 2
      %v1217 = vrot.slane %v977, 2
      %v1218 = vsel %vm1155, %v1216, %v1217
      %v1219 = vrot.slane %v978, 2
      %v1220 = vsel %vm1155, %v1217, %v1219
      %v1221 = vrot.slane %v979, 2
      %v1222 = vrot.slane %v980, 2
      %v1223 = vsel %vm1155, %v1221, %v1222
      %v1224 = vrot.slane %v981, 2
      %v1225 = vsel %vm1155, %v1222, %v1224
      %v1226 = vrot.slane %v982, 2
      %v1227 = vrot.slane %v983, 2
      %v1228 = vsel %vm1155, %v1226, %v1227
      %v1229 = vrot.slane %v984, 2
      %v1230 = vsel %vm1155, %v1227, %v1229
      %v1231 = vrot.slane %v985, 2
      %v1232 = vrot.slane %v986, 2
      %v1233 = vsel %vm1155, %v1231, %v1232
      %v1234 = vrot.slane %v987, 2
      %v1235 = vsel %vm1155, %v1232, %v1234
      %v1271 = vrot.slane %v988, 1
      %v1272 = vrot.slane %v989, 1
      %v1273 = vsel %vm1042, %v1271, %v1272
      %v1274 = vrot.slane %v990, 1
      %v1275 = vsel %vm1042, %v1272, %v1274
      %v1278 = vrot.slane %v988, 2
      %v1279 = vrot.slane %v989, 2
      %v1280 = vsel %vm1155, %v1278, %v1279
      %v1281 = vrot.slane %v990, 2
      %v1282 = vsel %vm1155, %v1279, %v1281
      %v1288 = vrot.slane %v991, 1
      %v1289 = vrot.slane %v992, 1
      %v1290 = vsel %vm1042, %v1288, %v1289
      %v1291 = vrot.slane %v993, 1
      %v1292 = vsel %vm1042, %v1289, %v1291
      %v1295 = vrot.slane %v991, 2
      %v1296 = vrot.slane %v992, 2
      %v1297 = vsel %vm1155, %v1295, %v1296
      %v1298 = vrot.slane %v993, 2
      %v1299 = vsel %vm1155, %v1296, %v1298
      %v1302 = vld [vmem:[%s2] sm:$0xff]
      %v1303 = vld [vmem:[%s2 + $0x8] sm:$0xff]
      %v1304 = vld [vmem:[%s2 + $0x10] sm:$0xff]
      %v1305 = vld [vmem:[%s2 + $0x18] sm:$0xff]
      %v1306 = vld [vmem:[%s2 + $0x20] sm:$0xff]
      %v1307 = vld [vmem:[%s2 + $0x28] sm:$0xff]
      %v1308 = vld [vmem:[%s2 + $0x30] sm:$0xff]
      %v1309 = vld [vmem:[%s2 + $0x38] sm:$0xff]
      %v1310 = vld [vmem:[%s2 + $0x40] sm:$0xff]
      %v1311 = vld [vmem:[%s2 + $0x48] sm:$0xff]
      %v1312 = vld [vmem:[%s2 + $0x50] sm:$0xff]
      %v1313 = vld [vmem:[%s2 + $0x58] sm:$0xff]
      %v1314 = vld [vmem:[%s2 + $0x60] sm:$0xff]
      %v1315 = vld [vmem:[%s2 + $0x68] sm:$0xff]
      %v1316 = vld [vmem:[%s2 + $0x70] sm:$0xff]
      %v1317 = vld [vmem:[%s2 + $0x78] sm:$0xff]
      %v1318 = vld [vmem:[%s2 + $0x80] sm:$0xff]
      %v1319 = vld [vmem:[%s2 + $0x88] sm:$0xff]
      %v1320 = vld [vmem:[%s2 + $0x90] sm:$0xff]
      %v1321 = vld [vmem:[%s2 + $0x98] sm:$0xff]
      %v1322 = vld [vmem:[%s2 + $0xa0] sm:$0xff]
      %v1323 = vld [vmem:[%s2 + $0xa8] sm:$0xff]
      %v1324 = vld [vmem:[%s2 + $0xb0] sm:$0xff]
      %v1325 = vld [vmem:[%s2 + $0xb8] sm:$0xff]
      %v1326 = vld [vmem:[%s2 + $0xc0] sm:$0xff]
      %v1327 = vld [vmem:[%s2 + $0xc8] sm:$0xff]
      %v1328 = vld [vmem:[%s2 + $0xd0] sm:$0xff]
      %v1329 = vld [vmem:[%s2 + $0xd8] sm:$0xff]
      %v1330 = vld [vmem:[%s2 + $0xe0] sm:$0xff]
      %v1331 = vld [vmem:[%s2 + $0xe8] sm:$0xff]
      %v1332 = vld [vmem:[%s2 + $0xf0] sm:$0xff]
      %v1333 = vld [vmem:[%s2 + $0xf8] sm:$0xff]
      %v1334 = vld [vmem:[%s2 + $0x100] sm:$0xff]
      %v1335 = vld [vmem:[%s2 + $0x108] sm:$0xff]
      %v1336 = vld [vmem:[%s2 + $0x110] sm:$0xff]
      %v1337 = vld [vmem:[%s2 + $0x118] sm:$0xff]
      %v1338 = vld [vmem:[%s2 + $0x120] sm:$0xff]
      %v1339 = vld [vmem:[%s2 + $0x128] sm:$0xff]
      %v1340 = vld [vmem:[%s2 + $0x130] sm:$0xff]
      %v1341 = vld [vmem:[%s2 + $0x138] sm:$0xff]
      %v1342 = vld [vmem:[%s2 + $0x140] sm:$0xff]
      %v1343 = vld [vmem:[%s2 + $0x148] sm:$0xff]
      %v1344 = vld [vmem:[%s2 + $0x150] sm:$0xff]
      %v1345 = vld [vmem:[%s2 + $0x158] sm:$0xff]
      %v1346 = vld [vmem:[%s2 + $0x160] sm:$0xff]
      %v1347 = vld [vmem:[%s2 + $0x168] sm:$0xff]
      %v1348 = vld [vmem:[%s2 + $0x170] sm:$0xff]
      %v1349 = vld [vmem:[%s2 + $0x178] sm:$0xff]
      %v1350 = vld [vmem:[%s2 + $0x180] sm:$0xff]
      %v1351 = vld [vmem:[%s2 + $0x188] sm:$0xff]
      %v1352 = vld [vmem:[%s2 + $0x190] sm:$0xff]
      %v1353 = vld [vmem:[%s2 + $0x198] sm:$0xff]
      %v1354 = vld [vmem:[%s2 + $0x1a0] sm:$0xff]
      %v1355 = vld [vmem:[%s2 + $0x1a8] sm:$0xff]
      %v1356 = vld [vmem:[%s2 + $0x1b0] sm:$0xff]
      %v1357 = vld [vmem:[%s2 + $0x1b8] sm:$0xff]
      %v1358 = vld [vmem:[%s2 + $0x1c0] sm:$0xff]
      %v1359 = vld [vmem:[%s2 + $0x1c8] sm:$0xff]
      %v1360 = vld [vmem:[%s2 + $0x1d0] sm:$0xff]
      %v1361 = vld [vmem:[%s2 + $0x1d8] sm:$0xff]
      %v1362 = vld [vmem:[%s2 + $0x1e0] sm:$0xff]
      %v1363 = vld [vmem:[%s2 + $0x1e8] sm:$0xff]
      %v1364 = vld [vmem:[%s2 + $0x1f0] sm:$0xff]
      %v1365 = vld [vmem:[%s2 + $0x1f8] sm:$0xff]
      %v1366 = vld [vmem:[%s2 + $0x200] sm:$0xff]
      %v1367 = vld [vmem:[%s2 + $0x208] sm:$0xff]
      %v1368 = vld [vmem:[%s2 + $0x210] sm:$0xff]
      %v1369 = vld [vmem:[%s2 + $0x218] sm:$0xff]
      %v1370 = vld [vmem:[%s2 + $0x220] sm:$0xff]
      %v1371 = vld [vmem:[%s2 + $0x228] sm:$0xff]
      %v1372 = vld [vmem:[%s2 + $0x230] sm:$0xff]
      %v1373 = vld [vmem:[%s2 + $0x238] sm:$0xff]
      %v1374 = vld [vmem:[%s2 + $0x240] sm:$0xff]
      %v1375 = vld [vmem:[%s2 + $0x248] sm:$0xff]
      %v1376 = vld [vmem:[%s2 + $0x250] sm:$0xff]
      %v1377 = vld [vmem:[%s2 + $0x258] sm:$0xff]
      %v1378 = vld [vmem:[%s2 + $0x260] sm:$0xff]
      %v1379 = vld [vmem:[%s2 + $0x268] sm:$0xff]
      %v1380 = vld [vmem:[%s2 + $0x270] sm:$0xff]
      %v1381 = vld [vmem:[%s2 + $0x278] sm:$0xff]
      %v1382 = vld [vmem:[%s2 + $0x280] sm:$0xff]
      %v1383 = vld [vmem:[%s2 + $0x288] sm:$0xff]
      %v1384 = vld [vmem:[%s2 + $0x290] sm:$0xff]
      %v1385 = vld [vmem:[%s2 + $0x298] sm:$0xff]
      %v1386 = vld [vmem:[%s2 + $0x2a0] sm:$0xff]
      %v1387 = vld [vmem:[%s2 + $0x2a8] sm:$0xff]
      %v1388 = vld [vmem:[%s2 + $0x2b0] sm:$0xff]
      %v1389 = vld [vmem:[%s2 + $0x2b8] sm:$0xff]
      %v1390 = vld [vmem:[%s2 + $0x2c0] sm:$0xff]
      %v1391 = vld [vmem:[%s2 + $0x2c8] sm:$0xff]
      %v1392 = vld [vmem:[%s2 + $0x2d0] sm:$0xff]
      %v1393 = vld [vmem:[%s2 + $0x2d8] sm:$0xff]
      %v1394 = vld [vmem:[%s2 + $0x2e0] sm:$0xff]
      %v1395 = vld [vmem:[%s2 + $0x2e8] sm:$0xff]
      %v1396 = vld [vmem:[%s2 + $0x2f0] sm:$0xff]
      %v1397 = vld [vmem:[%s2 + $0x2f8] sm:$0xff]
      %v1398 = vld [vmem:[%s2 + $0x300] sm:$0xff]
      %v1399 = vld [vmem:[%s2 + $0x308] sm:$0xff]
      %v1400 = vld [vmem:[%s2 + $0x310] sm:$0xff]
      %v1401 = vld [vmem:[%s2 + $0x318] sm:$0xff]
      %v1402 = vld [vmem:[%s2 + $0x320] sm:$0xff]
      %v1403 = vld [vmem:[%s2 + $0x328] sm:$0xff]
      %v1404 = vld [vmem:[%s2 + $0x330] sm:$0xff]
      %v1405 = vld [vmem:[%s2 + $0x338] sm:$0xff]
      %v1406 = vld [vmem:[%s2 + $0x340] sm:$0xff]
      %v1407 = vld [vmem:[%s2 + $0x348] sm:$0xff]
      %v1408 = vld [vmem:[%s2 + $0x350] sm:$0xff]
      %v1409 = vld [vmem:[%s2 + $0x358] sm:$0xff]
      %v1410 = vld [vmem:[%s2 + $0x360] sm:$0xff]
      %v1411 = vld [vmem:[%s2 + $0x368] sm:$0xff]
      %v1412 = vld [vmem:[%s2 + $0x370] sm:$0xff]
      %v1413 = vld [vmem:[%s2 + $0x378] sm:$0xff]
      %v1414 = vld [vmem:[%s2 + $0x380] sm:$0xff]
      %v1415 = vld [vmem:[%s2 + $0x388] sm:$0xff]
      %v1416 = vld [vmem:[%s2 + $0x390] sm:$0xff]
      %v1417 = vld [vmem:[%s2 + $0x398] sm:$0xff]
      %v1418 = vld [vmem:[%s2 + $0x3a0] sm:$0xff]
      %v1419 = vld [vmem:[%s2 + $0x3a8] sm:$0xff]
      %v1420 = vld [vmem:[%s2 + $0x3b0] sm:$0xff]
      %v1421 = vld [vmem:[%s2 + $0x3b8] sm:$0xff]
      %v1422 = vld [vmem:[%s2 + $0x3c0] sm:$0xff]
      %v1423 = vld [vmem:[%s2 + $0x3c8] sm:$0xff]
      %v1424 = vld [vmem:[%s2 + $0x3d0] sm:$0xff]
      %v1425 = vld [vmem:[%s2 + $0x3d8] sm:$0xff]
      %v1426 = vld [vmem:[%s2 + $0x3e0] sm:$0xff]
      %v1427 = vld [vmem:[%s2 + $0x3e8] sm:$0xff]
      %v1428 = vld [vmem:[%s2 + $0x3f0] sm:$0xff]
      %v1429 = vld [vmem:[%s2 + $0x3f8] sm:$0xff]
      %v1430 = vld [vmem:[%s2 + $0x400] sm:$0xff]
      %v1431 = vld [vmem:[%s2 + $0x408] sm:$0xff]
      %v1432 = vld [vmem:[%s2 + $0x410] sm:$0xff]
      %v1433 = vld [vmem:[%s2 + $0x418] sm:$0xff]
      %v1434 = vld [vmem:[%s2 + $0x420] sm:$0xff]
      %v1435 = vld [vmem:[%s2 + $0x428] sm:$0xff]
      %v1436 = vld [vmem:[%s2 + $0x430] sm:$0xff]
      %v1437 = vld [vmem:[%s2 + $0x438] sm:$0xff]
      %v1438 = vld [vmem:[%s2 + $0x440] sm:$0xff]
      %v1439 = vld [vmem:[%s2 + $0x448] sm:$0xff]
      %v1440 = vld [vmem:[%s2 + $0x450] sm:$0xff]
      %v1441 = vld [vmem:[%s2 + $0x458] sm:$0xff]
      %v1442 = vld [vmem:[%s2 + $0x460] sm:$0xff]
      %v1443 = vld [vmem:[%s2 + $0x468] sm:$0xff]
      %v1444 = vld [vmem:[%s2 + $0x470] sm:$0xff]
      %v1445 = vld [vmem:[%s2 + $0x478] sm:$0xff]
      %v1446 = vld [vmem:[%s3] sm:$0x1]
      %v1448 = vperm.slane %v1446, 0
      %1450 = vmatpush.msra.mxu0 %v1317
      %1451 = vmatpush.msra.mxu0 %v1316
      %1452 = vmatpush.msra.mxu0 %v1315
      %1453 = vmatpush.msra.mxu0 %v1314
      %1454 = vmatpush.msra.mxu0 %v1313
      %1455 = vmatpush.msra.mxu0 %v1312
      %1456 = vmatpush.msra.mxu0 %v1311
      %1457 = vmatpush.msra.mxu0 %v1310
      %1458 = vmatpush.msra.mxu0 %v1309
      %1459 = vmatpush.msra.mxu0 %v1308
      %1460 = vmatpush.msra.mxu0 %v1307
      %1461 = vmatpush.msra.mxu0 %v1306
      %1462 = vmatpush.msra.mxu0 %v1305
      %1463 = vmatpush.msra.mxu0 %v1304
      %1464 = vmatpush.msra.mxu0 %v1303
      %1465 = vmatpush.msra.mxu0 %v1302
      %1466 = vmatmul.f32.gmra.mxu0 %v940
      %v1467 = vpop.f32.mrf.mxu0
      %v1468 = vadd.f32 %v1448, %v1467
      %1469 = vmatmul.f32.gmra.mxu0 %v941
      %v1470 = vpop.f32.mrf.mxu0
      %v1471 = vadd.f32 %v1448, %v1470
      %1472 = vmatmul.f32.gmra.mxu0 %v943
      %v1473 = vpop.f32.mrf.mxu0
      %v1474 = vadd.f32 %v1448, %v1473
      %1475 = vmatmul.f32.gmra.mxu0 %v944
      %v1476 = vpop.f32.mrf.mxu0
      %v1477 = vadd.f32 %v1448, %v1476
      %1478 = vmatmul.f32.gmra.mxu0 %v946
      %v1479 = vpop.f32.mrf.mxu0
      %v1480 = vadd.f32 %v1448, %v1479
      %1481 = vmatmul.f32.gmra.mxu0 %v947
      %v1482 = vpop.f32.mrf.mxu0
      %v1483 = vadd.f32 %v1448, %v1482
      %1484 = vmatmul.f32.gmra.mxu0 %v949
      %v1485 = vpop.f32.mrf.mxu0
      %v1486 = vadd.f32 %v1448, %v1485
      %1487 = vmatmul.f32.gmra.mxu0 %v950
      %v1488 = vpop.f32.mrf.mxu0
      %v1489 = vadd.f32 %v1448, %v1488
      %1490 = vmatmul.f32.gmra.mxu0 %v952
      %v1491 = vpop.f32.mrf.mxu0
      %v1492 = vadd.f32 %v1448, %v1491
      %1493 = vmatmul.f32.gmra.mxu0 %v953
      %v1494 = vpop.f32.mrf.mxu0
      %v1495 = vadd.f32 %v1448, %v1494
      %1496 = vmatmul.f32.gmra.mxu0 %v955
      %v1497 = vpop.f32.mrf.mxu0
      %v1498 = vadd.f32 %v1448, %v1497
      %1499 = vmatmul.f32.gmra.mxu0 %v956
      %v1500 = vpop.f32.mrf.mxu0
      %v1501 = vadd.f32 %v1448, %v1500
      %1502 = vmatmul.f32.gmra.mxu0 %v958
      %v1503 = vpop.f32.mrf.mxu0
      %v1504 = vadd.f32 %v1448, %v1503
      %1505 = vmatmul.f32.gmra.mxu0 %v959
      %v1506 = vpop.f32.mrf.mxu0
      %v1507 = vadd.f32 %v1448, %v1506
      %1508 = vmatmul.f32.gmra.mxu0 %v961
      %v1509 = vpop.f32.mrf.mxu0
      %v1510 = vadd.f32 %v1448, %v1509
      %1511 = vmatmul.f32.gmra.mxu0 %v962
      %v1512 = vpop.f32.mrf.mxu0
      %v1513 = vadd.f32 %v1448, %v1512
      %1514 = vmatmul.f32.gmra.mxu0 %v964
      %v1515 = vpop.f32.mrf.mxu0
      %v1516 = vadd.f32 %v1448, %v1515
      %1517 = vmatmul.f32.gmra.mxu0 %v965
      %v1518 = vpop.f32.mrf.mxu0
      %v1519 = vadd.f32 %v1448, %v1518
      %1520 = vmatmul.f32.gmra.mxu0 %v967
      %v1521 = vpop.f32.mrf.mxu0
      %v1522 = vadd.f32 %v1448, %v1521
      %1523 = vmatmul.f32.gmra.mxu0 %v968
      %v1524 = vpop.f32.mrf.mxu0
      %v1525 = vadd.f32 %v1448, %v1524
      %1526 = vmatmul.f32.gmra.mxu0 %v970
      %v1527 = vpop.f32.mrf.mxu0
      %v1528 = vadd.f32 %v1448, %v1527
      %1529 = vmatmul.f32.gmra.mxu0 %v971
      %v1530 = vpop.f32.mrf.mxu0
      %v1531 = vadd.f32 %v1448, %v1530
      %1532 = vmatmul.f32.gmra.mxu0 %v973
      %v1533 = vpop.f32.mrf.mxu0
      %v1534 = vadd.f32 %v1448, %v1533
      %1535 = vmatmul.f32.gmra.mxu0 %v974
      %v1536 = vpop.f32.mrf.mxu0
      %v1537 = vadd.f32 %v1448, %v1536
      %1538 = vmatmul.f32.gmra.mxu0 %v976
      %v1539 = vpop.f32.mrf.mxu0
      %v1540 = vadd.f32 %v1448, %v1539
      %1541 = vmatmul.f32.gmra.mxu0 %v977
      %v1542 = vpop.f32.mrf.mxu0
      %v1543 = vadd.f32 %v1448, %v1542
      %1544 = vmatmul.f32.gmra.mxu0 %v979
      %v1545 = vpop.f32.mrf.mxu0
      %v1546 = vadd.f32 %v1448, %v1545
      %1547 = vmatmul.f32.gmra.mxu0 %v980
      %v1548 = vpop.f32.mrf.mxu0
      %v1549 = vadd.f32 %v1448, %v1548
      %1550 = vmatmul.f32.gmra.mxu0 %v982
      %v1551 = vpop.f32.mrf.mxu0
      %v1552 = vadd.f32 %v1448, %v1551
      %1553 = vmatmul.f32.gmra.mxu0 %v983
      %v1554 = vpop.f32.mrf.mxu0
      %v1555 = vadd.f32 %v1448, %v1554
      %1556 = vmatmul.f32.gmra.mxu0 %v985
      %v1557 = vpop.f32.mrf.mxu0
      %v1558 = vadd.f32 %v1448, %v1557
      %1559 = vmatmul.f32.gmra.mxu0 %v986
      %v1560 = vpop.f32.mrf.mxu0
      %v1561 = vadd.f32 %v1448, %v1560
      %1562 = vdwg.mxu0
      %1563 = vmatpush.msra.mxu0 %v1333
      %1564 = vmatpush.msra.mxu0 %v1332
      %1565 = vmatpush.msra.mxu0 %v1331
      %1566 = vmatpush.msra.mxu0 %v1330
      %1567 = vmatpush.msra.mxu0 %v1329
      %1568 = vmatpush.msra.mxu0 %v1328
      %1569 = vmatpush.msra.mxu0 %v1327
      %1570 = vmatpush.msra.mxu0 %v1326
      %1571 = vmatpush.msra.mxu0 %v1325
      %1572 = vmatpush.msra.mxu0 %v1324
      %1573 = vmatpush.msra.mxu0 %v1323
      %1574 = vmatpush.msra.mxu0 %v1322
      %1575 = vmatpush.msra.mxu0 %v1321
      %1576 = vmatpush.msra.mxu0 %v1320
      %1577 = vmatpush.msra.mxu0 %v1319
      %1578 = vmatpush.msra.mxu0 %v1318
      %1579 = vmatmul.f32.gmra.mxu0 %v1045
      %v1580 = vpop.f32.mrf.mxu0
      %v1581 = vadd.f32 %v1468, %v1580
      %1582 = vmatmul.f32.gmra.mxu0 %v1047
      %v1583 = vpop.f32.mrf.mxu0
      %v1584 = vadd.f32 %v1471, %v1583
      %1585 = vmatmul.f32.gmra.mxu0 %v1050
      %v1586 = vpop.f32.mrf.mxu0
      %v1587 = vadd.f32 %v1474, %v1586
      %1588 = vmatmul.f32.gmra.mxu0 %v1052
      %v1589 = vpop.f32.mrf.mxu0
      %v1590 = vadd.f32 %v1477, %v1589
      %1591 = vmatmul.f32.gmra.mxu0 %v1055
      %v1592 = vpop.f32.mrf.mxu0
      %v1593 = vadd.f32 %v1480, %v1592
      %1594 = vmatmul.f32.gmra.mxu0 %v1057
      %v1595 = vpop.f32.mrf.mxu0
      %v1596 = vadd.f32 %v1483, %v1595
      %1597 = vmatmul.f32.gmra.mxu0 %v1060
      %v1598 = vpop.f32.mrf.mxu0
      %v1599 = vadd.f32 %v1486, %v1598
      %1600 = vmatmul.f32.gmra.mxu0 %v1062
      %v1601 = vpop.f32.mrf.mxu0
      %v1602 = vadd.f32 %v1489, %v1601
      %1603 = vmatmul.f32.gmra.mxu0 %v1065
      %v1604 = vpop.f32.mrf.mxu0
      %v1605 = vadd.f32 %v1492, %v1604
      %1606 = vmatmul.f32.gmra.mxu0 %v1067
      %v1607 = vpop.f32.mrf.mxu0
      %v1608 = vadd.f32 %v1495, %v1607
      %1609 = vmatmul.f32.gmra.mxu0 %v1070
      %v1610 = vpop.f32.mrf.mxu0
      %v1611 = vadd.f32 %v1498, %v1610
      %1612 = vmatmul.f32.gmra.mxu0 %v1072
      %v1613 = vpop.f32.mrf.mxu0
      %v1614 = vadd.f32 %v1501, %v1613
      %1615 = vmatmul.f32.gmra.mxu0 %v1075
      %v1616 = vpop.f32.mrf.mxu0
      %v1617 = vadd.f32 %v1504, %v1616
      %1618 = vmatmul.f32.gmra.mxu0 %v1077
      %v1619 = vpop.f32.mrf.mxu0
      %v1620 = vadd.f32 %v1507, %v1619
      %1621 = vmatmul.f32.gmra.mxu0 %v1080
      %v1622 = vpop.f32.mrf.mxu0
      %v1623 = vadd.f32 %v1510, %v1622
      %1624 = vmatmul.f32.gmra.mxu0 %v1082
      %v1625 = vpop.f32.mrf.mxu0
      %v1626 = vadd.f32 %v1513, %v1625
      %1627 = vmatmul.f32.gmra.mxu0 %v1085
      %v1628 = vpop.f32.mrf.mxu0
      %v1629 = vadd.f32 %v1516, %v1628
      %1630 = vmatmul.f32.gmra.mxu0 %v1087
      %v1631 = vpop.f32.mrf.mxu0
      %v1632 = vadd.f32 %v1519, %v1631
      %1633 = vmatmul.f32.gmra.mxu0 %v1090
      %v1634 = vpop.f32.mrf.mxu0
      %v1635 = vadd.f32 %v1522, %v1634
      %1636 = vmatmul.f32.gmra.mxu0 %v1092
      %v1637 = vpop.f32.mrf.mxu0
      %v1638 = vadd.f32 %v1525, %v1637
      %1639 = vmatmul.f32.gmra.mxu0 %v1095
      %v1640 = vpop.f32.mrf.mxu0
      %v1641 = vadd.f32 %v1528, %v1640
      %1642 = vmatmul.f32.gmra.mxu0 %v1097
      %v1643 = vpop.f32.mrf.mxu0
      %v1644 = vadd.f32 %v1531, %v1643
      %1645 = vmatmul.f32.gmra.mxu0 %v1100
      %v1646 = vpop.f32.mrf.mxu0
      %v1647 = vadd.f32 %v1534, %v1646
      %1648 = vmatmul.f32.gmra.mxu0 %v1102
      %v1649 = vpop.f32.mrf.mxu0
      %v1650 = vadd.f32 %v1537, %v1649
      %1651 = vmatmul.f32.gmra.mxu0 %v1105
      %v1652 = vpop.f32.mrf.mxu0
      %v1653 = vadd.f32 %v1540, %v1652
      %1654 = vmatmul.f32.gmra.mxu0 %v1107
      %v1655 = vpop.f32.mrf.mxu0
      %v1656 = vadd.f32 %v1543, %v1655
      %1657 = vmatmul.f32.gmra.mxu0 %v1110
      %v1658 = vpop.f32.mrf.mxu0
      %v1659 = vadd.f32 %v1546, %v1658
      %1660 = vmatmul.f32.gmra.mxu0 %v1112
      %v1661 = vpop.f32.mrf.mxu0
      %v1662 = vadd.f32 %v1549, %v1661
      %1663 = vmatmul.f32.gmra.mxu0 %v1115
      %v1664 = vpop.f32.mrf.mxu0
      %v1665 = vadd.f32 %v1552, %v1664
      %1666 = vmatmul.f32.gmra.mxu0 %v1117
      %v1667 = vpop.f32.mrf.mxu0
      %v1668 = vadd.f32 %v1555, %v1667
      %1669 = vmatmul.f32.gmra.mxu0 %v1120
      %v1670 = vpop.f32.mrf.mxu0
      %v1671 = vadd.f32 %v1558, %v1670
      %1672 = vmatmul.f32.gmra.mxu0 %v1122
      %v1673 = vpop.f32.mrf.mxu0
      %v1674 = vadd.f32 %v1561, %v1673
      %1675 = vdwg.mxu0
      %1676 = vmatpush.msra.mxu0 %v1349
      %1677 = vmatpush.msra.mxu0 %v1348
      %1678 = vmatpush.msra.mxu0 %v1347
      %1679 = vmatpush.msra.mxu0 %v1346
      %1680 = vmatpush.msra.mxu0 %v1345
      %1681 = vmatpush.msra.mxu0 %v1344
      %1682 = vmatpush.msra.mxu0 %v1343
      %1683 = vmatpush.msra.mxu0 %v1342
      %1684 = vmatpush.msra.mxu0 %v1341
      %1685 = vmatpush.msra.mxu0 %v1340
      %1686 = vmatpush.msra.mxu0 %v1339
      %1687 = vmatpush.msra.mxu0 %v1338
      %1688 = vmatpush.msra.mxu0 %v1337
      %1689 = vmatpush.msra.mxu0 %v1336
      %1690 = vmatpush.msra.mxu0 %v1335
      %1691 = vmatpush.msra.mxu0 %v1334
      %1692 = vmatmul.f32.gmra.mxu0 %v1158
      %v1693 = vpop.f32.mrf.mxu0
      %v1694 = vadd.f32 %v1581, %v1693
      %1695 = vmatmul.f32.gmra.mxu0 %v1160
      %v1696 = vpop.f32.mrf.mxu0
      %v1697 = vadd.f32 %v1584, %v1696
      %1698 = vmatmul.f32.gmra.mxu0 %v1163
      %v1699 = vpop.f32.mrf.mxu0
      %v1700 = vadd.f32 %v1587, %v1699
      %1701 = vmatmul.f32.gmra.mxu0 %v1165
      %v1702 = vpop.f32.mrf.mxu0
      %v1703 = vadd.f32 %v1590, %v1702
      %1704 = vmatmul.f32.gmra.mxu0 %v1168
      %v1705 = vpop.f32.mrf.mxu0
      %v1706 = vadd.f32 %v1593, %v1705
      %1707 = vmatmul.f32.gmra.mxu0 %v1170
      %v1708 = vpop.f32.mrf.mxu0
      %v1709 = vadd.f32 %v1596, %v1708
      %1710 = vmatmul.f32.gmra.mxu0 %v1173
      %v1711 = vpop.f32.mrf.mxu0
      %v1712 = vadd.f32 %v1599, %v1711
      %1713 = vmatmul.f32.gmra.mxu0 %v1175
      %v1714 = vpop.f32.mrf.mxu0
      %v1715 = vadd.f32 %v1602, %v1714
      %1716 = vmatmul.f32.gmra.mxu0 %v1178
      %v1717 = vpop.f32.mrf.mxu0
      %v1718 = vadd.f32 %v1605, %v1717
      %1719 = vmatmul.f32.gmra.mxu0 %v1180
      %v1720 = vpop.f32.mrf.mxu0
      %v1721 = vadd.f32 %v1608, %v1720
      %1722 = vmatmul.f32.gmra.mxu0 %v1183
      %v1723 = vpop.f32.mrf.mxu0
      %v1724 = vadd.f32 %v1611, %v1723
      %1725 = vmatmul.f32.gmra.mxu0 %v1185
      %v1726 = vpop.f32.mrf.mxu0
      %v1727 = vadd.f32 %v1614, %v1726
      %1728 = vmatmul.f32.gmra.mxu0 %v1188
      %v1729 = vpop.f32.mrf.mxu0
      %v1730 = vadd.f32 %v1617, %v1729
      %1731 = vmatmul.f32.gmra.mxu0 %v1190
      %v1732 = vpop.f32.mrf.mxu0
      %v1733 = vadd.f32 %v1620, %v1732
      %1734 = vmatmul.f32.gmra.mxu0 %v1193
      %v1735 = vpop.f32.mrf.mxu0
      %v1736 = vadd.f32 %v1623, %v1735
      %1737 = vmatmul.f32.gmra.mxu0 %v1195
      %v1738 = vpop.f32.mrf.mxu0
      %v1739 = vadd.f32 %v1626, %v1738
      %1740 = vmatmul.f32.gmra.mxu0 %v1198
      %v1741 = vpop.f32.mrf.mxu0
      %v1742 = vadd.f32 %v1629, %v1741
      %1743 = vmatmul.f32.gmra.mxu0 %v1200
      %v1744 = vpop.f32.mrf.mxu0
      %v1745 = vadd.f32 %v1632, %v1744
      %1746 = vmatmul.f32.gmra.mxu0 %v1203
      %v1747 = vpop.f32.mrf.mxu0
      %v1748 = vadd.f32 %v1635, %v1747
      %1749 = vmatmul.f32.gmra.mxu0 %v1205
      %v1750 = vpop.f32.mrf.mxu0
      %v1751 = vadd.f32 %v1638, %v1750
      %1752 = vmatmul.f32.gmra.mxu0 %v1208
      %v1753 = vpop.f32.mrf.mxu0
      %v1754 = vadd.f32 %v1641, %v1753
      %1755 = vmatmul.f32.gmra.mxu0 %v1210
      %v1756 = vpop.f32.mrf.mxu0
      %v1757 = vadd.f32 %v1644, %v1756
      %1758 = vmatmul.f32.gmra.mxu0 %v1213
      %v1759 = vpop.f32.mrf.mxu0
      %v1760 = vadd.f32 %v1647, %v1759
      %1761 = vmatmul.f32.gmra.mxu0 %v1215
      %v1762 = vpop.f32.mrf.mxu0
      %v1763 = vadd.f32 %v1650, %v1762
      %1764 = vmatmul.f32.gmra.mxu0 %v1218
      %v1765 = vpop.f32.mrf.mxu0
      %v1766 = vadd.f32 %v1653, %v1765
      %1767 = vmatmul.f32.gmra.mxu0 %v1220
      %v1768 = vpop.f32.mrf.mxu0
      %v1769 = vadd.f32 %v1656, %v1768
      %1770 = vmatmul.f32.gmra.mxu0 %v1223
      %v1771 = vpop.f32.mrf.mxu0
      %v1772 = vadd.f32 %v1659, %v1771
      %1773 = vmatmul.f32.gmra.mxu0 %v1225
      %v1774 = vpop.f32.mrf.mxu0
      %v1775 = vadd.f32 %v1662, %v1774
      %1776 = vmatmul.f32.gmra.mxu0 %v1228
      %v1777 = vpop.f32.mrf.mxu0
      %v1778 = vadd.f32 %v1665, %v1777
      %1779 = vmatmul.f32.gmra.mxu0 %v1230
      %v1780 = vpop.f32.mrf.mxu0
      %v1781 = vadd.f32 %v1668, %v1780
      %1782 = vmatmul.f32.gmra.mxu0 %v1233
      %v1783 = vpop.f32.mrf.mxu0
      %v1784 = vadd.f32 %v1671, %v1783
      %1785 = vmatmul.f32.gmra.mxu0 %v1235
      %v1786 = vpop.f32.mrf.mxu0
      %v1787 = vadd.f32 %v1674, %v1786
      %1788 = vdwg.mxu0
      %1789 = vmatpush.msra.mxu0 %v1365
      %1790 = vmatpush.msra.mxu0 %v1364
      %1791 = vmatpush.msra.mxu0 %v1363
      %1792 = vmatpush.msra.mxu0 %v1362
      %1793 = vmatpush.msra.mxu0 %v1361
      %1794 = vmatpush.msra.mxu0 %v1360
      %1795 = vmatpush.msra.mxu0 %v1359
      %1796 = vmatpush.msra.mxu0 %v1358
      %1797 = vmatpush.msra.mxu0 %v1357
      %1798 = vmatpush.msra.mxu0 %v1356
      %1799 = vmatpush.msra.mxu0 %v1355
      %1800 = vmatpush.msra.mxu0 %v1354
      %1801 = vmatpush.msra.mxu0 %v1353
      %1802 = vmatpush.msra.mxu0 %v1352
      %1803 = vmatpush.msra.mxu0 %v1351
      %1804 = vmatpush.msra.mxu0 %v1350
      %1805 = vmatmul.f32.gmra.mxu0 %v943
      %v1806 = vpop.f32.mrf.mxu0
      %v1807 = vadd.f32 %v1694, %v1806
      %1808 = vmatmul.f32.gmra.mxu0 %v944
      %v1809 = vpop.f32.mrf.mxu0
      %v1810 = vadd.f32 %v1697, %v1809
      %1811 = vmatmul.f32.gmra.mxu0 %v946
      %v1812 = vpop.f32.mrf.mxu0
      %v1813 = vadd.f32 %v1700, %v1812
      %1814 = vmatmul.f32.gmra.mxu0 %v947
      %v1815 = vpop.f32.mrf.mxu0
      %v1816 = vadd.f32 %v1703, %v1815
      %1817 = vmatmul.f32.gmra.mxu0 %v949
      %v1818 = vpop.f32.mrf.mxu0
      %v1819 = vadd.f32 %v1706, %v1818
      %1820 = vmatmul.f32.gmra.mxu0 %v950
      %v1821 = vpop.f32.mrf.mxu0
      %v1822 = vadd.f32 %v1709, %v1821
      %1823 = vmatmul.f32.gmra.mxu0 %v952
      %v1824 = vpop.f32.mrf.mxu0
      %v1825 = vadd.f32 %v1712, %v1824
      %1826 = vmatmul.f32.gmra.mxu0 %v953
      %v1827 = vpop.f32.mrf.mxu0
      %v1828 = vadd.f32 %v1715, %v1827
      %1829 = vmatmul.f32.gmra.mxu0 %v955
      %v1830 = vpop.f32.mrf.mxu0
      %v1831 = vadd.f32 %v1718, %v1830
      %1832 = vmatmul.f32.gmra.mxu0 %v956
      %v1833 = vpop.f32.mrf.mxu0
      %v1834 = vadd.f32 %v1721, %v1833
      %1835 = vmatmul.f32.gmra.mxu0 %v958
      %v1836 = vpop.f32.mrf.mxu0
      %v1837 = vadd.f32 %v1724, %v1836
      %1838 = vmatmul.f32.gmra.mxu0 %v959
      %v1839 = vpop.f32.mrf.mxu0
      %v1840 = vadd.f32 %v1727, %v1839
      %1841 = vmatmul.f32.gmra.mxu0 %v961
      %v1842 = vpop.f32.mrf.mxu0
      %v1843 = vadd.f32 %v1730, %v1842
      %1844 = vmatmul.f32.gmra.mxu0 %v962
      %v1845 = vpop.f32.mrf.mxu0
      %v1846 = vadd.f32 %v1733, %v1845
      %1847 = vmatmul.f32.gmra.mxu0 %v964
      %v1848 = vpop.f32.mrf.mxu0
      %v1849 = vadd.f32 %v1736, %v1848
      %1850 = vmatmul.f32.gmra.mxu0 %v965
      %v1851 = vpop.f32.mrf.mxu0
      %v1852 = vadd.f32 %v1739, %v1851
      %1853 = vmatmul.f32.gmra.mxu0 %v967
      %v1854 = vpop.f32.mrf.mxu0
      %v1855 = vadd.f32 %v1742, %v1854
      %1856 = vmatmul.f32.gmra.mxu0 %v968
      %v1857 = vpop.f32.mrf.mxu0
      %v1858 = vadd.f32 %v1745, %v1857
      %1859 = vmatmul.f32.gmra.mxu0 %v970
      %v1860 = vpop.f32.mrf.mxu0
      %v1861 = vadd.f32 %v1748, %v1860
      %1862 = vmatmul.f32.gmra.mxu0 %v971
      %v1863 = vpop.f32.mrf.mxu0
      %v1864 = vadd.f32 %v1751, %v1863
      %1865 = vmatmul.f32.gmra.mxu0 %v973
      %v1866 = vpop.f32.mrf.mxu0
      %v1867 = vadd.f32 %v1754, %v1866
      %1868 = vmatmul.f32.gmra.mxu0 %v974
      %v1869 = vpop.f32.mrf.mxu0
      %v1870 = vadd.f32 %v1757, %v1869
      %1871 = vmatmul.f32.gmra.mxu0 %v976
      %v1872 = vpop.f32.mrf.mxu0
      %v1873 = vadd.f32 %v1760, %v1872
      %1874 = vmatmul.f32.gmra.mxu0 %v977
      %v1875 = vpop.f32.mrf.mxu0
      %v1876 = vadd.f32 %v1763, %v1875
      %1877 = vmatmul.f32.gmra.mxu0 %v979
      %v1878 = vpop.f32.mrf.mxu0
      %v1879 = vadd.f32 %v1766, %v1878
      %1880 = vmatmul.f32.gmra.mxu0 %v980
      %v1881 = vpop.f32.mrf.mxu0
      %v1882 = vadd.f32 %v1769, %v1881
      %1883 = vmatmul.f32.gmra.mxu0 %v982
      %v1884 = vpop.f32.mrf.mxu0
      %v1885 = vadd.f32 %v1772, %v1884
      %1886 = vmatmul.f32.gmra.mxu0 %v983
      %v1887 = vpop.f32.mrf.mxu0
      %v1888 = vadd.f32 %v1775, %v1887
      %1889 = vmatmul.f32.gmra.mxu0 %v985
      %v1890 = vpop.f32.mrf.mxu0
      %v1891 = vadd.f32 %v1778, %v1890
      %1892 = vmatmul.f32.gmra.mxu0 %v986
      %v1893 = vpop.f32.mrf.mxu0
      %v1894 = vadd.f32 %v1781, %v1893
      %1895 = vmatmul.f32.gmra.mxu0 %v988
      %v1896 = vpop.f32.mrf.mxu0
      %v1897 = vadd.f32 %v1784, %v1896
      %1898 = vmatmul.f32.gmra.mxu0 %v989
      %v1899 = vpop.f32.mrf.mxu0
      %v1900 = vadd.f32 %v1787, %v1899
      %1901 = vdwg.mxu0
      %1902 = vmatpush.msra.mxu0 %v1381
      %1903 = vmatpush.msra.mxu0 %v1380
      %1904 = vmatpush.msra.mxu0 %v1379
      %1905 = vmatpush.msra.mxu0 %v1378
      %1906 = vmatpush.msra.mxu0 %v1377
      %1907 = vmatpush.msra.mxu0 %v1376
      %1908 = vmatpush.msra.mxu0 %v1375
      %1909 = vmatpush.msra.mxu0 %v1374
      %1910 = vmatpush.msra.mxu0 %v1373
      %1911 = vmatpush.msra.mxu0 %v1372
      %1912 = vmatpush.msra.mxu0 %v1371
      %1913 = vmatpush.msra.mxu0 %v1370
      %1914 = vmatpush.msra.mxu0 %v1369
      %1915 = vmatpush.msra.mxu0 %v1368
      %1916 = vmatpush.msra.mxu0 %v1367
      %1917 = vmatpush.msra.mxu0 %v1366
      %1918 = vmatmul.f32.gmra.mxu0 %v1050
      %v1919 = vpop.f32.mrf.mxu0
      %v1920 = vadd.f32 %v1807, %v1919
      %1921 = vmatmul.f32.gmra.mxu0 %v1052
      %v1922 = vpop.f32.mrf.mxu0
      %v1923 = vadd.f32 %v1810, %v1922
      %1924 = vmatmul.f32.gmra.mxu0 %v1055
      %v1925 = vpop.f32.mrf.mxu0
      %v1926 = vadd.f32 %v1813, %v1925
      %1927 = vmatmul.f32.gmra.mxu0 %v1057
      %v1928 = vpop.f32.mrf.mxu0
      %v1929 = vadd.f32 %v1816, %v1928
      %1930 = vmatmul.f32.gmra.mxu0 %v1060
      %v1931 = vpop.f32.mrf.mxu0
      %v1932 = vadd.f32 %v1819, %v1931
      %1933 = vmatmul.f32.gmra.mxu0 %v1062
      %v1934 = vpop.f32.mrf.mxu0
      %v1935 = vadd.f32 %v1822, %v1934
      %1936 = vmatmul.f32.gmra.mxu0 %v1065
      %v1937 = vpop.f32.mrf.mxu0
      %v1938 = vadd.f32 %v1825, %v1937
      %1939 = vmatmul.f32.gmra.mxu0 %v1067
      %v1940 = vpop.f32.mrf.mxu0
      %v1941 = vadd.f32 %v1828, %v1940
      %1942 = vmatmul.f32.gmra.mxu0 %v1070
      %v1943 = vpop.f32.mrf.mxu0
      %v1944 = vadd.f32 %v1831, %v1943
      %1945 = vmatmul.f32.gmra.mxu0 %v1072
      %v1946 = vpop.f32.mrf.mxu0
      %v1947 = vadd.f32 %v1834, %v1946
      %1948 = vmatmul.f32.gmra.mxu0 %v1075
      %v1949 = vpop.f32.mrf.mxu0
      %v1950 = vadd.f32 %v1837, %v1949
      %1951 = vmatmul.f32.gmra.mxu0 %v1077
      %v1952 = vpop.f32.mrf.mxu0
      %v1953 = vadd.f32 %v1840, %v1952
      %1954 = vmatmul.f32.gmra.mxu0 %v1080
      %v1955 = vpop.f32.mrf.mxu0
      %v1956 = vadd.f32 %v1843, %v1955
      %1957 = vmatmul.f32.gmra.mxu0 %v1082
      %v1958 = vpop.f32.mrf.mxu0
      %v1959 = vadd.f32 %v1846, %v1958
      %1960 = vmatmul.f32.gmra.mxu0 %v1085
      %v1961 = vpop.f32.mrf.mxu0
      %v1962 = vadd.f32 %v1849, %v1961
      %1963 = vmatmul.f32.gmra.mxu0 %v1087
      %v1964 = vpop.f32.mrf.mxu0
      %v1965 = vadd.f32 %v1852, %v1964
      %1966 = vmatmul.f32.gmra.mxu0 %v1090
      %v1967 = vpop.f32.mrf.mxu0
      %v1968 = vadd.f32 %v1855, %v1967
      %1969 = vmatmul.f32.gmra.mxu0 %v1092
      %v1970 = vpop.f32.mrf.mxu0
      %v1971 = vadd.f32 %v1858, %v1970
      %1972 = vmatmul.f32.gmra.mxu0 %v1095
      %v1973 = vpop.f32.mrf.mxu0
      %v1974 = vadd.f32 %v1861, %v1973
      %1975 = vmatmul.f32.gmra.mxu0 %v1097
      %v1976 = vpop.f32.mrf.mxu0
      %v1977 = vadd.f32 %v1864, %v1976
      %1978 = vmatmul.f32.gmra.mxu0 %v1100
      %v1979 = vpop.f32.mrf.mxu0
      %v1980 = vadd.f32 %v1867, %v1979
      %1981 = vmatmul.f32.gmra.mxu0 %v1102
      %v1982 = vpop.f32.mrf.mxu0
      %v1983 = vadd.f32 %v1870, %v1982
      %1984 = vmatmul.f32.gmra.mxu0 %v1105
      %v1985 = vpop.f32.mrf.mxu0
      %v1986 = vadd.f32 %v1873, %v1985
      %1987 = vmatmul.f32.gmra.mxu0 %v1107
      %v1988 = vpop.f32.mrf.mxu0
      %v1989 = vadd.f32 %v1876, %v1988
      %1990 = vmatmul.f32.gmra.mxu0 %v1110
      %v1991 = vpop.f32.mrf.mxu0
      %v1992 = vadd.f32 %v1879, %v1991
      %1993 = vmatmul.f32.gmra.mxu0 %v1112
      %v1994 = vpop.f32.mrf.mxu0
      %v1995 = vadd.f32 %v1882, %v1994
      %1996 = vmatmul.f32.gmra.mxu0 %v1115
      %v1997 = vpop.f32.mrf.mxu0
      %v1998 = vadd.f32 %v1885, %v1997
      %1999 = vmatmul.f32.gmra.mxu0 %v1117
      %v2000 = vpop.f32.mrf.mxu0
      %v2001 = vadd.f32 %v1888, %v2000
      %2002 = vmatmul.f32.gmra.mxu0 %v1120
      %v2003 = vpop.f32.mrf.mxu0
      %v2004 = vadd.f32 %v1891, %v2003
      %2005 = vmatmul.f32.gmra.mxu0 %v1122
      %v2006 = vpop.f32.mrf.mxu0
      %v2007 = vadd.f32 %v1894, %v2006
      %2008 = vmatmul.f32.gmra.mxu0 %v1273
      %v2009 = vpop.f32.mrf.mxu0
      %v2010 = vadd.f32 %v1897, %v2009
      %2011 = vmatmul.f32.gmra.mxu0 %v1275
      %v2012 = vpop.f32.mrf.mxu0
      %v2013 = vadd.f32 %v1900, %v2012
      %2014 = vdwg.mxu0
      %2015 = vmatpush.msra.mxu0 %v1397
      %2016 = vmatpush.msra.mxu0 %v1396
      %2017 = vmatpush.msra.mxu0 %v1395
      %2018 = vmatpush.msra.mxu0 %v1394
      %2019 = vmatpush.msra.mxu0 %v1393
      %2020 = vmatpush.msra.mxu0 %v1392
      %2021 = vmatpush.msra.mxu0 %v1391
      %2022 = vmatpush.msra.mxu0 %v1390
      %2023 = vmatpush.msra.mxu0 %v1389
      %2024 = vmatpush.msra.mxu0 %v1388
      %2025 = vmatpush.msra.mxu0 %v1387
      %2026 = vmatpush.msra.mxu0 %v1386
      %2027 = vmatpush.msra.mxu0 %v1385
      %2028 = vmatpush.msra.mxu0 %v1384
      %2029 = vmatpush.msra.mxu0 %v1383
      %2030 = vmatpush.msra.mxu0 %v1382
      %2031 = vmatmul.f32.gmra.mxu0 %v1163
      %v2032 = vpop.f32.mrf.mxu0
      %v2033 = vadd.f32 %v1920, %v2032
      %2034 = vmatmul.f32.gmra.mxu0 %v1165
      %v2035 = vpop.f32.mrf.mxu0
      %v2036 = vadd.f32 %v1923, %v2035
      %2037 = vmatmul.f32.gmra.mxu0 %v1168
      %v2038 = vpop.f32.mrf.mxu0
      %v2039 = vadd.f32 %v1926, %v2038
      %2040 = vmatmul.f32.gmra.mxu0 %v1170
      %v2041 = vpop.f32.mrf.mxu0
      %v2042 = vadd.f32 %v1929, %v2041
      %2043 = vmatmul.f32.gmra.mxu0 %v1173
      %v2044 = vpop.f32.mrf.mxu0
      %v2045 = vadd.f32 %v1932, %v2044
      %2046 = vmatmul.f32.gmra.mxu0 %v1175
      %v2047 = vpop.f32.mrf.mxu0
      %v2048 = vadd.f32 %v1935, %v2047
      %2049 = vmatmul.f32.gmra.mxu0 %v1178
      %v2050 = vpop.f32.mrf.mxu0
      %v2051 = vadd.f32 %v1938, %v2050
      %2052 = vmatmul.f32.gmra.mxu0 %v1180
      %v2053 = vpop.f32.mrf.mxu0
      %v2054 = vadd.f32 %v1941, %v2053
      %2055 = vmatmul.f32.gmra.mxu0 %v1183
      %v2056 = vpop.f32.mrf.mxu0
      %v2057 = vadd.f32 %v1944, %v2056
      %2058 = vmatmul.f32.gmra.mxu0 %v1185
      %v2059 = vpop.f32.mrf.mxu0
      %v2060 = vadd.f32 %v1947, %v2059
      %2061 = vmatmul.f32.gmra.mxu0 %v1188
      %v2062 = vpop.f32.mrf.mxu0
      %v2063 = vadd.f32 %v1950, %v2062
      %2064 = vmatmul.f32.gmra.mxu0 %v1190
      %v2065 = vpop.f32.mrf.mxu0
      %v2066 = vadd.f32 %v1953, %v2065
      %2067 = vmatmul.f32.gmra.mxu0 %v1193
      %v2068 = vpop.f32.mrf.mxu0
      %v2069 = vadd.f32 %v1956, %v2068
      %2070 = vmatmul.f32.gmra.mxu0 %v1195
      %v2071 = vpop.f32.mrf.mxu0
      %v2072 = vadd.f32 %v1959, %v2071
      %2073 = vmatmul.f32.gmra.mxu0 %v1198
      %v2074 = vpop.f32.mrf.mxu0
      %v2075 = vadd.f32 %v1962, %v2074
      %2076 = vmatmul.f32.gmra.mxu0 %v1200
      %v2077 = vpop.f32.mrf.mxu0
      %v2078 = vadd.f32 %v1965, %v2077
      %2079 = vmatmul.f32.gmra.mxu0 %v1203
      %v2080 = vpop.f32.mrf.mxu0
      %v2081 = vadd.f32 %v1968, %v2080
      %2082 = vmatmul.f32.gmra.mxu0 %v1205
      %v2083 = vpop.f32.mrf.mxu0
      %v2084 = vadd.f32 %v1971, %v2083
      %2085 = vmatmul.f32.gmra.mxu0 %v1208
      %v2086 = vpop.f32.mrf.mxu0
      %v2087 = vadd.f32 %v1974, %v2086
      %2088 = vmatmul.f32.gmra.mxu0 %v1210
      %v2089 = vpop.f32.mrf.mxu0
      %v2090 = vadd.f32 %v1977, %v2089
      %2091 = vmatmul.f32.gmra.mxu0 %v1213
      %v2092 = vpop.f32.mrf.mxu0
      %v2093 = vadd.f32 %v1980, %v2092
      %2094 = vmatmul.f32.gmra.mxu0 %v1215
      %v2095 = vpop.f32.mrf.mxu0
      %v2096 = vadd.f32 %v1983, %v2095
      %2097 = vmatmul.f32.gmra.mxu0 %v1218
      %v2098 = vpop.f32.mrf.mxu0
      %v2099 = vadd.f32 %v1986, %v2098
      %2100 = vmatmul.f32.gmra.mxu0 %v1220
      %v2101 = vpop.f32.mrf.mxu0
      %v2102 = vadd.f32 %v1989, %v2101
      %2103 = vmatmul.f32.gmra.mxu0 %v1223
      %v2104 = vpop.f32.mrf.mxu0
      %v2105 = vadd.f32 %v1992, %v2104
      %2106 = vmatmul.f32.gmra.mxu0 %v1225
      %v2107 = vpop.f32.mrf.mxu0
      %v2108 = vadd.f32 %v1995, %v2107
      %2109 = vmatmul.f32.gmra.mxu0 %v1228
      %v2110 = vpop.f32.mrf.mxu0
      %v2111 = vadd.f32 %v1998, %v2110
      %2112 = vmatmul.f32.gmra.mxu0 %v1230
      %v2113 = vpop.f32.mrf.mxu0
      %v2114 = vadd.f32 %v2001, %v2113
      %2115 = vmatmul.f32.gmra.mxu0 %v1233
      %v2116 = vpop.f32.mrf.mxu0
      %v2117 = vadd.f32 %v2004, %v2116
      %2118 = vmatmul.f32.gmra.mxu0 %v1235
      %v2119 = vpop.f32.mrf.mxu0
      %v2120 = vadd.f32 %v2007, %v2119
      %2121 = vmatmul.f32.gmra.mxu0 %v1280
      %v2122 = vpop.f32.mrf.mxu0
      %v2123 = vadd.f32 %v2010, %v2122
      %2124 = vmatmul.f32.gmra.mxu0 %v1282
      %v2125 = vpop.f32.mrf.mxu0
      %v2126 = vadd.f32 %v2013, %v2125
      %2127 = vdwg.mxu0
      %2128 = vmatpush.msra.mxu0 %v1413
      %2129 = vmatpush.msra.mxu0 %v1412
      %2130 = vmatpush.msra.mxu0 %v1411
      %2131 = vmatpush.msra.mxu0 %v1410
      %2132 = vmatpush.msra.mxu0 %v1409
      %2133 = vmatpush.msra.mxu0 %v1408
      %2134 = vmatpush.msra.mxu0 %v1407
      %2135 = vmatpush.msra.mxu0 %v1406
      %2136 = vmatpush.msra.mxu0 %v1405
      %2137 = vmatpush.msra.mxu0 %v1404
      %2138 = vmatpush.msra.mxu0 %v1403
      %2139 = vmatpush.msra.mxu0 %v1402
      %2140 = vmatpush.msra.mxu0 %v1401
      %2141 = vmatpush.msra.mxu0 %v1400
      %2142 = vmatpush.msra.mxu0 %v1399
      %2143 = vmatpush.msra.mxu0 %v1398
      %2144 = vmatmul.f32.gmra.mxu0 %v946
      %v2145 = vpop.f32.mrf.mxu0
      %v2146 = vadd.f32 %v2033, %v2145
      %2147 = vmatmul.f32.gmra.mxu0 %v947
      %v2148 = vpop.f32.mrf.mxu0
      %v2149 = vadd.f32 %v2036, %v2148
      %2150 = vmatmul.f32.gmra.mxu0 %v949
      %v2151 = vpop.f32.mrf.mxu0
      %v2152 = vadd.f32 %v2039, %v2151
      %2153 = vmatmul.f32.gmra.mxu0 %v950
      %v2154 = vpop.f32.mrf.mxu0
      %v2155 = vadd.f32 %v2042, %v2154
      %2156 = vmatmul.f32.gmra.mxu0 %v952
      %v2157 = vpop.f32.mrf.mxu0
      %v2158 = vadd.f32 %v2045, %v2157
      %2159 = vmatmul.f32.gmra.mxu0 %v953
      %v2160 = vpop.f32.mrf.mxu0
      %v2161 = vadd.f32 %v2048, %v2160
      %2162 = vmatmul.f32.gmra.mxu0 %v955
      %v2163 = vpop.f32.mrf.mxu0
      %v2164 = vadd.f32 %v2051, %v2163
      %2165 = vmatmul.f32.gmra.mxu0 %v956
      %v2166 = vpop.f32.mrf.mxu0
      %v2167 = vadd.f32 %v2054, %v2166
      %2168 = vmatmul.f32.gmra.mxu0 %v958
      %v2169 = vpop.f32.mrf.mxu0
      %v2170 = vadd.f32 %v2057, %v2169
      %2171 = vmatmul.f32.gmra.mxu0 %v959
      %v2172 = vpop.f32.mrf.mxu0
      %v2173 = vadd.f32 %v2060, %v2172
      %2174 = vmatmul.f32.gmra.mxu0 %v961
      %v2175 = vpop.f32.mrf.mxu0
      %v2176 = vadd.f32 %v2063, %v2175
      %2177 = vmatmul.f32.gmra.mxu0 %v962
      %v2178 = vpop.f32.mrf.mxu0
      %v2179 = vadd.f32 %v2066, %v2178
      %2180 = vmatmul.f32.gmra.mxu0 %v964
      %v2181 = vpop.f32.mrf.mxu0
      %v2182 = vadd.f32 %v2069, %v2181
      %2183 = vmatmul.f32.gmra.mxu0 %v965
      %v2184 = vpop.f32.mrf.mxu0
      %v2185 = vadd.f32 %v2072, %v2184
      %2186 = vmatmul.f32.gmra.mxu0 %v967
      %v2187 = vpop.f32.mrf.mxu0
      %v2188 = vadd.f32 %v2075, %v2187
      %2189 = vmatmul.f32.gmra.mxu0 %v968
      %v2190 = vpop.f32.mrf.mxu0
      %v2191 = vadd.f32 %v2078, %v2190
      %2192 = vmatmul.f32.gmra.mxu0 %v970
      %v2193 = vpop.f32.mrf.mxu0
      %v2194 = vadd.f32 %v2081, %v2193
      %2195 = vmatmul.f32.gmra.mxu0 %v971
      %v2196 = vpop.f32.mrf.mxu0
      %v2197 = vadd.f32 %v2084, %v2196
      %2198 = vmatmul.f32.gmra.mxu0 %v973
      %v2199 = vpop.f32.mrf.mxu0
      %v2200 = vadd.f32 %v2087, %v2199
      %2201 = vmatmul.f32.gmra.mxu0 %v974
      %v2202 = vpop.f32.mrf.mxu0
      %v2203 = vadd.f32 %v2090, %v2202
      %2204 = vmatmul.f32.gmra.mxu0 %v976
      %v2205 = vpop.f32.mrf.mxu0
      %v2206 = vadd.f32 %v2093, %v2205
      %2207 = vmatmul.f32.gmra.mxu0 %v977
      %v2208 = vpop.f32.mrf.mxu0
      %v2209 = vadd.f32 %v2096, %v2208
      %2210 = vmatmul.f32.gmra.mxu0 %v979
      %v2211 = vpop.f32.mrf.mxu0
      %v2212 = vadd.f32 %v2099, %v2211
      %2213 = vmatmul.f32.gmra.mxu0 %v980
      %v2214 = vpop.f32.mrf.mxu0
      %v2215 = vadd.f32 %v2102, %v2214
      %2216 = vmatmul.f32.gmra.mxu0 %v982
      %v2217 = vpop.f32.mrf.mxu0
      %v2218 = vadd.f32 %v2105, %v2217
      %2219 = vmatmul.f32.gmra.mxu0 %v983
      %v2220 = vpop.f32.mrf.mxu0
      %v2221 = vadd.f32 %v2108, %v2220
      %2222 = vmatmul.f32.gmra.mxu0 %v985
      %v2223 = vpop.f32.mrf.mxu0
      %v2224 = vadd.f32 %v2111, %v2223
      %2225 = vmatmul.f32.gmra.mxu0 %v986
      %v2226 = vpop.f32.mrf.mxu0
      %v2227 = vadd.f32 %v2114, %v2226
      %2228 = vmatmul.f32.gmra.mxu0 %v988
      %v2229 = vpop.f32.mrf.mxu0
      %v2230 = vadd.f32 %v2117, %v2229
      %2231 = vmatmul.f32.gmra.mxu0 %v989
      %v2232 = vpop.f32.mrf.mxu0
      %v2233 = vadd.f32 %v2120, %v2232
      %2234 = vmatmul.f32.gmra.mxu0 %v991
      %v2235 = vpop.f32.mrf.mxu0
      %v2236 = vadd.f32 %v2123, %v2235
      %2237 = vmatmul.f32.gmra.mxu0 %v992
      %v2238 = vpop.f32.mrf.mxu0
      %v2239 = vadd.f32 %v2126, %v2238
      %2240 = vdwg.mxu0
      %2241 = vmatpush.msra.mxu0 %v1429
      %2242 = vmatpush.msra.mxu0 %v1428
      %2243 = vmatpush.msra.mxu0 %v1427
      %2244 = vmatpush.msra.mxu0 %v1426
      %2245 = vmatpush.msra.mxu0 %v1425
      %2246 = vmatpush.msra.mxu0 %v1424
      %2247 = vmatpush.msra.mxu0 %v1423
      %2248 = vmatpush.msra.mxu0 %v1422
      %2249 = vmatpush.msra.mxu0 %v1421
      %2250 = vmatpush.msra.mxu0 %v1420
      %2251 = vmatpush.msra.mxu0 %v1419
      %2252 = vmatpush.msra.mxu0 %v1418
      %2253 = vmatpush.msra.mxu0 %v1417
      %2254 = vmatpush.msra.mxu0 %v1416
      %2255 = vmatpush.msra.mxu0 %v1415
      %2256 = vmatpush.msra.mxu0 %v1414
      %2257 = vmatmul.f32.gmra.mxu0 %v1055
      %v2258 = vpop.f32.mrf.mxu0
      %v2259 = vadd.f32 %v2146, %v2258
      %2260 = vmatmul.f32.gmra.mxu0 %v1057
      %v2261 = vpop.f32.mrf.mxu0
      %v2262 = vadd.f32 %v2149, %v2261
      %2263 = vmatmul.f32.gmra.mxu0 %v1060
      %v2264 = vpop.f32.mrf.mxu0
      %v2265 = vadd.f32 %v2152, %v2264
      %2266 = vmatmul.f32.gmra.mxu0 %v1062
      %v2267 = vpop.f32.mrf.mxu0
      %v2268 = vadd.f32 %v2155, %v2267
      %2269 = vmatmul.f32.gmra.mxu0 %v1065
      %v2270 = vpop.f32.mrf.mxu0
      %v2271 = vadd.f32 %v2158, %v2270
      %2272 = vmatmul.f32.gmra.mxu0 %v1067
      %v2273 = vpop.f32.mrf.mxu0
      %v2274 = vadd.f32 %v2161, %v2273
      %2275 = vmatmul.f32.gmra.mxu0 %v1070
      %v2276 = vpop.f32.mrf.mxu0
      %v2277 = vadd.f32 %v2164, %v2276
      %2278 = vmatmul.f32.gmra.mxu0 %v1072
      %v2279 = vpop.f32.mrf.mxu0
      %v2280 = vadd.f32 %v2167, %v2279
      %2281 = vmatmul.f32.gmra.mxu0 %v1075
      %v2282 = vpop.f32.mrf.mxu0
      %v2283 = vadd.f32 %v2170, %v2282
      %2284 = vmatmul.f32.gmra.mxu0 %v1077
      %v2285 = vpop.f32.mrf.mxu0
      %v2286 = vadd.f32 %v2173, %v2285
      %2287 = vmatmul.f32.gmra.mxu0 %v1080
      %v2288 = vpop.f32.mrf.mxu0
      %v2289 = vadd.f32 %v2176, %v2288
      %2290 = vmatmul.f32.gmra.mxu0 %v1082
      %v2291 = vpop.f32.mrf.mxu0
      %v2292 = vadd.f32 %v2179, %v2291
      %2293 = vmatmul.f32.gmra.mxu0 %v1085
      %v2294 = vpop.f32.mrf.mxu0
      %v2295 = vadd.f32 %v2182, %v2294
      %2296 = vmatmul.f32.gmra.mxu0 %v1087
      %v2297 = vpop.f32.mrf.mxu0
      %v2298 = vadd.f32 %v2185, %v2297
      %2299 = vmatmul.f32.gmra.mxu0 %v1090
      %v2300 = vpop.f32.mrf.mxu0
      %v2301 = vadd.f32 %v2188, %v2300
      %2302 = vmatmul.f32.gmra.mxu0 %v1092
      %v2303 = vpop.f32.mrf.mxu0
      %v2304 = vadd.f32 %v2191, %v2303
      %2305 = vmatmul.f32.gmra.mxu0 %v1095
      %v2306 = vpop.f32.mrf.mxu0
      %v2307 = vadd.f32 %v2194, %v2306
      %2308 = vmatmul.f32.gmra.mxu0 %v1097
      %v2309 = vpop.f32.mrf.mxu0
      %v2310 = vadd.f32 %v2197, %v2309
      %2311 = vmatmul.f32.gmra.mxu0 %v1100
      %v2312 = vpop.f32.mrf.mxu0
      %v2313 = vadd.f32 %v2200, %v2312
      %2314 = vmatmul.f32.gmra.mxu0 %v1102
      %v2315 = vpop.f32.mrf.mxu0
      %v2316 = vadd.f32 %v2203, %v2315
      %2317 = vmatmul.f32.gmra.mxu0 %v1105
      %v2318 = vpop.f32.mrf.mxu0
      %v2319 = vadd.f32 %v2206, %v2318
      %2320 = vmatmul.f32.gmra.mxu0 %v1107
      %v2321 = vpop.f32.mrf.mxu0
      %v2322 = vadd.f32 %v2209, %v2321
      %2323 = vmatmul.f32.gmra.mxu0 %v1110
      %v2324 = vpop.f32.mrf.mxu0
      %v2325 = vadd.f32 %v2212, %v2324
      %2326 = vmatmul.f32.gmra.mxu0 %v1112
      %v2327 = vpop.f32.mrf.mxu0
      %v2328 = vadd.f32 %v2215, %v2327
      %2329 = vmatmul.f32.gmra.mxu0 %v1115
      %v2330 = vpop.f32.mrf.mxu0
      %v2331 = vadd.f32 %v2218, %v2330
      %2332 = vmatmul.f32.gmra.mxu0 %v1117
      %v2333 = vpop.f32.mrf.mxu0
      %v2334 = vadd.f32 %v2221, %v2333
      %2335 = vmatmul.f32.gmra.mxu0 %v1120
      %v2336 = vpop.f32.mrf.mxu0
      %v2337 = vadd.f32 %v2224, %v2336
      %2338 = vmatmul.f32.gmra.mxu0 %v1122
      %v2339 = vpop.f32.mrf.mxu0
      %v2340 = vadd.f32 %v2227, %v2339
      %2341 = vmatmul.f32.gmra.mxu0 %v1273
      %v2342 = vpop.f32.mrf.mxu0
      %v2343 = vadd.f32 %v2230, %v2342
      %2344 = vmatmul.f32.gmra.mxu0 %v1275
      %v2345 = vpop.f32.mrf.mxu0
      %v2346 = vadd.f32 %v2233, %v2345
      %2347 = vmatmul.f32.gmra.mxu0 %v1290
      %v2348 = vpop.f32.mrf.mxu0
      %v2349 = vadd.f32 %v2236, %v2348
      %2350 = vmatmul.f32.gmra.mxu0 %v1292
      %v2351 = vpop.f32.mrf.mxu0
      %v2352 = vadd.f32 %v2239, %v2351
      %2353 = vdwg.mxu0
      %2354 = vmatpush.msra.mxu0 %v1445
      %2355 = vmatpush.msra.mxu0 %v1444
      %2356 = vmatpush.msra.mxu0 %v1443
      %2357 = vmatpush.msra.mxu0 %v1442
      %2358 = vmatpush.msra.mxu0 %v1441
      %2359 = vmatpush.msra.mxu0 %v1440
      %2360 = vmatpush.msra.mxu0 %v1439
      %2361 = vmatpush.msra.mxu0 %v1438
      %2362 = vmatpush.msra.mxu0 %v1437
      %2363 = vmatpush.msra.mxu0 %v1436
      %2364 = vmatpush.msra.mxu0 %v1435
      %2365 = vmatpush.msra.mxu0 %v1434
      %2366 = vmatpush.msra.mxu0 %v1433
      %2367 = vmatpush.msra.mxu0 %v1432
      %2368 = vmatpush.msra.mxu0 %v1431
      %2369 = vmatpush.msra.mxu0 %v1430
      %2370 = vmatmul.f32.gmra.mxu0 %v1168
      %v2371 = vpop.f32.mrf.mxu0
      %v2372 = vadd.f32 %v2259, %v2371
      %2373 = vmatmul.f32.gmra.mxu0 %v1170
      %v2374 = vpop.f32.mrf.mxu0
      %v2375 = vadd.f32 %v2262, %v2374
      %2376 = vmatmul.f32.gmra.mxu0 %v1173
      %v2377 = vpop.f32.mrf.mxu0
      %v2378 = vadd.f32 %v2265, %v2377
      %2379 = vmatmul.f32.gmra.mxu0 %v1175
      %v2380 = vpop.f32.mrf.mxu0
      %v2381 = vadd.f32 %v2268, %v2380
      %2382 = vmatmul.f32.gmra.mxu0 %v1178
      %v2383 = vpop.f32.mrf.mxu0
      %v2384 = vadd.f32 %v2271, %v2383
      %2385 = vmatmul.f32.gmra.mxu0 %v1180
      %v2386 = vpop.f32.mrf.mxu0
      %v2387 = vadd.f32 %v2274, %v2386
      %2388 = vmatmul.f32.gmra.mxu0 %v1183
      %v2389 = vpop.f32.mrf.mxu0
      %v2390 = vadd.f32 %v2277, %v2389
      %2391 = vmatmul.f32.gmra.mxu0 %v1185
      %v2392 = vpop.f32.mrf.mxu0
      %v2393 = vadd.f32 %v2280, %v2392
      %2394 = vmatmul.f32.gmra.mxu0 %v1188
      %v2395 = vpop.f32.mrf.mxu0
      %v2396 = vadd.f32 %v2283, %v2395
      %2397 = vmatmul.f32.gmra.mxu0 %v1190
      %v2398 = vpop.f32.mrf.mxu0
      %v2399 = vadd.f32 %v2286, %v2398
      %2400 = vmatmul.f32.gmra.mxu0 %v1193
      %v2401 = vpop.f32.mrf.mxu0
      %v2402 = vadd.f32 %v2289, %v2401
      %2403 = vmatmul.f32.gmra.mxu0 %v1195
      %v2404 = vpop.f32.mrf.mxu0
      %v2405 = vadd.f32 %v2292, %v2404
      %2406 = vmatmul.f32.gmra.mxu0 %v1198
      %v2407 = vpop.f32.mrf.mxu0
      %v2408 = vadd.f32 %v2295, %v2407
      %2409 = vmatmul.f32.gmra.mxu0 %v1200
      %v2410 = vpop.f32.mrf.mxu0
      %v2411 = vadd.f32 %v2298, %v2410
      %2412 = vmatmul.f32.gmra.mxu0 %v1203
      %v2413 = vpop.f32.mrf.mxu0
      %v2414 = vadd.f32 %v2301, %v2413
      %2415 = vmatmul.f32.gmra.mxu0 %v1205
      %v2416 = vpop.f32.mrf.mxu0
      %v2417 = vadd.f32 %v2304, %v2416
      %2418 = vmatmul.f32.gmra.mxu0 %v1208
      %v2419 = vpop.f32.mrf.mxu0
      %v2420 = vadd.f32 %v2307, %v2419
      %2421 = vmatmul.f32.gmra.mxu0 %v1210
      %v2422 = vpop.f32.mrf.mxu0
      %v2423 = vadd.f32 %v2310, %v2422
      %2424 = vmatmul.f32.gmra.mxu0 %v1213
      %v2425 = vpop.f32.mrf.mxu0
      %v2426 = vadd.f32 %v2313, %v2425
      %2427 = vmatmul.f32.gmra.mxu0 %v1215
      %v2428 = vpop.f32.mrf.mxu0
      %v2429 = vadd.f32 %v2316, %v2428
      %2430 = vmatmul.f32.gmra.mxu0 %v1218
      %v2431 = vpop.f32.mrf.mxu0
      %v2432 = vadd.f32 %v2319, %v2431
      %2433 = vmatmul.f32.gmra.mxu0 %v1220
      %v2434 = vpop.f32.mrf.mxu0
      %v2435 = vadd.f32 %v2322, %v2434
      %2436 = vmatmul.f32.gmra.mxu0 %v1223
      %v2437 = vpop.f32.mrf.mxu0
      %v2438 = vadd.f32 %v2325, %v2437
      %2439 = vmatmul.f32.gmra.mxu0 %v1225
      %v2440 = vpop.f32.mrf.mxu0
      %v2441 = vadd.f32 %v2328, %v2440
      %2442 = vmatmul.f32.gmra.mxu0 %v1228
      %v2443 = vpop.f32.mrf.mxu0
      %v2444 = vadd.f32 %v2331, %v2443
      %2445 = vmatmul.f32.gmra.mxu0 %v1230
      %v2446 = vpop.f32.mrf.mxu0
      %v2447 = vadd.f32 %v2334, %v2446
      %2448 = vmatmul.f32.gmra.mxu0 %v1233
      %v2449 = vpop.f32.mrf.mxu0
      %v2450 = vadd.f32 %v2337, %v2449
      %2451 = vmatmul.f32.gmra.mxu0 %v1235
      %v2452 = vpop.f32.mrf.mxu0
      %v2453 = vadd.f32 %v2340, %v2452
      %2454 = vmatmul.f32.gmra.mxu0 %v1280
      %v2455 = vpop.f32.mrf.mxu0
      %v2456 = vadd.f32 %v2343, %v2455
      %2457 = vmatmul.f32.gmra.mxu0 %v1282
      %v2458 = vpop.f32.mrf.mxu0
      %v2459 = vadd.f32 %v2346, %v2458
      %2460 = vmatmul.f32.gmra.mxu0 %v1297
      %v2461 = vpop.f32.mrf.mxu0
      %v2462 = vadd.f32 %v2349, %v2461
      %2463 = vmatmul.f32.gmra.mxu0 %v1299
      %v2464 = vpop.f32.mrf.mxu0
      %v2465 = vadd.f32 %v2352, %v2464
      %2466 = vdwg.mxu0
      %2467 = vst [vmem:[%s267] sm:$0xff] %v2372
      %2468 = vst [vmem:[%s267 + $0x8] sm:$0xff] %v2375
      %2469 = vst [vmem:[%s267 + $0x10] sm:$0xff] %v2378
      %2470 = vst [vmem:[%s267 + $0x18] sm:$0xff] %v2381
      %2471 = vst [vmem:[%s267 + $0x20] sm:$0xff] %v2384
      %2472 = vst [vmem:[%s267 + $0x28] sm:$0xff] %v2387
      %2473 = vst [vmem:[%s267 + $0x30] sm:$0xff] %v2390
      %2474 = vst [vmem:[%s267 + $0x38] sm:$0xff] %v2393
      %2475 = vst [vmem:[%s267 + $0x40] sm:$0xff] %v2396
      %2476 = vst [vmem:[%s267 + $0x48] sm:$0xff] %v2399
      %2477 = vst [vmem:[%s267 + $0x50] sm:$0xff] %v2402
      %2478 = vst [vmem:[%s267 + $0x58] sm:$0xff] %v2405
      %2479 = vst [vmem:[%s267 + $0x60] sm:$0xff] %v2408
      %2480 = vst [vmem:[%s267 + $0x68] sm:$0xff] %v2411
      %2481 = vst [vmem:[%s267 + $0x70] sm:$0xff] %v2414
      %2482 = vst [vmem:[%s267 + $0x78] sm:$0xff] %v2417
      %2483 = vst [vmem:[%s267 + $0x80] sm:$0xff] %v2420
      %2484 = vst [vmem:[%s267 + $0x88] sm:$0xff] %v2423
      %2485 = vst [vmem:[%s267 + $0x90] sm:$0xff] %v2426
      %2486 = vst [vmem:[%s267 + $0x98] sm:$0xff] %v2429
      %2487 = vst [vmem:[%s267 + $0xa0] sm:$0xff] %v2432
      %2488 = vst [vmem:[%s267 + $0xa8] sm:$0xff] %v2435
      %2489 = vst [vmem:[%s267 + $0xb0] sm:$0xff] %v2438
      %2490 = vst [vmem:[%s267 + $0xb8] sm:$0xff] %v2441
      %2491 = vst [vmem:[%s267 + $0xc0] sm:$0xff] %v2444
      %2492 = vst [vmem:[%s267 + $0xc8] sm:$0xff] %v2447
      %2493 = vst [vmem:[%s267 + $0xd0] sm:$0xff] %v2450
      %2494 = vst [vmem:[%s267 + $0xd8] sm:$0xff] %v2453
      %2495 = vst [vmem:[%s267 + $0xe0] sm:$0xff] %v2456
      %2496 = vst [vmem:[%s267 + $0xe8] sm:$0xff] %v2459
      %2497 = vst [vmem:[%s267 + $0xf0] sm:$0xff] %v2462
      %2498 = vst [vmem:[%s267 + $0xf8] sm:$0xff] %v2465
      %v2499 = vadd.f32 %v2372, %v2375
      %v2500 = vadd.f32 %v2499, %v2378
      %v2501 = vadd.f32 %v2500, %v2381
      %v2502 = vadd.f32 %v2501, %v2384
      %v2503 = vadd.f32 %v2502, %v2387
      %v2504 = vadd.f32 %v2503, %v2390
      %v2505 = vadd.f32 %v2504, %v2393
      %v2506 = vadd.f32 %v2505, %v2396
      %v2507 = vadd.f32 %v2506, %v2399
      %v2508 = vadd.f32 %v2507, %v2402
      %v2509 = vadd.f32 %v2508, %v2405
      %v2510 = vadd.f32 %v2509, %v2408
      %v2511 = vadd.f32 %v2510, %v2411
      %v2512 = vadd.f32 %v2511, %v2414
      %v2513 = vadd.f32 %v2512, %v2417
      %v2514 = vadd.f32 %v2513, %v2420
      %v2515 = vadd.f32 %v2514, %v2423
      %v2516 = vadd.f32 %v2515, %v2426
      %v2517 = vadd.f32 %v2516, %v2429
      %v2518 = vadd.f32 %v2517, %v2432
      %v2519 = vadd.f32 %v2518, %v2435
      %v2520 = vadd.f32 %v2519, %v2438
      %v2521 = vadd.f32 %v2520, %v2441
      %v2522 = vadd.f32 %v2521, %v2444
      %v2523 = vadd.f32 %v2522, %v2447
      %v2524 = vadd.f32 %v2523, %v2450
      %v2525 = vadd.f32 %v2524, %v2453
      %v2526 = vadd.f32 %v2525, %v2456
      %v2527 = vadd.f32 %v2526, %v2459
      %v2528 = vadd.f32 %v2527, %v2462
      %v2529 = vadd.f32 %v2528, %v2465
      %v2530 = vrot.slane %v2529, 4
      %v2531 = vadd.f32 %v2529, %v2530
      %v2532 = vrot.slane %v2531, 2
      %v2533 = vadd.f32 %v2531, %v2532
      %v2534 = vrot.slane %v2533, 1
      %v2535 = vadd.f32 %v2533, %v2534
      %v2536 = vmul.f32 %v2372, %v2372
      %v2537 = vmul.f32 %v2375, %v2375
      %v2538 = vmul.f32 %v2378, %v2378
      %v2539 = vmul.f32 %v2381, %v2381
      %v2540 = vmul.f32 %v2384, %v2384
      %v2541 = vmul.f32 %v2387, %v2387
      %v2542 = vmul.f32 %v2390, %v2390
      %v2543 = vmul.f32 %v2393, %v2393
      %v2544 = vmul.f32 %v2396, %v2396
      %v2545 = vmul.f32 %v2399, %v2399
      %v2546 = vmul.f32 %v2402, %v2402
      %v2547 = vmul.f32 %v2405, %v2405
      %v2548 = vmul.f32 %v2408, %v2408
      %v2549 = vmul.f32 %v2411, %v2411
      %v2550 = vmul.f32 %v2414, %v2414
      %v2551 = vmul.f32 %v2417, %v2417
      %v2552 = vmul.f32 %v2420, %v2420
      %v2553 = vmul.f32 %v2423, %v2423
      %v2554 = vmul.f32 %v2426, %v2426
      %v2555 = vmul.f32 %v2429, %v2429
      %v2556 = vmul.f32 %v2432, %v2432
      %v2557 = vmul.f32 %v2435, %v2435
      %v2558 = vmul.f32 %v2438, %v2438
      %v2559 = vmul.f32 %v2441, %v2441
      %v2560 = vmul.f32 %v2444, %v2444
      %v2561 = vmul.f32 %v2447, %v2447
      %v2562 = vmul.f32 %v2450, %v2450
      %v2563 = vmul.f32 %v2453, %v2453
      %v2564 = vmul.f32 %v2456, %v2456
      %v2565 = vmul.f32 %v2459, %v2459
      %v2566 = vmul.f32 %v2462, %v2462
      %v2567 = vmul.f32 %v2465, %v2465
      %v2568 = vadd.f32 %v2536, %v2537
      %v2569 = vadd.f32 %v2568, %v2538
      %v2570 = vadd.f32 %v2569, %v2539
      %v2571 = vadd.f32 %v2570, %v2540
      %v2572 = vadd.f32 %v2571, %v2541
      %v2573 = vadd.f32 %v2572, %v2542
      %v2574 = vadd.f32 %v2573, %v2543
      %v2575 = vadd.f32 %v2574, %v2544
      %v2576 = vadd.f32 %v2575, %v2545
      %v2577 = vadd.f32 %v2576, %v2546
      %v2578 = vadd.f32 %v2577, %v2547
      %v2579 = vadd.f32 %v2578, %v2548
      %v2580 = vadd.f32 %v2579, %v2549
      %v2581 = vadd.f32 %v2580, %v2550
      %v2582 = vadd.f32 %v2581, %v2551
      %v2583 = vadd.f32 %v2582, %v2552
      %v2584 = vadd.f32 %v2583, %v2553
      %v2585 = vadd.f32 %v2584, %v2554
      %v2586 = vadd.f32 %v2585, %v2555
      %v2587 = vadd.f32 %v2586, %v2556
      %v2588 = vadd.f32 %v2587, %v2557
      %v2589 = vadd.f32 %v2588, %v2558
      %v2590 = vadd.f32 %v2589, %v2559
      %v2591 = vadd.f32 %v2590, %v2560
      %v2592 = vadd.f32 %v2591, %v2561
      %v2593 = vadd.f32 %v2592, %v2562
      %v2594 = vadd.f32 %v2593, %v2563
      %v2595 = vadd.f32 %v2594, %v2564
      %v2596 = vadd.f32 %v2595, %v2565
      %v2597 = vadd.f32 %v2596, %v2566
      %v2598 = vadd.f32 %v2597, %v2567
      %v2599 = vrot.slane %v2598, 4
      %v2600 = vadd.f32 %v2598, %v2599
      %v2601 = vrot.slane %v2600, 2
      %v2602 = vadd.f32 %v2600, %v2601
      %v2603 = vrot.slane %v2602, 1
      %v2604 = vadd.f32 %v2602, %v2603
      %p2605 = scmp.eq.s32.totalorder %s24, 0
      // Predicated region
      $region59: #{double_conv_forward.4} parent=35 // pred_check
        %p2606 = pneg %p2605
      $region60: #{double_conv_forward.4} parent=35 // pred_check_branch
        %2608 = sbr.rel (%p2606) target = $region62
      $region61: #{double_conv_forward.4} parent=35 // pred_region
        %2609 = vst [vmem:[%s271] sm:$0x1] 0.0
        %2610 = vst [vmem:[%s274] sm:$0x1] 0.0
      $region62: #{double_conv_forward.4} parent=35 // pred_fallthru
        _
      %v2611 = vld [vmem:[%s271] sm:$0x1]
      %v2612 = vadd.f32 %v2611, %v2535
      %2613 = vst [vmem:[%s271] sm:$0x1] %v2612
      %v2614 = vld [vmem:[%s274] sm:$0x1]
      %v2615 = vadd.f32 %v2614, %v2604
      %2616 = vst [vmem:[%s274] sm:$0x1] %v2615
      %s2617 = smul.u32 16, %s24
      %p2618 = scmp.lt.s32.totalorder %s23, 1
      %s2619 = scalar_select %p2618, %s23, 1
      %p2620 = scmp.lt.s32.totalorder %s2617, 15
      %s2621 = scalar_select %p2620, %s2617, 15
      %s2622 = smul.addr %s2621, 2
      %s2623 = smul.addr %s2619, 32
      %s2624 = sadd.s32 %s2622, %s2623
      %s2625 = smul.addr %s2624, 8
      %s2626 = scalar_lea.vmem %s5, %s2625
      %p2627 = scmp.lt.s32.totalorder %s23, 1
      %s2628 = scalar_select %p2627, %s23, 1
      %s2629 = scalar_lea.vmem %s6, %s2628
      %p2630 = scmp.lt.s32.totalorder %s23, 1
      %s2631 = scalar_select %p2630, %s23, 1
      %s2632 = scalar_lea.vmem %s7, %s2631
      // Predicated region
      $region63: #{double_conv_forward.4} parent=35 // pred_check
        %p2633 = pneg %p135
      $region64: #{double_conv_forward.4} parent=35 // pred_check_branch
        %2635 = sbr.rel (%p2633) target = $region66
      $region65: #{double_conv_forward.4} parent=35 // pred_region
        %s2636 = smul.u32 16, %s24
      $region66: #{double_conv_forward.4} parent=35 // pred_fallthru
        _
      // Predicated region
      $region67: #{double_conv_forward.4} parent=35 // pred_check
        %p2637 = pneg %p161
      $region68: #{double_conv_forward.4} parent=35 // pred_check_branch
        %2639 = sbr.rel (%p2637) target = $region70
      $region69: #{double_conv_forward.4} parent=35 // pred_region
        _
      $region70: #{double_conv_forward.4} parent=35 // pred_fallthru
        _
      // Predicated region
      $region71: #{double_conv_forward.4} parent=35 // pred_check
        %p2640 = pneg %p187
      $region72: #{double_conv_forward.4} parent=35 // pred_check_branch
        %2642 = sbr.rel (%p2640) target = $region74
      $region73: #{double_conv_forward.4} parent=35 // pred_region
        _
      $region74: #{double_conv_forward.4} parent=35 // pred_fallthru
        _
    $region36: #{double_conv_forward.4} parent=5 // pred_fallthru
      _
    %p2643 = scmp.le.s32.totalorder 2, %s14
    // Predicated region
    $region75: #{double_conv_forward.4} parent=5 // pred_check
      %p2644 = pneg %p2643
    $region76: #{double_conv_forward.4} parent=5 // pred_check_branch
      %2646 = sbr.rel (%p2644) target = $region78
    $region77: #{double_conv_forward.4} parent=5 // pred_region
      %s2647 = ssub.s32 %s14, 2
      // Predicated region
      $region79: #{double_conv_forward.4} parent=77 // pred_check
        %p2648 = pneg %p141
      $region80: #{double_conv_forward.4} parent=77 // pred_check_branch
        %2650 = sbr.rel (%p2648) target = $region82
      $region81: #{double_conv_forward.4} parent=77 // pred_region
        %s2651 = smul.u32 16, %s26
        %p2652 = scmp.lt.s32.totalorder %s25, 1
        %s2653 = scalar_select %p2652, %s25, 1
        %p2654 = scmp.lt.s32.totalorder %s2651, 15
        %s2655 = scalar_select %p2654, %s2651, 15
        %s2656 = smul.addr %s2655, 2
        %s2657 = smul.addr %s2653, 32
        %s2658 = sadd.s32 %s2656, %s2657
        %s2659 = smul.addr %s2658, 8
        %s2660 = scalar_lea.vmem %s5, %s2659
      $region82: #{double_conv_forward.4} parent=77 // pred_fallthru
        _
      // Predicated region
      $region83: #{double_conv_forward.4} parent=77 // pred_check
        %p2661 = pneg %p167
      $region84: #{double_conv_forward.4} parent=77 // pred_check_branch
        %2663 = sbr.rel (%p2661) target = $region86
      $region85: #{double_conv_forward.4} parent=77 // pred_region
        %p2664 = scmp.lt.s32.totalorder %s25, 1
        %s2665 = scalar_select %p2664, %s25, 1
        %s2666 = scalar_lea.vmem %s6, %s2665
      $region86: #{double_conv_forward.4} parent=77 // pred_fallthru
        _
      // Predicated region
      $region87: #{double_conv_forward.4} parent=77 // pred_check
        %p2667 = pneg %p193
      $region88: #{double_conv_forward.4} parent=77 // pred_check_branch
        %2669 = sbr.rel (%p2667) target = $region90
      $region89: #{double_conv_forward.4} parent=77 // pred_region
        %p2670 = scmp.lt.s32.totalorder %s25, 1
        %s2671 = scalar_select %p2670, %s25, 1
        %s2672 = scalar_lea.vmem %s7, %s2671
      $region90: #{double_conv_forward.4} parent=77 // pred_fallthru
        _
    $region78: #{double_conv_forward.4} parent=5 // pred_fallthru
      _
  $region6: #{double_conv_forward.4} parent=0 // loop_footer
    %s18 = sadd.s32 1, %s14
  $region7: #{double_conv_forward.4} parent=0 // loop_footer_branch
    %13 = sbr.rel target = $region3
  $region8: #{double_conv_forward.4} parent=0 // loop_exit
    _
  %2673 = vsyncmov [#allocation3]
  %s2674 = vpop.sfrf %2673
  %p2675 = scmp.eq.s32.totalorder %s2674, 0
  %p2676 = pneg %p2675
  %2678 = shalt.err (%p2676)

</llo_original>
